<compile_context>
chip_gen: v5e
topology: v5e:2x2
jax: 0.10.0
libtpu: 0.0.40
codegen_flags: <defaults>
</compile_context>

<pallas_src>
import functools

import jax
import jax.numpy as jnp
from jax.experimental import pallas as pl
from jax.experimental.pallas import tpu as pltpu

ENC_DIMS = [28 * 28, 128, 64, 12, 3]   # encoder: (Linear+Tanh) x3, final Linear (no act)
DEC_DIMS = [3, 12, 64, 128, 28 * 28]   # decoder: (Linear+Tanh) x3, final Linear + Sigmoid


def autoencoder_kernel(x_ref,
                       we1, be1, we2, be2, we3, be3, we4, be4,
                       wd1, bd1, wd2, bd2, wd3, bd3, wd4, bd4,
                       enc_ref, dec_ref):
    """All 8 Linear layers + activations fused; weights stay resident in VMEM."""
    wdt = we1.dtype   # MXU-input dtype (f32 or bf16); accumulation is always f32

    def dense(h, w_ref, b_ref):
        # MXU matmul with f32 accumulation; bias-add (and tanh) stay in f32 so the
        # VPU/EUP math is f32 on every generation (v5e has no bf16 VPU/EUP).
        return (jnp.dot(h.astype(wdt), w_ref[...], preferred_element_type=jnp.float32)
                + b_ref[...])

    h = x_ref[...]    # x streams in caller dtype; cast per-tile inside dense()

    # ---- encoder ----
    h = jnp.tanh(dense(h, we1, be1))
    h = jnp.tanh(dense(h, we2, be2))
    h = jnp.tanh(dense(h, we3, be3))
    encoded = dense(h, we4, be4)                 # f32 latent reused by the decoder
    enc_ref[...] = encoded.astype(enc_ref.dtype)

    # ---- decoder ----
    h = jnp.tanh(dense(encoded, wd1, bd1))
    h = jnp.tanh(dense(h, wd2, bd2))
    h = jnp.tanh(dense(h, wd3, bd3))
    z = dense(h, wd4, bd4)
    if dec_ref.dtype == jnp.bfloat16:
        # bf16 output: run the dominant (bt, 784) sigmoid in bf16 (bf16 EUP on v6e/v7x;
        # legalized on v5e) and shrink the pre-store buffer.
        dec_ref[...] = jax.nn.sigmoid(z.astype(jnp.bfloat16))
    else:
        dec_ref[...] = jax.nn.sigmoid(z).astype(dec_ref.dtype)


def init_params(key):
    """Deterministic PyTorch-style init: U(-1/sqrt(fan_in), 1/sqrt(fan_in))."""
    params = []
    dims = list(zip(ENC_DIMS[:-1], ENC_DIMS[1:])) + list(zip(DEC_DIMS[:-1], DEC_DIMS[1:]))
    for (fan_in, fan_out) in dims:
        key, kw, kb = jax.random.split(key, 3)
        bound = 1.0 / jnp.sqrt(fan_in)
        w = jax.random.uniform(kw, (fan_in, fan_out), jnp.float32, -bound, bound)
        b = jax.random.uniform(kb, (1, fan_out), jnp.float32, -bound, bound)
        params += [w, b]
    return params  # [we1,be1, ..., we4,be4, wd1,bd1, ..., wd4,bd4]


def prepare_params(params, compute_dtype=jnp.float32):
    """Cast weights to the streaming/MXU dtype ONCE, outside the jitted hot path.
    Biases stay f32 so bias-add / tanh / sigmoid accumulate in f32 everywhere."""
    return [p.astype(compute_dtype) if i % 2 == 0 else p.astype(jnp.float32)
            for i, p in enumerate(params)]


def _round_up(x, m):
    return (x + m - 1) // m * m


def _choose_batch_tile(B, requested=None):
    """Mem-bound kernel: aim for >=8 grid steps (>=4 per TensorCore on v7x) so DMA
    overlaps compute; keep tiles in [64, 512] rows (512 = v6e/v5e single-TC sweet spot)."""
    if requested is None:
        requested = min(max(64, _round_up(pl.cdiv(B, 8), 8)), 512)
    bt = max(8, _round_up(requested, 8))
    return min(bt, _round_up(B, 8))


@functools.partial(jax.jit, static_argnames=("batch_tile", "out_dtype"))
def autoencoder_forward(x, params, *, batch_tile=None, out_dtype=None):
    """Fused AutoEncoder forward. Returns (encoded (B, 3), decoded (B, 784)).

    The MXU/streaming dtype is taken from the weights (use prepare_params() once,
    outside jit).  Outputs default to that same dtype (bf16 weights -> bf16 writeback)."""
    B, D = x.shape
    assert D == ENC_DIMS[0]

    compute_dtype = params[0].dtype
    if out_dtype is None:
        out_dtype = compute_dtype

    bt = _choose_batch_tile(B, batch_tile)
    B_pad = _round_up(B, bt)
    if B_pad != B:
        x = jnp.pad(x, ((0, B_pad - B), (0, 0)))
    grid = (B_pad // bt,)

    # x / outputs tiled over batch; weights & biases use a constant index_map, so they
    # are DMA'd into VMEM once and reused for every grid step.
    x_spec = pl.BlockSpec((bt, D), lambda i: (i, 0))
    param_specs = [pl.BlockSpec(p.shape, lambda i: (0, 0)) for p in params]
    enc_spec = pl.BlockSpec((bt, ENC_DIMS[-1]), lambda i: (i, 0))
    dec_spec = pl.BlockSpec((bt, DEC_DIMS[-1]), lambda i: (i, 0))

    # VMEM budget: double-buffered x/enc/dec tiles + resident weights + headroom for the
    # in-kernel f32 intermediates.  Floor 32 MiB, cap below v7x's 64 MiB physical VMEM.
    x_item = jnp.dtype(x.dtype).itemsize
    out_item = jnp.dtype(out_dtype).itemsize
    io_bytes = 2 * bt * (D * x_item + (ENC_DIMS[-1] + DEC_DIMS[-1]) * out_item)
    w_bytes = 2 * sum(p.size * jnp.dtype(p.dtype).itemsize for p in params)
    interm_bytes = 4 * bt * D * 4
    vmem_limit = min(max(int(1.5 * (io_bytes + w_bytes + interm_bytes)) + (4 << 20),
                         32 << 20),
                     56 << 20)

    out_shapes = (jax.ShapeDtypeStruct((B_pad, ENC_DIMS[-1]), out_dtype),
                  jax.ShapeDtypeStruct((B_pad, DEC_DIMS[-1]), out_dtype))

    encoded, decoded = pl.pallas_call(
        autoencoder_kernel,
        out_shape=out_shapes,
        grid_spec=pltpu.PrefetchScalarGridSpec(
            num_scalar_prefetch=0,
            grid=grid,
            in_specs=[x_spec] + param_specs,
            out_specs=[enc_spec, dec_spec],
        ),
        compiler_params=pltpu.CompilerParams(
            dimension_semantics=("parallel",),   # batch steps shard across TCs (v7x)
            vmem_limit_bytes=vmem_limit,
        ),
    )(x, *params)

    return encoded[:B], decoded[:B]


def reference_forward(x, params):
    """Pure-JAX reference (mirrors the PyTorch module) for a sanity check."""
    we1, be1, we2, be2, we3, be3, we4, be4, wd1, bd1, wd2, bd2, wd3, bd3, wd4, bd4 = params
    h = jnp.tanh(x @ we1 + be1)
    h = jnp.tanh(h @ we2 + be2)
    h = jnp.tanh(h @ we3 + be3)
    enc = h @ we4 + be4
    h = jnp.tanh(enc @ wd1 + bd1)
    h = jnp.tanh(h @ wd2 + bd2)
    h = jnp.tanh(h @ wd3 + bd3)
    dec = jax.nn.sigmoid(h @ wd4 + bd4)
    return enc, dec


if __name__ == "__main__":
    key = jax.random.PRNGKey(0)
    kx, kp = jax.random.split(key)

    # Feature dim fixed at 784 by the module; B=512 with the auto tile (64 rows) gives an
    # 8-step grid: 4 steps per TensorCore on v7x, deep pipelining on v6e/v5e.
    B = 512
    x = jax.random.uniform(kx, (B, ENC_DIMS[0]), jnp.float32)   # "pixel" values in [0, 1)
    raw_params = init_params(kp)

    ref_enc, ref_dec = reference_forward(x, raw_params)

    # f32 path: exact check against the reference.
    params_f32 = prepare_params(raw_params, jnp.float32)
    enc, dec = autoencoder_forward(x, params_f32)
    jax.block_until_ready((enc, dec))
    assert enc.shape == (B, 3) and dec.shape == (B, 28 * 28)
    assert jnp.allclose(enc, ref_enc, atol=1e-4, rtol=1e-4)
    assert jnp.allclose(dec, ref_dec, atol=1e-4, rtol=1e-4)

    # bf16-streamed path: weights cast once outside jit, x streams f32 (cast per-tile
    # in-kernel), f32 MXU accumulation, bf16 encoded/decoded writeback. Loose check.
    params_bf16 = prepare_params(raw_params, jnp.bfloat16)
    enc_bf, dec_bf = autoencoder_forward(x, params_bf16)
    jax.block_until_ready((enc_bf, dec_bf))
    assert enc_bf.dtype == jnp.bfloat16 and dec_bf.dtype == jnp.bfloat16
    assert jnp.allclose(enc_bf.astype(jnp.float32), ref_enc, atol=1e-1, rtol=1e-1)
    assert jnp.allclose(dec_bf.astype(jnp.float32), ref_dec, atol=1e-1, rtol=1e-1)

    print("KERNEL_OK")
</pallas_src>

<mosaic_0001>
module attributes {stable_mosaic.version = 11 : i64} {
  func.func @autoencoder_kernel(%arg0: i32, %arg1: memref<64x784xf32, #tpu.memory_space<vmem>>, %arg2: memref<784x128xf32, #tpu.memory_space<vmem>>, %arg3: memref<1x128xf32, #tpu.memory_space<vmem>>, %arg4: memref<128x64xf32, #tpu.memory_space<vmem>>, %arg5: memref<1x64xf32, #tpu.memory_space<vmem>>, %arg6: memref<64x12xf32, #tpu.memory_space<vmem>>, %arg7: memref<1x12xf32, #tpu.memory_space<vmem>>, %arg8: memref<12x3xf32, #tpu.memory_space<vmem>>, %arg9: memref<1x3xf32, #tpu.memory_space<vmem>>, %arg10: memref<3x12xf32, #tpu.memory_space<vmem>>, %arg11: memref<1x12xf32, #tpu.memory_space<vmem>>, %arg12: memref<12x64xf32, #tpu.memory_space<vmem>>, %arg13: memref<1x64xf32, #tpu.memory_space<vmem>>, %arg14: memref<64x128xf32, #tpu.memory_space<vmem>>, %arg15: memref<1x128xf32, #tpu.memory_space<vmem>>, %arg16: memref<128x784xf32, #tpu.memory_space<vmem>>, %arg17: memref<1x784xf32, #tpu.memory_space<vmem>>, %arg18: memref<64x3xf32, #tpu.memory_space<vmem>>, %arg19: memref<64x784xf32, #tpu.memory_space<vmem>>) attributes {dimension_semantics = [#tpu.dimension_semantics<parallel>], iteration_bounds = array<i64: 8>, scalar_prefetch = 0 : i64, scratch_operands = 0 : i64, tpu.core_type = #tpu.core_type<tc>, window_params = [{transform_indices = @transform_0, window_bounds = array<i64: 64, 784>}, {pipeline_mode = #tpu.pipeline_mode<synchronous>, transform_indices = @transform_1, window_bounds = array<i64: 784, 128>}, {pipeline_mode = #tpu.pipeline_mode<synchronous>, transform_indices = @transform_2, window_bounds = array<i64: 1, 128>}, {pipeline_mode = #tpu.pipeline_mode<synchronous>, transform_indices = @transform_3, window_bounds = array<i64: 128, 64>}, {pipeline_mode = #tpu.pipeline_mode<synchronous>, transform_indices = @transform_4, window_bounds = array<i64: 1, 64>}, {pipeline_mode = #tpu.pipeline_mode<synchronous>, transform_indices = @transform_5, window_bounds = array<i64: 64, 12>}, {pipeline_mode = #tpu.pipeline_mode<synchronous>, transform_indices = @transform_6, window_bounds = array<i64: 1, 12>}, {pipeline_mode = #tpu.pipeline_mode<synchronous>, transform_indices = @transform_7, window_bounds = array<i64: 12, 3>}, {pipeline_mode = #tpu.pipeline_mode<synchronous>, transform_indices = @transform_8, window_bounds = array<i64: 1, 3>}, {pipeline_mode = #tpu.pipeline_mode<synchronous>, transform_indices = @transform_9, window_bounds = array<i64: 3, 12>}, {pipeline_mode = #tpu.pipeline_mode<synchronous>, transform_indices = @transform_10, window_bounds = array<i64: 1, 12>}, {pipeline_mode = #tpu.pipeline_mode<synchronous>, transform_indices = @transform_11, window_bounds = array<i64: 12, 64>}, {pipeline_mode = #tpu.pipeline_mode<synchronous>, transform_indices = @transform_12, window_bounds = array<i64: 1, 64>}, {pipeline_mode = #tpu.pipeline_mode<synchronous>, transform_indices = @transform_13, window_bounds = array<i64: 64, 128>}, {pipeline_mode = #tpu.pipeline_mode<synchronous>, transform_indices = @transform_14, window_bounds = array<i64: 1, 128>}, {pipeline_mode = #tpu.pipeline_mode<synchronous>, transform_indices = @transform_15, window_bounds = array<i64: 128, 784>}, {pipeline_mode = #tpu.pipeline_mode<synchronous>, transform_indices = @transform_16, window_bounds = array<i64: 1, 784>}, {transform_indices = @transform_17, window_bounds = array<i64: 64, 3>}, {transform_indices = @transform_18, window_bounds = array<i64: 64, 784>}]} {
    %c0 = arith.constant 0 : index
    %c0_0 = arith.constant 0 : index
    %0 = vector.load %arg1[%c0, %c0_0] : memref<64x784xf32, #tpu.memory_space<vmem>>, vector<64x784xf32>
    %c0_1 = arith.constant 0 : index
    %c0_2 = arith.constant 0 : index
    %1 = vector.load %arg2[%c0_1, %c0_2] : memref<784x128xf32, #tpu.memory_space<vmem>>, vector<784x128xf32>
    %cst = arith.constant dense<0.000000e+00> : vector<64x128xf32>
    %2 = tpu.matmul %0, %1, %cst {dimension_numbers = #tpu.dot_dimension_numbers<[1], [0], [0], [1], [0, 0, 1, 1], [], []>} : vector<64x784xf32>, vector<784x128xf32>, vector<64x128xf32> -> vector<64x128xf32>
    %c0_3 = arith.constant 0 : index
    %c0_4 = arith.constant 0 : index
    %3 = vector.load %arg3[%c0_3, %c0_4] : memref<1x128xf32, #tpu.memory_space<vmem>>, vector<1x128xf32>
    %4 = vector.broadcast %3 : vector<1x128xf32> to vector<64x128xf32>
    %5 = arith.addf %2, %4 : vector<64x128xf32>
    %6 = math.tanh %5 : vector<64x128xf32>
    %c0_5 = arith.constant 0 : index
    %c0_6 = arith.constant 0 : index
    %7 = vector.load %arg4[%c0_5, %c0_6] : memref<128x64xf32, #tpu.memory_space<vmem>>, vector<128x64xf32>
    %cst_7 = arith.constant dense<0.000000e+00> : vector<64x64xf32>
    %8 = tpu.matmul %6, %7, %cst_7 {dimension_numbers = #tpu.dot_dimension_numbers<[1], [0], [0], [1], [0, 0, 1, 1], [], []>} : vector<64x128xf32>, vector<128x64xf32>, vector<64x64xf32> -> vector<64x64xf32>
    %c0_8 = arith.constant 0 : index
    %c0_9 = arith.constant 0 : index
    %9 = vector.load %arg5[%c0_8, %c0_9] : memref<1x64xf32, #tpu.memory_space<vmem>>, vector<1x64xf32>
    %10 = vector.broadcast %9 : vector<1x64xf32> to vector<64x64xf32>
    %11 = arith.addf %8, %10 : vector<64x64xf32>
    %12 = math.tanh %11 : vector<64x64xf32>
    %c0_10 = arith.constant 0 : index
    %c0_11 = arith.constant 0 : index
    %13 = vector.load %arg6[%c0_10, %c0_11] : memref<64x12xf32, #tpu.memory_space<vmem>>, vector<64x12xf32>
    %cst_12 = arith.constant dense<0.000000e+00> : vector<64x12xf32>
    %14 = tpu.matmul %12, %13, %cst_12 {dimension_numbers = #tpu.dot_dimension_numbers<[1], [0], [0], [1], [0, 0, 1, 1], [], []>} : vector<64x64xf32>, vector<64x12xf32>, vector<64x12xf32> -> vector<64x12xf32>
    %c0_13 = arith.constant 0 : index
    %c0_14 = arith.constant 0 : index
    %15 = vector.load %arg7[%c0_13, %c0_14] : memref<1x12xf32, #tpu.memory_space<vmem>>, vector<1x12xf32>
    %16 = vector.broadcast %15 : vector<1x12xf32> to vector<64x12xf32>
    %17 = arith.addf %14, %16 : vector<64x12xf32>
    %18 = math.tanh %17 : vector<64x12xf32>
    %c0_15 = arith.constant 0 : index
    %c0_16 = arith.constant 0 : index
    %19 = vector.load %arg8[%c0_15, %c0_16] : memref<12x3xf32, #tpu.memory_space<vmem>>, vector<12x3xf32>
    %cst_17 = arith.constant dense<0.000000e+00> : vector<64x3xf32>
    %20 = tpu.matmul %18, %19, %cst_17 {dimension_numbers = #tpu.dot_dimension_numbers<[1], [0], [0], [1], [0, 0, 1, 1], [], []>} : vector<64x12xf32>, vector<12x3xf32>, vector<64x3xf32> -> vector<64x3xf32>
    %c0_18 = arith.constant 0 : index
    %c0_19 = arith.constant 0 : index
    %21 = vector.load %arg9[%c0_18, %c0_19] : memref<1x3xf32, #tpu.memory_space<vmem>>, vector<1x3xf32>
    %22 = vector.broadcast %21 : vector<1x3xf32> to vector<64x3xf32>
    %23 = arith.addf %20, %22 : vector<64x3xf32>
    %c0_20 = arith.constant 0 : index
    %c0_21 = arith.constant 0 : index
    %24 = vector.load %arg18[%c0_20, %c0_21] : memref<64x3xf32, #tpu.memory_space<vmem>>, vector<64x3xf32>
    tpu.vector_store %arg18[%c0_20, %c0_21], %23 {strides = array<i32>} : memref<64x3xf32, #tpu.memory_space<vmem>>, vector<64x3xf32>,
    %c0_22 = arith.constant 0 : index
    %c0_23 = arith.constant 0 : index
    %25 = vector.load %arg10[%c0_22, %c0_23] : memref<3x12xf32, #tpu.memory_space<vmem>>, vector<3x12xf32>
    %cst_24 = arith.constant dense<0.000000e+00> : vector<64x12xf32>
    %26 = tpu.matmul %23, %25, %cst_24 {dimension_numbers = #tpu.dot_dimension_numbers<[1], [0], [0], [1], [0, 0, 1, 1], [], []>} : vector<64x3xf32>, vector<3x12xf32>, vector<64x12xf32> -> vector<64x12xf32>
    %c0_25 = arith.constant 0 : index
    %c0_26 = arith.constant 0 : index
    %27 = vector.load %arg11[%c0_25, %c0_26] : memref<1x12xf32, #tpu.memory_space<vmem>>, vector<1x12xf32>
    %28 = vector.broadcast %27 : vector<1x12xf32> to vector<64x12xf32>
    %29 = arith.addf %26, %28 : vector<64x12xf32>
    %30 = math.tanh %29 : vector<64x12xf32>
    %c0_27 = arith.constant 0 : index
    %c0_28 = arith.constant 0 : index
    %31 = vector.load %arg12[%c0_27, %c0_28] : memref<12x64xf32, #tpu.memory_space<vmem>>, vector<12x64xf32>
    %cst_29 = arith.constant dense<0.000000e+00> : vector<64x64xf32>
    %32 = tpu.matmul %30, %31, %cst_29 {dimension_numbers = #tpu.dot_dimension_numbers<[1], [0], [0], [1], [0, 0, 1, 1], [], []>} : vector<64x12xf32>, vector<12x64xf32>, vector<64x64xf32> -> vector<64x64xf32>
    %c0_30 = arith.constant 0 : index
    %c0_31 = arith.constant 0 : index
    %33 = vector.load %arg13[%c0_30, %c0_31] : memref<1x64xf32, #tpu.memory_space<vmem>>, vector<1x64xf32>
    %34 = vector.broadcast %33 : vector<1x64xf32> to vector<64x64xf32>
    %35 = arith.addf %32, %34 : vector<64x64xf32>
    %36 = math.tanh %35 : vector<64x64xf32>
    %c0_32 = arith.constant 0 : index
    %c0_33 = arith.constant 0 : index
    %37 = vector.load %arg14[%c0_32, %c0_33] : memref<64x128xf32, #tpu.memory_space<vmem>>, vector<64x128xf32>
    %cst_34 = arith.constant dense<0.000000e+00> : vector<64x128xf32>
    %38 = tpu.matmul %36, %37, %cst_34 {dimension_numbers = #tpu.dot_dimension_numbers<[1], [0], [0], [1], [0, 0, 1, 1], [], []>} : vector<64x64xf32>, vector<64x128xf32>, vector<64x128xf32> -> vector<64x128xf32>
    %c0_35 = arith.constant 0 : index
    %c0_36 = arith.constant 0 : index
    %39 = vector.load %arg15[%c0_35, %c0_36] : memref<1x128xf32, #tpu.memory_space<vmem>>, vector<1x128xf32>
    %40 = vector.broadcast %39 : vector<1x128xf32> to vector<64x128xf32>
    %41 = arith.addf %38, %40 : vector<64x128xf32>
    %42 = math.tanh %41 : vector<64x128xf32>
    %c0_37 = arith.constant 0 : index
    %c0_38 = arith.constant 0 : index
    %43 = vector.load %arg16[%c0_37, %c0_38] : memref<128x784xf32, #tpu.memory_space<vmem>>, vector<128x784xf32>
    %cst_39 = arith.constant dense<0.000000e+00> : vector<64x784xf32>
    %44 = tpu.matmul %42, %43, %cst_39 {dimension_numbers = #tpu.dot_dimension_numbers<[1], [0], [0], [1], [0, 0, 1, 1], [], []>} : vector<64x128xf32>, vector<128x784xf32>, vector<64x784xf32> -> vector<64x784xf32>
    %c0_40 = arith.constant 0 : index
    %c0_41 = arith.constant 0 : index
    %45 = vector.load %arg17[%c0_40, %c0_41] : memref<1x784xf32, #tpu.memory_space<vmem>>, vector<1x784xf32>
    %46 = vector.broadcast %45 : vector<1x784xf32> to vector<64x784xf32>
    %47 = arith.addf %44, %46 : vector<64x784xf32>
    %48 = arith.negf %47 : vector<64x784xf32>
    %49 = math.exp %48 : vector<64x784xf32>
    %cst_42 = arith.constant 1.000000e+00 : f32
    %50 = vector.broadcast %cst_42 : f32 to vector<64x784xf32>
    %51 = arith.addf %50, %49 : vector<64x784xf32>
    %52 = arith.divf %50, %51 : vector<64x784xf32>
    %c0_43 = arith.constant 0 : index
    %c0_44 = arith.constant 0 : index
    %53 = vector.load %arg19[%c0_43, %c0_44] : memref<64x784xf32, #tpu.memory_space<vmem>>, vector<64x784xf32>
    tpu.vector_store %arg19[%c0_43, %c0_44], %52 {strides = array<i32>} : memref<64x784xf32, #tpu.memory_space<vmem>>, vector<64x784xf32>,
    return
  }
  func.func @transform_0(%arg0: i32) -> (i32, i32) {
    %c0_i32 = arith.constant 0 : i32
    %c0_i32_0 = arith.constant 0 : i32
    return %arg0, %c0_i32 : i32, i32
  }
  func.func @transform_1(%arg0: i32) -> (i32, i32) {
    %c0_i32 = arith.constant 0 : i32
    %c0_i32_0 = arith.constant 0 : i32
    %c0_i32_1 = arith.constant 0 : i32
    return %c0_i32, %c0_i32_0 : i32, i32
  }
  func.func @transform_2(%arg0: i32) -> (i32, i32) {
    %c0_i32 = arith.constant 0 : i32
    %c0_i32_0 = arith.constant 0 : i32
    %c0_i32_1 = arith.constant 0 : i32
    return %c0_i32, %c0_i32_0 : i32, i32
  }
  func.func @transform_3(%arg0: i32) -> (i32, i32) {
    %c0_i32 = arith.constant 0 : i32
    %c0_i32_0 = arith.constant 0 : i32
    %c0_i32_1 = arith.constant 0 : i32
    return %c0_i32, %c0_i32_0 : i32, i32
  }
  func.func @transform_4(%arg0: i32) -> (i32, i32) {
    %c0_i32 = arith.constant 0 : i32
    %c0_i32_0 = arith.constant 0 : i32
    %c0_i32_1 = arith.constant 0 : i32
    return %c0_i32, %c0_i32_0 : i32, i32
  }
  func.func @transform_5(%arg0: i32) -> (i32, i32) {
    %c0_i32 = arith.constant 0 : i32
    %c0_i32_0 = arith.constant 0 : i32
    %c0_i32_1 = arith.constant 0 : i32
    return %c0_i32, %c0_i32_0 : i32, i32
  }
  func.func @transform_6(%arg0: i32) -> (i32, i32) {
    %c0_i32 = arith.constant 0 : i32
    %c0_i32_0 = arith.constant 0 : i32
    %c0_i32_1 = arith.constant 0 : i32
    return %c0_i32, %c0_i32_0 : i32, i32
  }
  func.func @transform_7(%arg0: i32) -> (i32, i32) {
    %c0_i32 = arith.constant 0 : i32
    %c0_i32_0 = arith.constant 0 : i32
    %c0_i32_1 = arith.constant 0 : i32
    return %c0_i32, %c0_i32_0 : i32, i32
  }
  func.func @transform_8(%arg0: i32) -> (i32, i32) {
    %c0_i32 = arith.constant 0 : i32
    %c0_i32_0 = arith.constant 0 : i32
    %c0_i32_1 = arith.constant 0 : i32
    return %c0_i32, %c0_i32_0 : i32, i32
  }
  func.func @transform_9(%arg0: i32) -> (i32, i32) {
    %c0_i32 = arith.constant 0 : i32
    %c0_i32_0 = arith.constant 0 : i32
    %c0_i32_1 = arith.constant 0 : i32
    return %c0_i32, %c0_i32_0 : i32, i32
  }
  func.func @transform_10(%arg0: i32) -> (i32, i32) {
    %c0_i32 = arith.constant 0 : i32
    %c0_i32_0 = arith.constant 0 : i32
    %c0_i32_1 = arith.constant 0 : i32
    return %c0_i32, %c0_i32_0 : i32, i32
  }
  func.func @transform_11(%arg0: i32) -> (i32, i32) {
    %c0_i32 = arith.constant 0 : i32
    %c0_i32_0 = arith.constant 0 : i32
    %c0_i32_1 = arith.constant 0 : i32
    return %c0_i32, %c0_i32_0 : i32, i32
  }
  func.func @transform_12(%arg0: i32) -> (i32, i32) {
    %c0_i32 = arith.constant 0 : i32
    %c0_i32_0 = arith.constant 0 : i32
    %c0_i32_1 = arith.constant 0 : i32
    return %c0_i32, %c0_i32_0 : i32, i32
  }
  func.func @transform_13(%arg0: i32) -> (i32, i32) {
    %c0_i32 = arith.constant 0 : i32
    %c0_i32_0 = arith.constant 0 : i32
    %c0_i32_1 = arith.constant 0 : i32
    return %c0_i32, %c0_i32_0 : i32, i32
  }
  func.func @transform_14(%arg0: i32) -> (i32, i32) {
    %c0_i32 = arith.constant 0 : i32
    %c0_i32_0 = arith.constant 0 : i32
    %c0_i32_1 = arith.constant 0 : i32
    return %c0_i32, %c0_i32_0 : i32, i32
  }
  func.func @transform_15(%arg0: i32) -> (i32, i32) {
    %c0_i32 = arith.constant 0 : i32
    %c0_i32_0 = arith.constant 0 : i32
    %c0_i32_1 = arith.constant 0 : i32
    return %c0_i32, %c0_i32_0 : i32, i32
  }
  func.func @transform_16(%arg0: i32) -> (i32, i32) {
    %c0_i32 = arith.constant 0 : i32
    %c0_i32_0 = arith.constant 0 : i32
    %c0_i32_1 = arith.constant 0 : i32
    return %c0_i32, %c0_i32_0 : i32, i32
  }
  func.func @transform_17(%arg0: i32) -> (i32, i32) {
    %c0_i32 = arith.constant 0 : i32
    %c0_i32_0 = arith.constant 0 : i32
    return %arg0, %c0_i32 : i32, i32
  }
  func.func @transform_18(%arg0: i32) -> (i32, i32) {
    %c0_i32 = arith.constant 0 : i32
    %c0_i32_0 = arith.constant 0 : i32
    return %arg0, %c0_i32 : i32, i32
  }
}

</mosaic_0001>

<llo_original>
// kernel: autoencoder_forward.1
$region0: #{autoencoder_forward.1}
  #allocation0 [shape = 'u32[]', space=smem, size = 0x4, offset = 0x4, fixed_abs, tag = 'smem constant byte address 0x4 - core index']
  #allocation1 [shape = 'u32[72,128]{1,0:T(1,128)}', space=vmem, size = 0x9000, scoped, tag = 'internal scratch']
  %s0 = inlined_call_operand.vmem [shape: f32[512,784], index: 0, kind: input, shape index: {}]
  %s1 = inlined_call_operand.vmem [shape: f32[784,128], index: 1, kind: input, shape index: {}]
  %s2 = inlined_call_operand.vmem [shape: f32[1,128], index: 2, kind: input, shape index: {}]
  %s3 = inlined_call_operand.vmem [shape: f32[128,64], index: 3, kind: input, shape index: {}]
  %s4 = inlined_call_operand.vmem [shape: f32[1,64], index: 4, kind: input, shape index: {}]
  %s5 = inlined_call_operand.vmem [shape: f32[64,12], index: 5, kind: input, shape index: {}]
  %s6 = inlined_call_operand.vmem [shape: f32[1,12], index: 6, kind: input, shape index: {}]
  %s7 = inlined_call_operand.vmem [shape: f32[12,3], index: 7, kind: input, shape index: {}]
  %s8 = inlined_call_operand.vmem [shape: f32[1,3], index: 8, kind: input, shape index: {}]
  %s9 = inlined_call_operand.vmem [shape: f32[3,12], index: 9, kind: input, shape index: {}]
  %s10 = inlined_call_operand.vmem [shape: f32[1,12], index: 10, kind: input, shape index: {}]
  %s11 = inlined_call_operand.vmem [shape: f32[12,64], index: 11, kind: input, shape index: {}]
  %s12 = inlined_call_operand.vmem [shape: f32[1,64], index: 12, kind: input, shape index: {}]
  %s13 = inlined_call_operand.vmem [shape: f32[64,128], index: 13, kind: input, shape index: {}]
  %s14 = inlined_call_operand.vmem [shape: f32[1,128], index: 14, kind: input, shape index: {}]
  %s15 = inlined_call_operand.vmem [shape: f32[128,784], index: 15, kind: input, shape index: {}]
  %s16 = inlined_call_operand.vmem [shape: f32[1,784], index: 16, kind: input, shape index: {}]
  %s17 = inlined_call_operand.vmem [shape: f32[512,3], index: 17, kind: output, shape index: {0}]
  %s18 = inlined_call_operand.vmem [shape: f32[512,784], index: 18, kind: output, shape index: {1}]
  %19 = xla_tuple %s17, %s18
  %s20 = sld [smem:[#allocation0]]
  $region109: #{autoencoder_forward.1} parent=0
    _
  %s22 = ssub.s32 1, %s20
  %s23 = scalar_select 0, %s22, %s20
  loop: start=0, step=1, limit=10
  $region2: #{autoencoder_forward.1} parent=0 // loop_pre_header
    _
  $region3: #{autoencoder_forward.1} parent=0 // loop_header
    %s25 = sphi 0, %s29
    %p26 = scmp.ge.s32.totalorder %s25, 10
    %s35 = sphi 0, %s37
    %s38 = sphi 0, %s35
    %s39 = sphi 0, %s38
    %s55 = sphi 0, %s39
    %s59 = sphi 0, %s59
    %s61 = sphi 0, %s59
    %s62 = sphi 0, %s61
    %s76 = sphi 0, %s62
    %s80 = sphi 0, %s80
    %s82 = sphi 0, %s80
    %s83 = sphi 0, %s82
    %s97 = sphi 0, %s83
    %s101 = sphi 0, %s101
    %s103 = sphi 0, %s101
    %s104 = sphi 0, %s103
    %s118 = sphi 0, %s104
    %s122 = sphi 0, %s122
    %s124 = sphi 0, %s122
    %s125 = sphi 0, %s124
    %s139 = sphi 0, %s125
    %s143 = sphi 0, %s143
    %s145 = sphi 0, %s143
    %s146 = sphi 0, %s145
    %s160 = sphi 0, %s146
    %s164 = sphi 0, %s164
    %s166 = sphi 0, %s164
    %s167 = sphi 0, %s166
    %s181 = sphi 0, %s167
    %s185 = sphi 0, %s185
    %s187 = sphi 0, %s185
    %s188 = sphi 0, %s187
    %s202 = sphi 0, %s188
    %s206 = sphi 0, %s206
    %s208 = sphi 0, %s206
    %s209 = sphi 0, %s208
    %s223 = sphi 0, %s209
    %s227 = sphi 0, %s227
    %s229 = sphi 0, %s227
    %s230 = sphi 0, %s229
    %s244 = sphi 0, %s230
    %s248 = sphi 0, %s248
    %s250 = sphi 0, %s248
    %s251 = sphi 0, %s250
    %s265 = sphi 0, %s251
    %s269 = sphi 0, %s269
    %s271 = sphi 0, %s269
    %s272 = sphi 0, %s271
    %s286 = sphi 0, %s272
    %s290 = sphi 0, %s290
    %s292 = sphi 0, %s290
    %s293 = sphi 0, %s292
    %s307 = sphi 0, %s293
    %s311 = sphi 0, %s311
    %s313 = sphi 0, %s311
    %s314 = sphi 0, %s313
    %s328 = sphi 0, %s314
    %s332 = sphi 0, %s332
    %s334 = sphi 0, %s332
    %s335 = sphi 0, %s334
    %s349 = sphi 0, %s335
    %s353 = sphi 0, %s353
    %s355 = sphi 0, %s353
    %s356 = sphi 0, %s355
    %s370 = sphi 0, %s356
    %s374 = sphi 0, %s374
    %s376 = sphi 0, %s374
    %s377 = sphi 0, %s376
    %s391 = sphi 0, %s377
    %s397 = sphi 0, %s399
    %s400 = sphi 0, %s397
    %s401 = sphi 0, %s400
    %s417 = sphi 0, %s401
    %s423 = sphi 0, %s425
    %s426 = sphi 0, %s423
    %s427 = sphi 0, %s426
    %s443 = sphi 0, %s427
  $region4: #{autoencoder_forward.1} parent=0 // loop_header_branch
    %28 = sbr.rel (%p26) target = $region8
  $region5: #{autoencoder_forward.1} parent=0 // loop_body
    %s30 = ssub.s32 %s25, 1
    %s31 = ssub.s32 %s25, 2
    %s32 = sadd.s32 %s25, 1
    %s33 = ssub.s32 %s25, %s32
    %p34 = scmp.eq.s32.totalorder %s33, 0
    %s36 = sadd.s32 %s35, 1
    %s37 = scalar_select %p34, %s35, %s36
    %p40 = pneg %p34
    %p41 = scmp.eq.s32.totalorder %s25, 7
    %p42 = por %p40, %p41
    %p43 = scmp.ne.s32.totalorder %s35, %s38
    %p44 = scmp.eq.s32.totalorder %s25, 0
    %p45 = por %p43, %p44
    %p46 = scmp.ne.s32.totalorder %s35, %s38
    %p47 = scmp.eq.s32.totalorder %s30, 7
    %p48 = por %p46, %p47
    %p49 = scmp.ne.s32.totalorder %s38, %s39
    %p50 = scmp.eq.s32.totalorder %s30, 0
    %p51 = por %p49, %p50
    %p52 = scmp.ne.s32.totalorder %s38, %s39
    %p53 = scmp.eq.s32.totalorder %s31, 7
    %p54 = por %p52, %p53
    %p56 = scmp.ne.s32.totalorder %s39, %s55
    %p57 = scmp.eq.s32.totalorder %s31, 0
    %p58 = por %p56, %p57
    %s60 = sadd.s32 %s59, 1
    %p63 = scmp.eq.s32.totalorder %s25, 7
    %p64 = scmp.ne.s32.totalorder %s59, %s61
    %p65 = scmp.eq.s32.totalorder %s25, 0
    %p66 = por %p64, %p65
    %p67 = scmp.ne.s32.totalorder %s59, %s61
    %p68 = scmp.eq.s32.totalorder %s30, 7
    %p69 = por %p67, %p68
    %p70 = scmp.ne.s32.totalorder %s61, %s62
    %p71 = scmp.eq.s32.totalorder %s30, 0
    %p72 = por %p70, %p71
    %p73 = scmp.ne.s32.totalorder %s61, %s62
    %p74 = scmp.eq.s32.totalorder %s31, 7
    %p75 = por %p73, %p74
    %p77 = scmp.ne.s32.totalorder %s62, %s76
    %p78 = scmp.eq.s32.totalorder %s31, 0
    %p79 = por %p77, %p78
    %s81 = sadd.s32 %s80, 1
    %p84 = scmp.eq.s32.totalorder %s25, 7
    %p85 = scmp.ne.s32.totalorder %s80, %s82
    %p86 = scmp.eq.s32.totalorder %s25, 0
    %p87 = por %p85, %p86
    %p88 = scmp.ne.s32.totalorder %s80, %s82
    %p89 = scmp.eq.s32.totalorder %s30, 7
    %p90 = por %p88, %p89
    %p91 = scmp.ne.s32.totalorder %s82, %s83
    %p92 = scmp.eq.s32.totalorder %s30, 0
    %p93 = por %p91, %p92
    %p94 = scmp.ne.s32.totalorder %s82, %s83
    %p95 = scmp.eq.s32.totalorder %s31, 7
    %p96 = por %p94, %p95
    %p98 = scmp.ne.s32.totalorder %s83, %s97
    %p99 = scmp.eq.s32.totalorder %s31, 0
    %p100 = por %p98, %p99
    %s102 = sadd.s32 %s101, 1
    %p105 = scmp.eq.s32.totalorder %s25, 7
    %p106 = scmp.ne.s32.totalorder %s101, %s103
    %p107 = scmp.eq.s32.totalorder %s25, 0
    %p108 = por %p106, %p107
    %p109 = scmp.ne.s32.totalorder %s101, %s103
    %p110 = scmp.eq.s32.totalorder %s30, 7
    %p111 = por %p109, %p110
    %p112 = scmp.ne.s32.totalorder %s103, %s104
    %p113 = scmp.eq.s32.totalorder %s30, 0
    %p114 = por %p112, %p113
    %p115 = scmp.ne.s32.totalorder %s103, %s104
    %p116 = scmp.eq.s32.totalorder %s31, 7
    %p117 = por %p115, %p116
    %p119 = scmp.ne.s32.totalorder %s104, %s118
    %p120 = scmp.eq.s32.totalorder %s31, 0
    %p121 = por %p119, %p120
    %s123 = sadd.s32 %s122, 1
    %p126 = scmp.eq.s32.totalorder %s25, 7
    %p127 = scmp.ne.s32.totalorder %s122, %s124
    %p128 = scmp.eq.s32.totalorder %s25, 0
    %p129 = por %p127, %p128
    %p130 = scmp.ne.s32.totalorder %s122, %s124
    %p131 = scmp.eq.s32.totalorder %s30, 7
    %p132 = por %p130, %p131
    %p133 = scmp.ne.s32.totalorder %s124, %s125
    %p134 = scmp.eq.s32.totalorder %s30, 0
    %p135 = por %p133, %p134
    %p136 = scmp.ne.s32.totalorder %s124, %s125
    %p137 = scmp.eq.s32.totalorder %s31, 7
    %p138 = por %p136, %p137
    %p140 = scmp.ne.s32.totalorder %s125, %s139
    %p141 = scmp.eq.s32.totalorder %s31, 0
    %p142 = por %p140, %p141
    %s144 = sadd.s32 %s143, 1
    %p147 = scmp.eq.s32.totalorder %s25, 7
    %p148 = scmp.ne.s32.totalorder %s143, %s145
    %p149 = scmp.eq.s32.totalorder %s25, 0
    %p150 = por %p148, %p149
    %p151 = scmp.ne.s32.totalorder %s143, %s145
    %p152 = scmp.eq.s32.totalorder %s30, 7
    %p153 = por %p151, %p152
    %p154 = scmp.ne.s32.totalorder %s145, %s146
    %p155 = scmp.eq.s32.totalorder %s30, 0
    %p156 = por %p154, %p155
    %p157 = scmp.ne.s32.totalorder %s145, %s146
    %p158 = scmp.eq.s32.totalorder %s31, 7
    %p159 = por %p157, %p158
    %p161 = scmp.ne.s32.totalorder %s146, %s160
    %p162 = scmp.eq.s32.totalorder %s31, 0
    %p163 = por %p161, %p162
    %s165 = sadd.s32 %s164, 1
    %p168 = scmp.eq.s32.totalorder %s25, 7
    %p169 = scmp.ne.s32.totalorder %s164, %s166
    %p170 = scmp.eq.s32.totalorder %s25, 0
    %p171 = por %p169, %p170
    %p172 = scmp.ne.s32.totalorder %s164, %s166
    %p173 = scmp.eq.s32.totalorder %s30, 7
    %p174 = por %p172, %p173
    %p175 = scmp.ne.s32.totalorder %s166, %s167
    %p176 = scmp.eq.s32.totalorder %s30, 0
    %p177 = por %p175, %p176
    %p178 = scmp.ne.s32.totalorder %s166, %s167
    %p179 = scmp.eq.s32.totalorder %s31, 7
    %p180 = por %p178, %p179
    %p182 = scmp.ne.s32.totalorder %s167, %s181
    %p183 = scmp.eq.s32.totalorder %s31, 0
    %p184 = por %p182, %p183
    %s186 = sadd.s32 %s185, 1
    %p189 = scmp.eq.s32.totalorder %s25, 7
    %p190 = scmp.ne.s32.totalorder %s185, %s187
    %p191 = scmp.eq.s32.totalorder %s25, 0
    %p192 = por %p190, %p191
    %p193 = scmp.ne.s32.totalorder %s185, %s187
    %p194 = scmp.eq.s32.totalorder %s30, 7
    %p195 = por %p193, %p194
    %p196 = scmp.ne.s32.totalorder %s187, %s188
    %p197 = scmp.eq.s32.totalorder %s30, 0
    %p198 = por %p196, %p197
    %p199 = scmp.ne.s32.totalorder %s187, %s188
    %p200 = scmp.eq.s32.totalorder %s31, 7
    %p201 = por %p199, %p200
    %p203 = scmp.ne.s32.totalorder %s188, %s202
    %p204 = scmp.eq.s32.totalorder %s31, 0
    %p205 = por %p203, %p204
    %s207 = sadd.s32 %s206, 1
    %p210 = scmp.eq.s32.totalorder %s25, 7
    %p211 = scmp.ne.s32.totalorder %s206, %s208
    %p212 = scmp.eq.s32.totalorder %s25, 0
    %p213 = por %p211, %p212
    %p214 = scmp.ne.s32.totalorder %s206, %s208
    %p215 = scmp.eq.s32.totalorder %s30, 7
    %p216 = por %p214, %p215
    %p217 = scmp.ne.s32.totalorder %s208, %s209
    %p218 = scmp.eq.s32.totalorder %s30, 0
    %p219 = por %p217, %p218
    %p220 = scmp.ne.s32.totalorder %s208, %s209
    %p221 = scmp.eq.s32.totalorder %s31, 7
    %p222 = por %p220, %p221
    %p224 = scmp.ne.s32.totalorder %s209, %s223
    %p225 = scmp.eq.s32.totalorder %s31, 0
    %p226 = por %p224, %p225
    %s228 = sadd.s32 %s227, 1
    %p231 = scmp.eq.s32.totalorder %s25, 7
    %p232 = scmp.ne.s32.totalorder %s227, %s229
    %p233 = scmp.eq.s32.totalorder %s25, 0
    %p234 = por %p232, %p233
    %p235 = scmp.ne.s32.totalorder %s227, %s229
    %p236 = scmp.eq.s32.totalorder %s30, 7
    %p237 = por %p235, %p236
    %p238 = scmp.ne.s32.totalorder %s229, %s230
    %p239 = scmp.eq.s32.totalorder %s30, 0
    %p240 = por %p238, %p239
    %p241 = scmp.ne.s32.totalorder %s229, %s230
    %p242 = scmp.eq.s32.totalorder %s31, 7
    %p243 = por %p241, %p242
    %p245 = scmp.ne.s32.totalorder %s230, %s244
    %p246 = scmp.eq.s32.totalorder %s31, 0
    %p247 = por %p245, %p246
    %s249 = sadd.s32 %s248, 1
    %p252 = scmp.eq.s32.totalorder %s25, 7
    %p253 = scmp.ne.s32.totalorder %s248, %s250
    %p254 = scmp.eq.s32.totalorder %s25, 0
    %p255 = por %p253, %p254
    %p256 = scmp.ne.s32.totalorder %s248, %s250
    %p257 = scmp.eq.s32.totalorder %s30, 7
    %p258 = por %p256, %p257
    %p259 = scmp.ne.s32.totalorder %s250, %s251
    %p260 = scmp.eq.s32.totalorder %s30, 0
    %p261 = por %p259, %p260
    %p262 = scmp.ne.s32.totalorder %s250, %s251
    %p263 = scmp.eq.s32.totalorder %s31, 7
    %p264 = por %p262, %p263
    %p266 = scmp.ne.s32.totalorder %s251, %s265
    %p267 = scmp.eq.s32.totalorder %s31, 0
    %p268 = por %p266, %p267
    %s270 = sadd.s32 %s269, 1
    %p273 = scmp.eq.s32.totalorder %s25, 7
    %p274 = scmp.ne.s32.totalorder %s269, %s271
    %p275 = scmp.eq.s32.totalorder %s25, 0
    %p276 = por %p274, %p275
    %p277 = scmp.ne.s32.totalorder %s269, %s271
    %p278 = scmp.eq.s32.totalorder %s30, 7
    %p279 = por %p277, %p278
    %p280 = scmp.ne.s32.totalorder %s271, %s272
    %p281 = scmp.eq.s32.totalorder %s30, 0
    %p282 = por %p280, %p281
    %p283 = scmp.ne.s32.totalorder %s271, %s272
    %p284 = scmp.eq.s32.totalorder %s31, 7
    %p285 = por %p283, %p284
    %p287 = scmp.ne.s32.totalorder %s272, %s286
    %p288 = scmp.eq.s32.totalorder %s31, 0
    %p289 = por %p287, %p288
    %s291 = sadd.s32 %s290, 1
    %p294 = scmp.eq.s32.totalorder %s25, 7
    %p295 = scmp.ne.s32.totalorder %s290, %s292
    %p296 = scmp.eq.s32.totalorder %s25, 0
    %p297 = por %p295, %p296
    %p298 = scmp.ne.s32.totalorder %s290, %s292
    %p299 = scmp.eq.s32.totalorder %s30, 7
    %p300 = por %p298, %p299
    %p301 = scmp.ne.s32.totalorder %s292, %s293
    %p302 = scmp.eq.s32.totalorder %s30, 0
    %p303 = por %p301, %p302
    %p304 = scmp.ne.s32.totalorder %s292, %s293
    %p305 = scmp.eq.s32.totalorder %s31, 7
    %p306 = por %p304, %p305
    %p308 = scmp.ne.s32.totalorder %s293, %s307
    %p309 = scmp.eq.s32.totalorder %s31, 0
    %p310 = por %p308, %p309
    %s312 = sadd.s32 %s311, 1
    %p315 = scmp.eq.s32.totalorder %s25, 7
    %p316 = scmp.ne.s32.totalorder %s311, %s313
    %p317 = scmp.eq.s32.totalorder %s25, 0
    %p318 = por %p316, %p317
    %p319 = scmp.ne.s32.totalorder %s311, %s313
    %p320 = scmp.eq.s32.totalorder %s30, 7
    %p321 = por %p319, %p320
    %p322 = scmp.ne.s32.totalorder %s313, %s314
    %p323 = scmp.eq.s32.totalorder %s30, 0
    %p324 = por %p322, %p323
    %p325 = scmp.ne.s32.totalorder %s313, %s314
    %p326 = scmp.eq.s32.totalorder %s31, 7
    %p327 = por %p325, %p326
    %p329 = scmp.ne.s32.totalorder %s314, %s328
    %p330 = scmp.eq.s32.totalorder %s31, 0
    %p331 = por %p329, %p330
    %s333 = sadd.s32 %s332, 1
    %p336 = scmp.eq.s32.totalorder %s25, 7
    %p337 = scmp.ne.s32.totalorder %s332, %s334
    %p338 = scmp.eq.s32.totalorder %s25, 0
    %p339 = por %p337, %p338
    %p340 = scmp.ne.s32.totalorder %s332, %s334
    %p341 = scmp.eq.s32.totalorder %s30, 7
    %p342 = por %p340, %p341
    %p343 = scmp.ne.s32.totalorder %s334, %s335
    %p344 = scmp.eq.s32.totalorder %s30, 0
    %p345 = por %p343, %p344
    %p346 = scmp.ne.s32.totalorder %s334, %s335
    %p347 = scmp.eq.s32.totalorder %s31, 7
    %p348 = por %p346, %p347
    %p350 = scmp.ne.s32.totalorder %s335, %s349
    %p351 = scmp.eq.s32.totalorder %s31, 0
    %p352 = por %p350, %p351
    %s354 = sadd.s32 %s353, 1
    %p357 = scmp.eq.s32.totalorder %s25, 7
    %p358 = scmp.ne.s32.totalorder %s353, %s355
    %p359 = scmp.eq.s32.totalorder %s25, 0
    %p360 = por %p358, %p359
    %p361 = scmp.ne.s32.totalorder %s353, %s355
    %p362 = scmp.eq.s32.totalorder %s30, 7
    %p363 = por %p361, %p362
    %p364 = scmp.ne.s32.totalorder %s355, %s356
    %p365 = scmp.eq.s32.totalorder %s30, 0
    %p366 = por %p364, %p365
    %p367 = scmp.ne.s32.totalorder %s355, %s356
    %p368 = scmp.eq.s32.totalorder %s31, 7
    %p369 = por %p367, %p368
    %p371 = scmp.ne.s32.totalorder %s356, %s370
    %p372 = scmp.eq.s32.totalorder %s31, 0
    %p373 = por %p371, %p372
    %s375 = sadd.s32 %s374, 1
    %p378 = scmp.eq.s32.totalorder %s25, 7
    %p379 = scmp.ne.s32.totalorder %s374, %s376
    %p380 = scmp.eq.s32.totalorder %s25, 0
    %p381 = por %p379, %p380
    %p382 = scmp.ne.s32.totalorder %s374, %s376
    %p383 = scmp.eq.s32.totalorder %s30, 7
    %p384 = por %p382, %p383
    %p385 = scmp.ne.s32.totalorder %s376, %s377
    %p386 = scmp.eq.s32.totalorder %s30, 0
    %p387 = por %p385, %p386
    %p388 = scmp.ne.s32.totalorder %s376, %s377
    %p389 = scmp.eq.s32.totalorder %s31, 7
    %p390 = por %p388, %p389
    %p392 = scmp.ne.s32.totalorder %s377, %s391
    %p393 = scmp.eq.s32.totalorder %s31, 0
    %p394 = por %p392, %p393
    %s395 = ssub.s32 %s25, %s32
    %p396 = scmp.eq.s32.totalorder %s395, 0
    %s398 = sadd.s32 %s397, 1
    %s399 = scalar_select %p396, %s397, %s398
    %p402 = pneg %p396
    %p403 = scmp.eq.s32.totalorder %s25, 7
    %p404 = por %p402, %p403
    %p405 = scmp.ne.s32.totalorder %s397, %s400
    %p406 = scmp.eq.s32.totalorder %s25, 0
    %p407 = por %p405, %p406
    %p408 = scmp.ne.s32.totalorder %s397, %s400
    %p409 = scmp.eq.s32.totalorder %s30, 7
    %p410 = por %p408, %p409
    %p411 = scmp.ne.s32.totalorder %s400, %s401
    %p412 = scmp.eq.s32.totalorder %s30, 0
    %p413 = por %p411, %p412
    %p414 = scmp.ne.s32.totalorder %s400, %s401
    %p415 = scmp.eq.s32.totalorder %s31, 7
    %p416 = por %p414, %p415
    %p418 = scmp.ne.s32.totalorder %s401, %s417
    %p419 = scmp.eq.s32.totalorder %s31, 0
    %p420 = por %p418, %p419
    %s421 = ssub.s32 %s25, %s32
    %p422 = scmp.eq.s32.totalorder %s421, 0
    %s424 = sadd.s32 %s423, 1
    %s425 = scalar_select %p422, %s423, %s424
    %p428 = pneg %p422
    %p429 = scmp.eq.s32.totalorder %s25, 7
    %p430 = por %p428, %p429
    %p431 = scmp.ne.s32.totalorder %s423, %s426
    %p432 = scmp.eq.s32.totalorder %s25, 0
    %p433 = por %p431, %p432
    %p434 = scmp.ne.s32.totalorder %s423, %s426
    %p435 = scmp.eq.s32.totalorder %s30, 7
    %p436 = por %p434, %p435
    %p437 = scmp.ne.s32.totalorder %s426, %s427
    %p438 = scmp.eq.s32.totalorder %s30, 0
    %p439 = por %p437, %p438
    %p440 = scmp.ne.s32.totalorder %s426, %s427
    %p441 = scmp.eq.s32.totalorder %s31, 7
    %p442 = por %p440, %p441
    %p444 = scmp.ne.s32.totalorder %s427, %s443
    %p445 = scmp.eq.s32.totalorder %s31, 0
    %p446 = por %p444, %p445
    %p447 = scmp.le.s32.totalorder 1, %s25
    %p448 = scmp.lt.s32.totalorder %s25, 9
    %p449 = pnand %p447, %p448
    %p450 = pneg %p449
    // Predicated region
    $region9: #{autoencoder_forward.1} parent=5 // pred_check
      _
    $region10: #{autoencoder_forward.1} parent=5 // pred_check_branch
      %452 = sbr.rel (%p449) target = $region12
    $region11: #{autoencoder_forward.1} parent=5 // pred_region
      %s453 = ssub.s32 %s25, 1
      // Predicated region
      $region13: #{autoencoder_forward.1} parent=11 // pred_check
        %p454 = pneg %p72
      $region14: #{autoencoder_forward.1} parent=11 // pred_check_branch
        %456 = sbr.rel (%p454) target = $region16
      $region15: #{autoencoder_forward.1} parent=11 // pred_region
        _
      $region16: #{autoencoder_forward.1} parent=11 // pred_fallthru
        _
      // Predicated region
      $region17: #{autoencoder_forward.1} parent=11 // pred_check
        %p457 = pneg %p93
      $region18: #{autoencoder_forward.1} parent=11 // pred_check_branch
        %459 = sbr.rel (%p457) target = $region20
      $region19: #{autoencoder_forward.1} parent=11 // pred_region
        _
      $region20: #{autoencoder_forward.1} parent=11 // pred_fallthru
        _
      // Predicated region
      $region21: #{autoencoder_forward.1} parent=11 // pred_check
        %p460 = pneg %p114
      $region22: #{autoencoder_forward.1} parent=11 // pred_check_branch
        %462 = sbr.rel (%p460) target = $region24
      $region23: #{autoencoder_forward.1} parent=11 // pred_region
        _
      $region24: #{autoencoder_forward.1} parent=11 // pred_fallthru
        _
      // Predicated region
      $region25: #{autoencoder_forward.1} parent=11 // pred_check
        %p463 = pneg %p135
      $region26: #{autoencoder_forward.1} parent=11 // pred_check_branch
        %465 = sbr.rel (%p463) target = $region28
      $region27: #{autoencoder_forward.1} parent=11 // pred_region
        _
      $region28: #{autoencoder_forward.1} parent=11 // pred_fallthru
        _
      // Predicated region
      $region29: #{autoencoder_forward.1} parent=11 // pred_check
        %p466 = pneg %p156
      $region30: #{autoencoder_forward.1} parent=11 // pred_check_branch
        %468 = sbr.rel (%p466) target = $region32
      $region31: #{autoencoder_forward.1} parent=11 // pred_region
        _
      $region32: #{autoencoder_forward.1} parent=11 // pred_fallthru
        _
      // Predicated region
      $region33: #{autoencoder_forward.1} parent=11 // pred_check
        %p469 = pneg %p177
      $region34: #{autoencoder_forward.1} parent=11 // pred_check_branch
        %471 = sbr.rel (%p469) target = $region36
      $region35: #{autoencoder_forward.1} parent=11 // pred_region
        _
      $region36: #{autoencoder_forward.1} parent=11 // pred_fallthru
        _
      // Predicated region
      $region37: #{autoencoder_forward.1} parent=11 // pred_check
        %p472 = pneg %p198
      $region38: #{autoencoder_forward.1} parent=11 // pred_check_branch
        %474 = sbr.rel (%p472) target = $region40
      $region39: #{autoencoder_forward.1} parent=11 // pred_region
        _
      $region40: #{autoencoder_forward.1} parent=11 // pred_fallthru
        _
      // Predicated region
      $region41: #{autoencoder_forward.1} parent=11 // pred_check
        %p475 = pneg %p219
      $region42: #{autoencoder_forward.1} parent=11 // pred_check_branch
        %477 = sbr.rel (%p475) target = $region44
      $region43: #{autoencoder_forward.1} parent=11 // pred_region
        _
      $region44: #{autoencoder_forward.1} parent=11 // pred_fallthru
        _
      // Predicated region
      $region45: #{autoencoder_forward.1} parent=11 // pred_check
        %p478 = pneg %p240
      $region46: #{autoencoder_forward.1} parent=11 // pred_check_branch
        %480 = sbr.rel (%p478) target = $region48
      $region47: #{autoencoder_forward.1} parent=11 // pred_region
        _
      $region48: #{autoencoder_forward.1} parent=11 // pred_fallthru
        _
      // Predicated region
      $region49: #{autoencoder_forward.1} parent=11 // pred_check
        %p481 = pneg %p261
      $region50: #{autoencoder_forward.1} parent=11 // pred_check_branch
        %483 = sbr.rel (%p481) target = $region52
      $region51: #{autoencoder_forward.1} parent=11 // pred_region
        _
      $region52: #{autoencoder_forward.1} parent=11 // pred_fallthru
        _
      // Predicated region
      $region53: #{autoencoder_forward.1} parent=11 // pred_check
        %p484 = pneg %p282
      $region54: #{autoencoder_forward.1} parent=11 // pred_check_branch
        %486 = sbr.rel (%p484) target = $region56
      $region55: #{autoencoder_forward.1} parent=11 // pred_region
        _
      $region56: #{autoencoder_forward.1} parent=11 // pred_fallthru
        _
      // Predicated region
      $region57: #{autoencoder_forward.1} parent=11 // pred_check
        %p487 = pneg %p303
      $region58: #{autoencoder_forward.1} parent=11 // pred_check_branch
        %489 = sbr.rel (%p487) target = $region60
      $region59: #{autoencoder_forward.1} parent=11 // pred_region
        _
      $region60: #{autoencoder_forward.1} parent=11 // pred_fallthru
        _
      // Predicated region
      $region61: #{autoencoder_forward.1} parent=11 // pred_check
        %p490 = pneg %p324
      $region62: #{autoencoder_forward.1} parent=11 // pred_check_branch
        %492 = sbr.rel (%p490) target = $region64
      $region63: #{autoencoder_forward.1} parent=11 // pred_region
        _
      $region64: #{autoencoder_forward.1} parent=11 // pred_fallthru
        _
      // Predicated region
      $region65: #{autoencoder_forward.1} parent=11 // pred_check
        %p493 = pneg %p345
      $region66: #{autoencoder_forward.1} parent=11 // pred_check_branch
        %495 = sbr.rel (%p493) target = $region68
      $region67: #{autoencoder_forward.1} parent=11 // pred_region
        _
      $region68: #{autoencoder_forward.1} parent=11 // pred_fallthru
        _
      // Predicated region
      $region69: #{autoencoder_forward.1} parent=11 // pred_check
        %p496 = pneg %p366
      $region70: #{autoencoder_forward.1} parent=11 // pred_check_branch
        %498 = sbr.rel (%p496) target = $region72
      $region71: #{autoencoder_forward.1} parent=11 // pred_region
        _
      $region72: #{autoencoder_forward.1} parent=11 // pred_fallthru
        _
      // Predicated region
      $region73: #{autoencoder_forward.1} parent=11 // pred_check
        %p499 = pneg %p387
      $region74: #{autoencoder_forward.1} parent=11 // pred_check_branch
        %501 = sbr.rel (%p499) target = $region76
      $region75: #{autoencoder_forward.1} parent=11 // pred_region
        _
      $region76: #{autoencoder_forward.1} parent=11 // pred_fallthru
        _
    $region12: #{autoencoder_forward.1} parent=5 // pred_fallthru
      _
    %p502 = scmp.lt.s32.totalorder %s25, 8
    // Predicated region
    $region77: #{autoencoder_forward.1} parent=5 // pred_check
      %p503 = pneg %p502
    $region78: #{autoencoder_forward.1} parent=5 // pred_check_branch
      %505 = sbr.rel (%p503) target = $region80
    $region79: #{autoencoder_forward.1} parent=5 // pred_region
      // Predicated region
      $region81: #{autoencoder_forward.1} parent=79 // pred_check
        %p506 = pneg %p45
      $region82: #{autoencoder_forward.1} parent=79 // pred_check_branch
        %508 = sbr.rel (%p506) target = $region84
      $region83: #{autoencoder_forward.1} parent=79 // pred_region
        %s509 = smul.u32 8, %s25
        %p510 = scmp.lt.s32.totalorder %s509, 63
        %s511 = scalar_select %p510, %s509, 63
        %s512 = smul.addr %s511, 7
        %s513 = smul.addr %s512, 8
        %s514 = scalar_lea.vmem %s0, %s513
        %s515 = smul.u32 8, %s25
      $region84: #{autoencoder_forward.1} parent=79 // pred_fallthru
        _
    $region80: #{autoencoder_forward.1} parent=5 // pred_fallthru
      _
    %p516 = scmp.le.s32.totalorder 1, %s25
    %p517 = scmp.lt.s32.totalorder %s25, 9
    %p518 = pnand %p516, %p517
    %p519 = pneg %p518
    // Predicated region
    $region85: #{autoencoder_forward.1} parent=5 // pred_check
      _
    $region86: #{autoencoder_forward.1} parent=5 // pred_check_branch
      %521 = sbr.rel (%p518) target = $region88
    $region87: #{autoencoder_forward.1} parent=5 // pred_region
      %s522 = ssub.s32 %s25, 1
      %s523 = smul.u32 8, %s30
      %p524 = scmp.lt.s32.totalorder %s523, 63
      %s525 = scalar_select %p524, %s523, 63
      %s526 = smul.addr %s525, 7
      %s527 = smul.addr %s526, 8
      %s528 = scalar_lea.vmem %s0, %s527
      %p529 = pneg %p51
      %p530 = pneg %p48
      %p531 = pneg %p72
      %p532 = pneg %p69
      %p533 = pneg %p93
      %p534 = pneg %p90
      %p535 = pneg %p114
      %p536 = pneg %p111
      %p537 = pneg %p135
      %p538 = pneg %p132
      %p539 = pneg %p156
      %p540 = pneg %p153
      %p541 = pneg %p177
      %p542 = pneg %p174
      %p543 = pneg %p198
      %p544 = pneg %p195
      %p545 = pneg %p219
      %p546 = pneg %p216
      %p547 = pneg %p240
      %p548 = pneg %p237
      %p549 = pneg %p261
      %p550 = pneg %p258
      %p551 = pneg %p282
      %p552 = pneg %p279
      %p553 = pneg %p303
      %p554 = pneg %p300
      %p555 = pneg %p324
      %p556 = pneg %p321
      %p557 = pneg %p345
      %p558 = pneg %p342
      %p559 = pneg %p366
      %p560 = pneg %p363
      %p561 = pneg %p387
      %p562 = pneg %p384
      %p563 = pneg %p413
      %p564 = pneg %p410
      %s565 = smul.u32 8, %s30
      %p566 = scmp.lt.s32.totalorder %s565, 63
      %s567 = scalar_select %p566, %s565, 63
      %s568 = smul.addr %s567, 8
      %s569 = scalar_lea.vmem %s17, %s568
      %p570 = pneg %p439
      %p571 = pneg %p436
      %s572 = smul.u32 8, %s30
      %p573 = scmp.lt.s32.totalorder %s572, 63
      %s574 = scalar_select %p573, %s572, 63
      %s575 = smul.addr %s574, 7
      %s576 = smul.addr %s575, 8
      %s577 = scalar_lea.vmem %s18, %s576
      %s578 = smul.u32 8, %s30
      %p579 = scmp.lt.s32.totalorder %s578, 63
      %s580 = scalar_select %p579, %s578, 63
      %s581 = smul.addr %s580, 7
      %s582 = smul.addr %s581, 8
      %s583 = scalar_lea.vmem %s0, %s582
      %s584 = smul.u32 8, %s30
      %s585 = smul.u32 8, %s30
      %p586 = scmp.lt.s32.totalorder %s585, 63
      %s587 = scalar_select %p586, %s585, 63
      %s588 = smul.addr %s587, 8
      %s589 = scalar_lea.vmem %s17, %s588
      %s590 = smul.u32 8, %s30
      %s591 = smul.u32 8, %s30
      %p592 = scmp.lt.s32.totalorder %s591, 63
      %s593 = scalar_select %p592, %s591, 63
      %s594 = smul.addr %s593, 7
      %s595 = smul.addr %s594, 8
      %s596 = scalar_lea.vmem %s18, %s595
      %s597 = smul.u32 8, %s30
      %v598 = vld [vmem:[%s583] sm:$0xff]
      %v599 = vld [vmem:[%s583 + $0x8] sm:$0xff]
      %v600 = vld [vmem:[%s583 + $0x10] sm:$0xff]
      %v601 = vld [vmem:[%s583 + $0x18] sm:$0xff]
      %v602 = vld [vmem:[%s583 + $0x20] sm:$0xff]
      %v603 = vld [vmem:[%s583 + $0x28] sm:$0xff]
      %v604 = vld [vmem:[%s583 + $0x30] sm:$0xff]
      %v605 = vld [vmem:[%s583 + $0x38] sm:$0xff]
      %v606 = vld [vmem:[%s583 + $0x40] sm:$0xff]
      %v607 = vld [vmem:[%s583 + $0x48] sm:$0xff]
      %v608 = vld [vmem:[%s583 + $0x50] sm:$0xff]
      %v609 = vld [vmem:[%s583 + $0x58] sm:$0xff]
      %v610 = vld [vmem:[%s583 + $0x60] sm:$0xff]
      %v611 = vld [vmem:[%s583 + $0x68] sm:$0xff]
      %v612 = vld [vmem:[%s583 + $0x70] sm:$0xff]
      %v613 = vld [vmem:[%s583 + $0x78] sm:$0xff]
      %v614 = vld [vmem:[%s583 + $0x80] sm:$0xff]
      %v615 = vld [vmem:[%s583 + $0x88] sm:$0xff]
      %v616 = vld [vmem:[%s583 + $0x90] sm:$0xff]
      %v617 = vld [vmem:[%s583 + $0x98] sm:$0xff]
      %v618 = vld [vmem:[%s583 + $0xa0] sm:$0xff]
      %v619 = vld [vmem:[%s583 + $0xa8] sm:$0xff]
      %v620 = vld [vmem:[%s583 + $0xb0] sm:$0xff]
      %v621 = vld [vmem:[%s583 + $0xb8] sm:$0xff]
      %v622 = vld [vmem:[%s583 + $0xc0] sm:$0xff]
      %v623 = vld [vmem:[%s583 + $0xc8] sm:$0xff]
      %v624 = vld [vmem:[%s583 + $0xd0] sm:$0xff]
      %v625 = vld [vmem:[%s583 + $0xd8] sm:$0xff]
      %v626 = vld [vmem:[%s583 + $0xe0] sm:$0xff]
      %v627 = vld [vmem:[%s583 + $0xe8] sm:$0xff]
      %v628 = vld [vmem:[%s583 + $0xf0] sm:$0xff]
      %v629 = vld [vmem:[%s583 + $0xf8] sm:$0xff]
      %v630 = vld [vmem:[%s583 + $0x100] sm:$0xff]
      %v631 = vld [vmem:[%s583 + $0x108] sm:$0xff]
      %v632 = vld [vmem:[%s583 + $0x110] sm:$0xff]
      %v633 = vld [vmem:[%s583 + $0x118] sm:$0xff]
      %v634 = vld [vmem:[%s583 + $0x120] sm:$0xff]
      %v635 = vld [vmem:[%s583 + $0x128] sm:$0xff]
      %v636 = vld [vmem:[%s583 + $0x130] sm:$0xff]
      %v637 = vld [vmem:[%s583 + $0x138] sm:$0xff]
      %v638 = vld [vmem:[%s583 + $0x140] sm:$0xff]
      %v639 = vld [vmem:[%s583 + $0x148] sm:$0xff]
      %v640 = vld [vmem:[%s583 + $0x150] sm:$0xff]
      %v641 = vld [vmem:[%s583 + $0x158] sm:$0xff]
      %v642 = vld [vmem:[%s583 + $0x160] sm:$0xff]
      %v643 = vld [vmem:[%s583 + $0x168] sm:$0xff]
      %v644 = vld [vmem:[%s583 + $0x170] sm:$0xff]
      %v645 = vld [vmem:[%s583 + $0x178] sm:$0xff]
      %v646 = vld [vmem:[%s583 + $0x180] sm:$0xff]
      %v647 = vld [vmem:[%s583 + $0x188] sm:$0xff]
      %v648 = vld [vmem:[%s583 + $0x190] sm:$0xff]
      %v649 = vld [vmem:[%s583 + $0x198] sm:$0xff]
      %v650 = vld [vmem:[%s583 + $0x1a0] sm:$0xff]
      %v651 = vld [vmem:[%s583 + $0x1a8] sm:$0xff]
      %v652 = vld [vmem:[%s583 + $0x1b0] sm:$0xff]
      %v653 = vld [vmem:[%s583 + $0x1b8] sm:$0xff]
      %v654 = vld [vmem:[%s1] sm:$0xff]
      %v655 = vld [vmem:[%s1 + $0x8] sm:$0xff]
      %v656 = vld [vmem:[%s1 + $0x10] sm:$0xff]
      %v657 = vld [vmem:[%s1 + $0x18] sm:$0xff]
      %v658 = vld [vmem:[%s1 + $0x20] sm:$0xff]
      %v659 = vld [vmem:[%s1 + $0x28] sm:$0xff]
      %v660 = vld [vmem:[%s1 + $0x30] sm:$0xff]
      %v661 = vld [vmem:[%s1 + $0x38] sm:$0xff]
      %v662 = vld [vmem:[%s1 + $0x40] sm:$0xff]
      %v663 = vld [vmem:[%s1 + $0x48] sm:$0xff]
      %v664 = vld [vmem:[%s1 + $0x50] sm:$0xff]
      %v665 = vld [vmem:[%s1 + $0x58] sm:$0xff]
      %v666 = vld [vmem:[%s1 + $0x60] sm:$0xff]
      %v667 = vld [vmem:[%s1 + $0x68] sm:$0xff]
      %v668 = vld [vmem:[%s1 + $0x70] sm:$0xff]
      %v669 = vld [vmem:[%s1 + $0x78] sm:$0xff]
      %v670 = vld [vmem:[%s1 + $0x80] sm:$0xff]
      %v671 = vld [vmem:[%s1 + $0x88] sm:$0xff]
      %v672 = vld [vmem:[%s1 + $0x90] sm:$0xff]
      %v673 = vld [vmem:[%s1 + $0x98] sm:$0xff]
      %v674 = vld [vmem:[%s1 + $0xa0] sm:$0xff]
      %v675 = vld [vmem:[%s1 + $0xa8] sm:$0xff]
      %v676 = vld [vmem:[%s1 + $0xb0] sm:$0xff]
      %v677 = vld [vmem:[%s1 + $0xb8] sm:$0xff]
      %v678 = vld [vmem:[%s1 + $0xc0] sm:$0xff]
      %v679 = vld [vmem:[%s1 + $0xc8] sm:$0xff]
      %v680 = vld [vmem:[%s1 + $0xd0] sm:$0xff]
      %v681 = vld [vmem:[%s1 + $0xd8] sm:$0xff]
      %v682 = vld [vmem:[%s1 + $0xe0] sm:$0xff]
      %v683 = vld [vmem:[%s1 + $0xe8] sm:$0xff]
      %v684 = vld [vmem:[%s1 + $0xf0] sm:$0xff]
      %v685 = vld [vmem:[%s1 + $0xf8] sm:$0xff]
      %v686 = vld [vmem:[%s1 + $0x100] sm:$0xff]
      %v687 = vld [vmem:[%s1 + $0x108] sm:$0xff]
      %v688 = vld [vmem:[%s1 + $0x110] sm:$0xff]
      %v689 = vld [vmem:[%s1 + $0x118] sm:$0xff]
      %v690 = vld [vmem:[%s1 + $0x120] sm:$0xff]
      %v691 = vld [vmem:[%s1 + $0x128] sm:$0xff]
      %v692 = vld [vmem:[%s1 + $0x130] sm:$0xff]
      %v693 = vld [vmem:[%s1 + $0x138] sm:$0xff]
      %v694 = vld [vmem:[%s1 + $0x140] sm:$0xff]
      %v695 = vld [vmem:[%s1 + $0x148] sm:$0xff]
      %v696 = vld [vmem:[%s1 + $0x150] sm:$0xff]
      %v697 = vld [vmem:[%s1 + $0x158] sm:$0xff]
      %v698 = vld [vmem:[%s1 + $0x160] sm:$0xff]
      %v699 = vld [vmem:[%s1 + $0x168] sm:$0xff]
      %v700 = vld [vmem:[%s1 + $0x170] sm:$0xff]
      %v701 = vld [vmem:[%s1 + $0x178] sm:$0xff]
      %v702 = vld [vmem:[%s1 + $0x180] sm:$0xff]
      %v703 = vld [vmem:[%s1 + $0x188] sm:$0xff]
      %v704 = vld [vmem:[%s1 + $0x190] sm:$0xff]
      %v705 = vld [vmem:[%s1 + $0x198] sm:$0xff]
      %v706 = vld [vmem:[%s1 + $0x1a0] sm:$0xff]
      %v707 = vld [vmem:[%s1 + $0x1a8] sm:$0xff]
      %v708 = vld [vmem:[%s1 + $0x1b0] sm:$0xff]
      %v709 = vld [vmem:[%s1 + $0x1b8] sm:$0xff]
      %v710 = vld [vmem:[%s1 + $0x1c0] sm:$0xff]
      %v711 = vld [vmem:[%s1 + $0x1c8] sm:$0xff]
      %v712 = vld [vmem:[%s1 + $0x1d0] sm:$0xff]
      %v713 = vld [vmem:[%s1 + $0x1d8] sm:$0xff]
      %v714 = vld [vmem:[%s1 + $0x1e0] sm:$0xff]
      %v715 = vld [vmem:[%s1 + $0x1e8] sm:$0xff]
      %v716 = vld [vmem:[%s1 + $0x1f0] sm:$0xff]
      %v717 = vld [vmem:[%s1 + $0x1f8] sm:$0xff]
      %v718 = vld [vmem:[%s1 + $0x200] sm:$0xff]
      %v719 = vld [vmem:[%s1 + $0x208] sm:$0xff]
      %v720 = vld [vmem:[%s1 + $0x210] sm:$0xff]
      %v721 = vld [vmem:[%s1 + $0x218] sm:$0xff]
      %v722 = vld [vmem:[%s1 + $0x220] sm:$0xff]
      %v723 = vld [vmem:[%s1 + $0x228] sm:$0xff]
      %v724 = vld [vmem:[%s1 + $0x230] sm:$0xff]
      %v725 = vld [vmem:[%s1 + $0x238] sm:$0xff]
      %v726 = vld [vmem:[%s1 + $0x240] sm:$0xff]
      %v727 = vld [vmem:[%s1 + $0x248] sm:$0xff]
      %v728 = vld [vmem:[%s1 + $0x250] sm:$0xff]
      %v729 = vld [vmem:[%s1 + $0x258] sm:$0xff]
      %v730 = vld [vmem:[%s1 + $0x260] sm:$0xff]
      %v731 = vld [vmem:[%s1 + $0x268] sm:$0xff]
      %v732 = vld [vmem:[%s1 + $0x270] sm:$0xff]
      %v733 = vld [vmem:[%s1 + $0x278] sm:$0xff]
      %v734 = vld [vmem:[%s1 + $0x280] sm:$0xff]
      %v735 = vld [vmem:[%s1 + $0x288] sm:$0xff]
      %v736 = vld [vmem:[%s1 + $0x290] sm:$0xff]
      %v737 = vld [vmem:[%s1 + $0x298] sm:$0xff]
      %v738 = vld [vmem:[%s1 + $0x2a0] sm:$0xff]
      %v739 = vld [vmem:[%s1 + $0x2a8] sm:$0xff]
      %v740 = vld [vmem:[%s1 + $0x2b0] sm:$0xff]
      %v741 = vld [vmem:[%s1 + $0x2b8] sm:$0xff]
      %v742 = vld [vmem:[%s1 + $0x2c0] sm:$0xff]
      %v743 = vld [vmem:[%s1 + $0x2c8] sm:$0xff]
      %v744 = vld [vmem:[%s1 + $0x2d0] sm:$0xff]
      %v745 = vld [vmem:[%s1 + $0x2d8] sm:$0xff]
      %v746 = vld [vmem:[%s1 + $0x2e0] sm:$0xff]
      %v747 = vld [vmem:[%s1 + $0x2e8] sm:$0xff]
      %v748 = vld [vmem:[%s1 + $0x2f0] sm:$0xff]
      %v749 = vld [vmem:[%s1 + $0x2f8] sm:$0xff]
      %v750 = vld [vmem:[%s1 + $0x300] sm:$0xff]
      %v751 = vld [vmem:[%s1 + $0x308] sm:$0xff]
      %v752 = vld [vmem:[%s2] sm:$0x1]
      %v754 = vperm.slane %v752, 0
      %vm756 = vcmask 130048
      %v758 = vsel %vm756, %v604, 0
      %v761 = vsel %vm756, %v611, 0
      %v764 = vsel %vm756, %v618, 0
      %v767 = vsel %vm756, %v625, 0
      %v770 = vsel %vm756, %v632, 0
      %v773 = vsel %vm756, %v639, 0
      %v776 = vsel %vm756, %v646, 0
      %v779 = vsel %vm756, %v653, 0
      %781 = vmatpush.msra.mxu0 %v669
      %782 = vmatpush.msra.mxu0 %v668
      %783 = vmatpush.msra.mxu0 %v667
      %784 = vmatpush.msra.mxu0 %v666
      %785 = vmatpush.msra.mxu0 %v665
      %786 = vmatpush.msra.mxu0 %v664
      %787 = vmatpush.msra.mxu0 %v663
      %788 = vmatpush.msra.mxu0 %v662
      %789 = vmatpush.msra.mxu0 %v661
      %790 = vmatpush.msra.mxu0 %v660
      %791 = vmatpush.msra.mxu0 %v659
      %792 = vmatpush.msra.mxu0 %v658
      %793 = vmatpush.msra.mxu0 %v657
      %794 = vmatpush.msra.mxu0 %v656
      %795 = vmatpush.msra.mxu0 %v655
      %796 = vmatpush.msra.mxu0 %v654
      %797 = vmatmul.f32.gmra.mxu0 %v598
      %v798 = vpop.f32.mrf.mxu0
      %v799 = vadd.f32 %v754, %v798
      %800 = vmatmul.f32.gmra.mxu0 %v605
      %v801 = vpop.f32.mrf.mxu0
      %v802 = vadd.f32 %v754, %v801
      %803 = vmatmul.f32.gmra.mxu0 %v612
      %v804 = vpop.f32.mrf.mxu0
      %v805 = vadd.f32 %v754, %v804
      %806 = vmatmul.f32.gmra.mxu0 %v619
      %v807 = vpop.f32.mrf.mxu0
      %v808 = vadd.f32 %v754, %v807
      %809 = vmatmul.f32.gmra.mxu0 %v626
      %v810 = vpop.f32.mrf.mxu0
      %v811 = vadd.f32 %v754, %v810
      %812 = vmatmul.f32.gmra.mxu0 %v633
      %v813 = vpop.f32.mrf.mxu0
      %v814 = vadd.f32 %v754, %v813
      %815 = vmatmul.f32.gmra.mxu0 %v640
      %v816 = vpop.f32.mrf.mxu0
      %v817 = vadd.f32 %v754, %v816
      %818 = vmatmul.f32.gmra.mxu0 %v647
      %v819 = vpop.f32.mrf.mxu0
      %v820 = vadd.f32 %v754, %v819
      %821 = vdwg.mxu0
      %822 = vmatpush.msra.mxu0 %v685
      %823 = vmatpush.msra.mxu0 %v684
      %824 = vmatpush.msra.mxu0 %v683
      %825 = vmatpush.msra.mxu0 %v682
      %826 = vmatpush.msra.mxu0 %v681
      %827 = vmatpush.msra.mxu0 %v680
      %828 = vmatpush.msra.mxu0 %v679
      %829 = vmatpush.msra.mxu0 %v678
      %830 = vmatpush.msra.mxu0 %v677
      %831 = vmatpush.msra.mxu0 %v676
      %832 = vmatpush.msra.mxu0 %v675
      %833 = vmatpush.msra.mxu0 %v674
      %834 = vmatpush.msra.mxu0 %v673
      %835 = vmatpush.msra.mxu0 %v672
      %836 = vmatpush.msra.mxu0 %v671
      %837 = vmatpush.msra.mxu0 %v670
      %838 = vmatmul.f32.gmra.mxu0 %v599
      %v839 = vpop.f32.mrf.mxu0
      %v840 = vadd.f32 %v799, %v839
      %841 = vmatmul.f32.gmra.mxu0 %v606
      %v842 = vpop.f32.mrf.mxu0
      %v843 = vadd.f32 %v802, %v842
      %844 = vmatmul.f32.gmra.mxu0 %v613
      %v845 = vpop.f32.mrf.mxu0
      %v846 = vadd.f32 %v805, %v845
      %847 = vmatmul.f32.gmra.mxu0 %v620
      %v848 = vpop.f32.mrf.mxu0
      %v849 = vadd.f32 %v808, %v848
      %850 = vmatmul.f32.gmra.mxu0 %v627
      %v851 = vpop.f32.mrf.mxu0
      %v852 = vadd.f32 %v811, %v851
      %853 = vmatmul.f32.gmra.mxu0 %v634
      %v854 = vpop.f32.mrf.mxu0
      %v855 = vadd.f32 %v814, %v854
      %856 = vmatmul.f32.gmra.mxu0 %v641
      %v857 = vpop.f32.mrf.mxu0
      %v858 = vadd.f32 %v817, %v857
      %859 = vmatmul.f32.gmra.mxu0 %v648
      %v860 = vpop.f32.mrf.mxu0
      %v861 = vadd.f32 %v820, %v860
      %862 = vdwg.mxu0
      %863 = vmatpush.msra.mxu0 %v701
      %864 = vmatpush.msra.mxu0 %v700
      %865 = vmatpush.msra.mxu0 %v699
      %866 = vmatpush.msra.mxu0 %v698
      %867 = vmatpush.msra.mxu0 %v697
      %868 = vmatpush.msra.mxu0 %v696
      %869 = vmatpush.msra.mxu0 %v695
      %870 = vmatpush.msra.mxu0 %v694
      %871 = vmatpush.msra.mxu0 %v693
      %872 = vmatpush.msra.mxu0 %v692
      %873 = vmatpush.msra.mxu0 %v691
      %874 = vmatpush.msra.mxu0 %v690
      %875 = vmatpush.msra.mxu0 %v689
      %876 = vmatpush.msra.mxu0 %v688
      %877 = vmatpush.msra.mxu0 %v687
      %878 = vmatpush.msra.mxu0 %v686
      %879 = vmatmul.f32.gmra.mxu0 %v600
      %v880 = vpop.f32.mrf.mxu0
      %v881 = vadd.f32 %v840, %v880
      %882 = vmatmul.f32.gmra.mxu0 %v607
      %v883 = vpop.f32.mrf.mxu0
      %v884 = vadd.f32 %v843, %v883
      %885 = vmatmul.f32.gmra.mxu0 %v614
      %v886 = vpop.f32.mrf.mxu0
      %v887 = vadd.f32 %v846, %v886
      %888 = vmatmul.f32.gmra.mxu0 %v621
      %v889 = vpop.f32.mrf.mxu0
      %v890 = vadd.f32 %v849, %v889
      %891 = vmatmul.f32.gmra.mxu0 %v628
      %v892 = vpop.f32.mrf.mxu0
      %v893 = vadd.f32 %v852, %v892
      %894 = vmatmul.f32.gmra.mxu0 %v635
      %v895 = vpop.f32.mrf.mxu0
      %v896 = vadd.f32 %v855, %v895
      %897 = vmatmul.f32.gmra.mxu0 %v642
      %v898 = vpop.f32.mrf.mxu0
      %v899 = vadd.f32 %v858, %v898
      %900 = vmatmul.f32.gmra.mxu0 %v649
      %v901 = vpop.f32.mrf.mxu0
      %v902 = vadd.f32 %v861, %v901
      %903 = vdwg.mxu0
      %904 = vmatpush.msra.mxu0 %v717
      %905 = vmatpush.msra.mxu0 %v716
      %906 = vmatpush.msra.mxu0 %v715
      %907 = vmatpush.msra.mxu0 %v714
      %908 = vmatpush.msra.mxu0 %v713
      %909 = vmatpush.msra.mxu0 %v712
      %910 = vmatpush.msra.mxu0 %v711
      %911 = vmatpush.msra.mxu0 %v710
      %912 = vmatpush.msra.mxu0 %v709
      %913 = vmatpush.msra.mxu0 %v708
      %914 = vmatpush.msra.mxu0 %v707
      %915 = vmatpush.msra.mxu0 %v706
      %916 = vmatpush.msra.mxu0 %v705
      %917 = vmatpush.msra.mxu0 %v704
      %918 = vmatpush.msra.mxu0 %v703
      %919 = vmatpush.msra.mxu0 %v702
      %920 = vmatmul.f32.gmra.mxu0 %v601
      %v921 = vpop.f32.mrf.mxu0
      %v922 = vadd.f32 %v881, %v921
      %923 = vmatmul.f32.gmra.mxu0 %v608
      %v924 = vpop.f32.mrf.mxu0
      %v925 = vadd.f32 %v884, %v924
      %926 = vmatmul.f32.gmra.mxu0 %v615
      %v927 = vpop.f32.mrf.mxu0
      %v928 = vadd.f32 %v887, %v927
      %929 = vmatmul.f32.gmra.mxu0 %v622
      %v930 = vpop.f32.mrf.mxu0
      %v931 = vadd.f32 %v890, %v930
      %932 = vmatmul.f32.gmra.mxu0 %v629
      %v933 = vpop.f32.mrf.mxu0
      %v934 = vadd.f32 %v893, %v933
      %935 = vmatmul.f32.gmra.mxu0 %v636
      %v936 = vpop.f32.mrf.mxu0
      %v937 = vadd.f32 %v896, %v936
      %938 = vmatmul.f32.gmra.mxu0 %v643
      %v939 = vpop.f32.mrf.mxu0
      %v940 = vadd.f32 %v899, %v939
      %941 = vmatmul.f32.gmra.mxu0 %v650
      %v942 = vpop.f32.mrf.mxu0
      %v943 = vadd.f32 %v902, %v942
      %944 = vdwg.mxu0
      %945 = vmatpush.msra.mxu0 %v733
      %946 = vmatpush.msra.mxu0 %v732
      %947 = vmatpush.msra.mxu0 %v731
      %948 = vmatpush.msra.mxu0 %v730
      %949 = vmatpush.msra.mxu0 %v729
      %950 = vmatpush.msra.mxu0 %v728
      %951 = vmatpush.msra.mxu0 %v727
      %952 = vmatpush.msra.mxu0 %v726
      %953 = vmatpush.msra.mxu0 %v725
      %954 = vmatpush.msra.mxu0 %v724
      %955 = vmatpush.msra.mxu0 %v723
      %956 = vmatpush.msra.mxu0 %v722
      %957 = vmatpush.msra.mxu0 %v721
      %958 = vmatpush.msra.mxu0 %v720
      %959 = vmatpush.msra.mxu0 %v719
      %960 = vmatpush.msra.mxu0 %v718
      %961 = vmatmul.f32.gmra.mxu0 %v602
      %v962 = vpop.f32.mrf.mxu0
      %v963 = vadd.f32 %v922, %v962
      %964 = vmatmul.f32.gmra.mxu0 %v609
      %v965 = vpop.f32.mrf.mxu0
      %v966 = vadd.f32 %v925, %v965
      %967 = vmatmul.f32.gmra.mxu0 %v616
      %v968 = vpop.f32.mrf.mxu0
      %v969 = vadd.f32 %v928, %v968
      %970 = vmatmul.f32.gmra.mxu0 %v623
      %v971 = vpop.f32.mrf.mxu0
      %v972 = vadd.f32 %v931, %v971
      %973 = vmatmul.f32.gmra.mxu0 %v630
      %v974 = vpop.f32.mrf.mxu0
      %v975 = vadd.f32 %v934, %v974
      %976 = vmatmul.f32.gmra.mxu0 %v637
      %v977 = vpop.f32.mrf.mxu0
      %v978 = vadd.f32 %v937, %v977
      %979 = vmatmul.f32.gmra.mxu0 %v644
      %v980 = vpop.f32.mrf.mxu0
      %v981 = vadd.f32 %v940, %v980
      %982 = vmatmul.f32.gmra.mxu0 %v651
      %v983 = vpop.f32.mrf.mxu0
      %v984 = vadd.f32 %v943, %v983
      %985 = vdwg.mxu0
      %986 = vmatpush.msra.mxu0 %v749
      %987 = vmatpush.msra.mxu0 %v748
      %988 = vmatpush.msra.mxu0 %v747
      %989 = vmatpush.msra.mxu0 %v746
      %990 = vmatpush.msra.mxu0 %v745
      %991 = vmatpush.msra.mxu0 %v744
      %992 = vmatpush.msra.mxu0 %v743
      %993 = vmatpush.msra.mxu0 %v742
      %994 = vmatpush.msra.mxu0 %v741
      %995 = vmatpush.msra.mxu0 %v740
      %996 = vmatpush.msra.mxu0 %v739
      %997 = vmatpush.msra.mxu0 %v738
      %998 = vmatpush.msra.mxu0 %v737
      %999 = vmatpush.msra.mxu0 %v736
      %1000 = vmatpush.msra.mxu0 %v735
      %1001 = vmatpush.msra.mxu0 %v734
      %1002 = vmatmul.f32.gmra.mxu0 %v603
      %v1003 = vpop.f32.mrf.mxu0
      %v1004 = vadd.f32 %v963, %v1003
      %1005 = vmatmul.f32.gmra.mxu0 %v610
      %v1006 = vpop.f32.mrf.mxu0
      %v1007 = vadd.f32 %v966, %v1006
      %1008 = vmatmul.f32.gmra.mxu0 %v617
      %v1009 = vpop.f32.mrf.mxu0
      %v1010 = vadd.f32 %v969, %v1009
      %1011 = vmatmul.f32.gmra.mxu0 %v624
      %v1012 = vpop.f32.mrf.mxu0
      %v1013 = vadd.f32 %v972, %v1012
      %1014 = vmatmul.f32.gmra.mxu0 %v631
      %v1015 = vpop.f32.mrf.mxu0
      %v1016 = vadd.f32 %v975, %v1015
      %1017 = vmatmul.f32.gmra.mxu0 %v638
      %v1018 = vpop.f32.mrf.mxu0
      %v1019 = vadd.f32 %v978, %v1018
      %1020 = vmatmul.f32.gmra.mxu0 %v645
      %v1021 = vpop.f32.mrf.mxu0
      %v1022 = vadd.f32 %v981, %v1021
      %1023 = vmatmul.f32.gmra.mxu0 %v652
      %v1024 = vpop.f32.mrf.mxu0
      %v1025 = vadd.f32 %v984, %v1024
      %1026 = vdwg.mxu0
      %1027 = vmatpush.msra.mxu0 0.0
      %1028 = vmatpush.msra.mxu0 0.0
      %1029 = vmatpush.msra.mxu0 0.0
      %1030 = vmatpush.msra.mxu0 0.0
      %1031 = vmatpush.msra.mxu0 0.0
      %1032 = vmatpush.msra.mxu0 0.0
      %1033 = vmatpush.msra.mxu0 0.0
      %1034 = vmatpush.msra.mxu0 0.0
      %1035 = vmatpush.msra.mxu0 0.0
      %1036 = vmatpush.msra.mxu0 0.0
      %1037 = vmatpush.msra.mxu0 0.0
      %1038 = vmatpush.msra.mxu0 0.0
      %1039 = vmatpush.msra.mxu0 0.0
      %1040 = vmatpush.msra.mxu0 0.0
      %1041 = vmatpush.msra.mxu0 %v751
      %1042 = vmatpush.msra.mxu0 %v750
      %1043 = vmatmul.f32.gmra.mxu0 %v758
      %v1044 = vpop.f32.mrf.mxu0
      %v1045 = vadd.f32 %v1004, %v1044
      %1046 = vmatmul.f32.gmra.mxu0 %v761
      %v1047 = vpop.f32.mrf.mxu0
      %v1048 = vadd.f32 %v1007, %v1047
      %1049 = vmatmul.f32.gmra.mxu0 %v764
      %v1050 = vpop.f32.mrf.mxu0
      %v1051 = vadd.f32 %v1010, %v1050
      %1052 = vmatmul.f32.gmra.mxu0 %v767
      %v1053 = vpop.f32.mrf.mxu0
      %v1054 = vadd.f32 %v1013, %v1053
      %1055 = vmatmul.f32.gmra.mxu0 %v770
      %v1056 = vpop.f32.mrf.mxu0
      %v1057 = vadd.f32 %v1016, %v1056
      %1058 = vmatmul.f32.gmra.mxu0 %v773
      %v1059 = vpop.f32.mrf.mxu0
      %v1060 = vadd.f32 %v1019, %v1059
      %1061 = vmatmul.f32.gmra.mxu0 %v776
      %v1062 = vpop.f32.mrf.mxu0
      %v1063 = vadd.f32 %v1022, %v1062
      %1064 = vmatmul.f32.gmra.mxu0 %v779
      %v1065 = vpop.f32.mrf.mxu0
      %v1066 = vadd.f32 %v1025, %v1065
      %1067 = vdwg.mxu0
      %v1068 = vtanh.pop %v1045
      %v1069 = vtanh.pop %v1048
      %v1070 = vtanh.pop %v1051
      %v1071 = vtanh.pop %v1054
      %v1072 = vtanh.pop %v1057
      %v1073 = vtanh.pop %v1060
      %v1074 = vtanh.pop %v1063
      %v1075 = vtanh.pop %v1066
      %v1076 = vld [vmem:[%s3] sm:$0xff]
      %v1077 = vld [vmem:[%s3 + $0x8] sm:$0xff]
      %v1078 = vld [vmem:[%s3 + $0x10] sm:$0xff]
      %v1079 = vld [vmem:[%s3 + $0x18] sm:$0xff]
      %v1080 = vld [vmem:[%s3 + $0x20] sm:$0xff]
      %v1081 = vld [vmem:[%s3 + $0x28] sm:$0xff]
      %v1082 = vld [vmem:[%s3 + $0x30] sm:$0xff]
      %v1083 = vld [vmem:[%s3 + $0x38] sm:$0xff]
      %v1084 = vld [vmem:[%s3 + $0x40] sm:$0xff]
      %v1085 = vld [vmem:[%s3 + $0x48] sm:$0xff]
      %v1086 = vld [vmem:[%s3 + $0x50] sm:$0xff]
      %v1087 = vld [vmem:[%s3 + $0x58] sm:$0xff]
      %v1088 = vld [vmem:[%s3 + $0x60] sm:$0xff]
      %v1089 = vld [vmem:[%s3 + $0x68] sm:$0xff]
      %v1090 = vld [vmem:[%s3 + $0x70] sm:$0xff]
      %v1091 = vld [vmem:[%s3 + $0x78] sm:$0xff]
      %v1092 = vld [vmem:[%s4] sm:$0x1]
      %v1094 = vperm.slane %v1092, 0
      %1096 = vmatpush.msra.mxu0 %v1091
      %1097 = vmatpush.msra.mxu0 %v1090
      %1098 = vmatpush.msra.mxu0 %v1089
      %1099 = vmatpush.msra.mxu0 %v1088
      %1100 = vmatpush.msra.mxu0 %v1087
      %1101 = vmatpush.msra.mxu0 %v1086
      %1102 = vmatpush.msra.mxu0 %v1085
      %1103 = vmatpush.msra.mxu0 %v1084
      %1104 = vmatpush.msra.mxu0 %v1083
      %1105 = vmatpush.msra.mxu0 %v1082
      %1106 = vmatpush.msra.mxu0 %v1081
      %1107 = vmatpush.msra.mxu0 %v1080
      %1108 = vmatpush.msra.mxu0 %v1079
      %1109 = vmatpush.msra.mxu0 %v1078
      %1110 = vmatpush.msra.mxu0 %v1077
      %1111 = vmatpush.msra.mxu0 %v1076
      %1112 = vmatmul.f32.gmra.mxu0 %v1068
      %v1113 = vpop.f32.mrf.mxu0
      %v1114 = vadd.f32 %v1094, %v1113
      %1115 = vmatmul.f32.gmra.mxu0 %v1069
      %v1116 = vpop.f32.mrf.mxu0
      %v1117 = vadd.f32 %v1094, %v1116
      %1118 = vmatmul.f32.gmra.mxu0 %v1070
      %v1119 = vpop.f32.mrf.mxu0
      %v1120 = vadd.f32 %v1094, %v1119
      %1121 = vmatmul.f32.gmra.mxu0 %v1071
      %v1122 = vpop.f32.mrf.mxu0
      %v1123 = vadd.f32 %v1094, %v1122
      %1124 = vmatmul.f32.gmra.mxu0 %v1072
      %v1125 = vpop.f32.mrf.mxu0
      %v1126 = vadd.f32 %v1094, %v1125
      %1127 = vmatmul.f32.gmra.mxu0 %v1073
      %v1128 = vpop.f32.mrf.mxu0
      %v1129 = vadd.f32 %v1094, %v1128
      %1130 = vmatmul.f32.gmra.mxu0 %v1074
      %v1131 = vpop.f32.mrf.mxu0
      %v1132 = vadd.f32 %v1094, %v1131
      %1133 = vmatmul.f32.gmra.mxu0 %v1075
      %v1134 = vpop.f32.mrf.mxu0
      %v1135 = vadd.f32 %v1094, %v1134
      %1136 = vdwg.mxu0
      %v1137 = vtanh.pop %v1114
      %v1138 = vtanh.pop %v1117
      %v1139 = vtanh.pop %v1120
      %v1140 = vtanh.pop %v1123
      %v1141 = vtanh.pop %v1126
      %v1142 = vtanh.pop %v1129
      %v1143 = vtanh.pop %v1132
      %v1144 = vtanh.pop %v1135
      %v1145 = vld [vmem:[%s5] sm:$0xff]
      %v1146 = vld [vmem:[%s5 + $0x8] sm:$0xff]
      %v1147 = vld [vmem:[%s5 + $0x10] sm:$0xff]
      %v1148 = vld [vmem:[%s5 + $0x18] sm:$0xff]
      %v1149 = vld [vmem:[%s5 + $0x20] sm:$0xff]
      %v1150 = vld [vmem:[%s5 + $0x28] sm:$0xff]
      %v1151 = vld [vmem:[%s5 + $0x30] sm:$0xff]
      %v1152 = vld [vmem:[%s5 + $0x38] sm:$0xff]
      %v1153 = vld [vmem:[%s6] sm:$0x1]
      %v1155 = vperm.slane %v1153, 0
      %vm1157 = vcmask 523264
      %v1159 = vsel %vm1157, %v1137, 0
      %v1162 = vsel %vm1157, %v1138, 0
      %v1165 = vsel %vm1157, %v1139, 0
      %v1168 = vsel %vm1157, %v1140, 0
      %v1171 = vsel %vm1157, %v1141, 0
      %v1174 = vsel %vm1157, %v1142, 0
      %v1177 = vsel %vm1157, %v1143, 0
      %v1180 = vsel %vm1157, %v1144, 0
      %1182 = vmatpush.msra.mxu0 0.0
      %1183 = vmatpush.msra.mxu0 0.0
      %1184 = vmatpush.msra.mxu0 0.0
      %1185 = vmatpush.msra.mxu0 0.0
      %1186 = vmatpush.msra.mxu0 0.0
      %1187 = vmatpush.msra.mxu0 0.0
      %1188 = vmatpush.msra.mxu0 0.0
      %1189 = vmatpush.msra.mxu0 0.0
      %1190 = vmatpush.msra.mxu0 %v1152
      %1191 = vmatpush.msra.mxu0 %v1151
      %1192 = vmatpush.msra.mxu0 %v1150
      %1193 = vmatpush.msra.mxu0 %v1149
      %1194 = vmatpush.msra.mxu0 %v1148
      %1195 = vmatpush.msra.mxu0 %v1147
      %1196 = vmatpush.msra.mxu0 %v1146
      %1197 = vmatpush.msra.mxu0 %v1145
      %1198 = vmatmul.f32.gmra.mxu0 %v1159
      %v1199 = vpop.f32.mrf.mxu0
      %v1200 = vadd.f32 %v1155, %v1199
      %1201 = vmatmul.f32.gmra.mxu0 %v1162
      %v1202 = vpop.f32.mrf.mxu0
      %v1203 = vadd.f32 %v1155, %v1202
      %1204 = vmatmul.f32.gmra.mxu0 %v1165
      %v1205 = vpop.f32.mrf.mxu0
      %v1206 = vadd.f32 %v1155, %v1205
      %1207 = vmatmul.f32.gmra.mxu0 %v1168
      %v1208 = vpop.f32.mrf.mxu0
      %v1209 = vadd.f32 %v1155, %v1208
      %1210 = vmatmul.f32.gmra.mxu0 %v1171
      %v1211 = vpop.f32.mrf.mxu0
      %v1212 = vadd.f32 %v1155, %v1211
      %1213 = vmatmul.f32.gmra.mxu0 %v1174
      %v1214 = vpop.f32.mrf.mxu0
      %v1215 = vadd.f32 %v1155, %v1214
      %1216 = vmatmul.f32.gmra.mxu0 %v1177
      %v1217 = vpop.f32.mrf.mxu0
      %v1218 = vadd.f32 %v1155, %v1217
      %1219 = vmatmul.f32.gmra.mxu0 %v1180
      %v1220 = vpop.f32.mrf.mxu0
      %v1221 = vadd.f32 %v1155, %v1220
      %1222 = vdwg.mxu0
      %v1223 = vtanh.pop %v1200
      %v1224 = vtanh.pop %v1203
      %v1225 = vtanh.pop %v1206
      %v1226 = vtanh.pop %v1209
      %v1227 = vtanh.pop %v1212
      %v1228 = vtanh.pop %v1215
      %v1229 = vtanh.pop %v1218
      %v1230 = vtanh.pop %v1221
      %v1231 = vld [vmem:[%s7] sm:$0xff]
      %v1232 = vld [vmem:[%s7 + $0x8] sm:$0xf]
      %v1233 = vld [vmem:[%s8] sm:$0x1]
      %v1235 = vperm.slane %v1233, 0
      %vm1237 = vcmask 97280
      %v1239 = vsel %vm1237, %v1223, 0
      %v1242 = vsel %vm1237, %v1224, 0
      %v1245 = vsel %vm1237, %v1225, 0
      %v1248 = vsel %vm1237, %v1226, 0
      %v1251 = vsel %vm1237, %v1227, 0
      %v1254 = vsel %vm1237, %v1228, 0
      %v1257 = vsel %vm1237, %v1229, 0
      %v1260 = vsel %vm1237, %v1230, 0
      %vm1262 = vcmask 1043456
      %v1264 = vsel %vm1262, %v1232, 0
      %1266 = vmatpush.msra.mxu0 0.0
      %1267 = vmatpush.msra.mxu0 0.0
      %1268 = vmatpush.msra.mxu0 0.0
      %1269 = vmatpush.msra.mxu0 0.0
      %1270 = vmatpush.msra.mxu0 0.0
      %1271 = vmatpush.msra.mxu0 0.0
      %1272 = vmatpush.msra.mxu0 0.0
      %1273 = vmatpush.msra.mxu0 0.0
      %1274 = vmatpush.msra.mxu0 0.0
      %1275 = vmatpush.msra.mxu0 0.0
      %1276 = vmatpush.msra.mxu0 0.0
      %1277 = vmatpush.msra.mxu0 0.0
      %1278 = vmatpush.msra.mxu0 0.0
      %1279 = vmatpush.msra.mxu0 0.0
      %1280 = vmatpush.msra.mxu0 %v1264
      %1281 = vmatpush.msra.mxu0 %v1231
      %1282 = vmatmul.f32.gmra.mxu0 %v1239
      %v1283 = vpop.f32.mrf.mxu0
      %v1284 = vadd.f32 %v1235, %v1283
      %1285 = vmatmul.f32.gmra.mxu0 %v1242
      %v1286 = vpop.f32.mrf.mxu0
      %v1287 = vadd.f32 %v1235, %v1286
      %1288 = vmatmul.f32.gmra.mxu0 %v1245
      %v1289 = vpop.f32.mrf.mxu0
      %v1290 = vadd.f32 %v1235, %v1289
      %1291 = vmatmul.f32.gmra.mxu0 %v1248
      %v1292 = vpop.f32.mrf.mxu0
      %v1293 = vadd.f32 %v1235, %v1292
      %1294 = vmatmul.f32.gmra.mxu0 %v1251
      %v1295 = vpop.f32.mrf.mxu0
      %v1296 = vadd.f32 %v1235, %v1295
      %1297 = vmatmul.f32.gmra.mxu0 %v1254
      %v1298 = vpop.f32.mrf.mxu0
      %v1299 = vadd.f32 %v1235, %v1298
      %1300 = vmatmul.f32.gmra.mxu0 %v1257
      %v1301 = vpop.f32.mrf.mxu0
      %v1302 = vadd.f32 %v1235, %v1301
      %1303 = vmatmul.f32.gmra.mxu0 %v1260
      %v1304 = vpop.f32.mrf.mxu0
      %v1305 = vadd.f32 %v1235, %v1304
      %1306 = vdwg.mxu0
      %vm1307 = vcmask 23552
      %1308 = vst.msk [vmem:[%s589] sm:$0xff] %vm1307, %v1284
      %1309 = vst.msk [vmem:[%s589 + $0x8] sm:$0xff] %vm1307, %v1287
      %1310 = vst.msk [vmem:[%s589 + $0x10] sm:$0xff] %vm1307, %v1290
      %1311 = vst.msk [vmem:[%s589 + $0x18] sm:$0xff] %vm1307, %v1293
      %1312 = vst.msk [vmem:[%s589 + $0x20] sm:$0xff] %vm1307, %v1296
      %1313 = vst.msk [vmem:[%s589 + $0x28] sm:$0xff] %vm1307, %v1299
      %1314 = vst.msk [vmem:[%s589 + $0x30] sm:$0xff] %vm1307, %v1302
      %1315 = vst.msk [vmem:[%s589 + $0x38] sm:$0xff] %vm1307, %v1305
      %v1316 = vld [vmem:[%s9] sm:$0x7]
      %v1317 = vld [vmem:[%s10] sm:$0x1]
      %v1319 = vperm.slane %v1317, 0
      %v1322 = vsel %vm1307, %v1284, 0
      %v1325 = vsel %vm1307, %v1287, 0
      %v1328 = vsel %vm1307, %v1290, 0
      %v1331 = vsel %vm1307, %v1293, 0
      %v1334 = vsel %vm1307, %v1296, 0
      %v1337 = vsel %vm1307, %v1299, 0
      %v1340 = vsel %vm1307, %v1302, 0
      %v1343 = vsel %vm1307, %v1305, 0
      %vm1345 = vcmask 1042432
      %v1347 = vsel %vm1345, %v1316, 0
      %1349 = vmatpush.msra.mxu0 0.0
      %1350 = vmatpush.msra.mxu0 0.0
      %1351 = vmatpush.msra.mxu0 0.0
      %1352 = vmatpush.msra.mxu0 0.0
      %1353 = vmatpush.msra.mxu0 0.0
      %1354 = vmatpush.msra.mxu0 0.0
      %1355 = vmatpush.msra.mxu0 0.0
      %1356 = vmatpush.msra.mxu0 0.0
      %1357 = vmatpush.msra.mxu0 0.0
      %1358 = vmatpush.msra.mxu0 0.0
      %1359 = vmatpush.msra.mxu0 0.0
      %1360 = vmatpush.msra.mxu0 0.0
      %1361 = vmatpush.msra.mxu0 0.0
      %1362 = vmatpush.msra.mxu0 0.0
      %1363 = vmatpush.msra.mxu0 0.0
      %1364 = vmatpush.msra.mxu0 %v1347
      %1365 = vmatmul.f32.gmra.mxu0 %v1322
      %v1366 = vpop.f32.mrf.mxu0
      %v1367 = vadd.f32 %v1319, %v1366
      %1368 = vmatmul.f32.gmra.mxu0 %v1325
      %v1369 = vpop.f32.mrf.mxu0
      %v1370 = vadd.f32 %v1319, %v1369
      %1371 = vmatmul.f32.gmra.mxu0 %v1328
      %v1372 = vpop.f32.mrf.mxu0
      %v1373 = vadd.f32 %v1319, %v1372
      %1374 = vmatmul.f32.gmra.mxu0 %v1331
      %v1375 = vpop.f32.mrf.mxu0
      %v1376 = vadd.f32 %v1319, %v1375
      %1377 = vmatmul.f32.gmra.mxu0 %v1334
      %v1378 = vpop.f32.mrf.mxu0
      %v1379 = vadd.f32 %v1319, %v1378
      %1380 = vmatmul.f32.gmra.mxu0 %v1337
      %v1381 = vpop.f32.mrf.mxu0
      %v1382 = vadd.f32 %v1319, %v1381
      %1383 = vmatmul.f32.gmra.mxu0 %v1340
      %v1384 = vpop.f32.mrf.mxu0
      %v1385 = vadd.f32 %v1319, %v1384
      %1386 = vmatmul.f32.gmra.mxu0 %v1343
      %v1387 = vpop.f32.mrf.mxu0
      %v1388 = vadd.f32 %v1319, %v1387
      %1389 = vdwg.mxu0
      %v1390 = vtanh.pop %v1367
      %v1391 = vtanh.pop %v1370
      %v1392 = vtanh.pop %v1373
      %v1393 = vtanh.pop %v1376
      %v1394 = vtanh.pop %v1379
      %v1395 = vtanh.pop %v1382
      %v1396 = vtanh.pop %v1385
      %v1397 = vtanh.pop %v1388
      %v1398 = vld [vmem:[%s11] sm:$0xff]
      %v1399 = vld [vmem:[%s11 + $0x8] sm:$0xf]
      %v1400 = vld [vmem:[%s12] sm:$0x1]
      %v1402 = vperm.slane %v1400, 0
      %v1405 = vsel %vm1237, %v1390, 0
      %v1408 = vsel %vm1237, %v1391, 0
      %v1411 = vsel %vm1237, %v1392, 0
      %v1414 = vsel %vm1237, %v1393, 0
      %v1417 = vsel %vm1237, %v1394, 0
      %v1420 = vsel %vm1237, %v1395, 0
      %v1423 = vsel %vm1237, %v1396, 0
      %v1426 = vsel %vm1237, %v1397, 0
      %v1429 = vsel %vm1262, %v1399, 0
      %1431 = vmatpush.msra.mxu0 0.0
      %1432 = vmatpush.msra.mxu0 0.0
      %1433 = vmatpush.msra.mxu0 0.0
      %1434 = vmatpush.msra.mxu0 0.0
      %1435 = vmatpush.msra.mxu0 0.0
      %1436 = vmatpush.msra.mxu0 0.0
      %1437 = vmatpush.msra.mxu0 0.0
      %1438 = vmatpush.msra.mxu0 0.0
      %1439 = vmatpush.msra.mxu0 0.0
      %1440 = vmatpush.msra.mxu0 0.0
      %1441 = vmatpush.msra.mxu0 0.0
      %1442 = vmatpush.msra.mxu0 0.0
      %1443 = vmatpush.msra.mxu0 0.0
      %1444 = vmatpush.msra.mxu0 0.0
      %1445 = vmatpush.msra.mxu0 %v1429
      %1446 = vmatpush.msra.mxu0 %v1398
      %1447 = vmatmul.f32.gmra.mxu0 %v1405
      %v1448 = vpop.f32.mrf.mxu0
      %v1449 = vadd.f32 %v1402, %v1448
      %1450 = vmatmul.f32.gmra.mxu0 %v1408
      %v1451 = vpop.f32.mrf.mxu0
      %v1452 = vadd.f32 %v1402, %v1451
      %1453 = vmatmul.f32.gmra.mxu0 %v1411
      %v1454 = vpop.f32.mrf.mxu0
      %v1455 = vadd.f32 %v1402, %v1454
      %1456 = vmatmul.f32.gmra.mxu0 %v1414
      %v1457 = vpop.f32.mrf.mxu0
      %v1458 = vadd.f32 %v1402, %v1457
      %1459 = vmatmul.f32.gmra.mxu0 %v1417
      %v1460 = vpop.f32.mrf.mxu0
      %v1461 = vadd.f32 %v1402, %v1460
      %1462 = vmatmul.f32.gmra.mxu0 %v1420
      %v1463 = vpop.f32.mrf.mxu0
      %v1464 = vadd.f32 %v1402, %v1463
      %1465 = vmatmul.f32.gmra.mxu0 %v1423
      %v1466 = vpop.f32.mrf.mxu0
      %v1467 = vadd.f32 %v1402, %v1466
      %1468 = vmatmul.f32.gmra.mxu0 %v1426
      %v1469 = vpop.f32.mrf.mxu0
      %v1470 = vadd.f32 %v1402, %v1469
      %1471 = vdwg.mxu0
      %v1472 = vtanh.pop %v1449
      %v1473 = vtanh.pop %v1452
      %v1474 = vtanh.pop %v1455
      %v1475 = vtanh.pop %v1458
      %v1476 = vtanh.pop %v1461
      %v1477 = vtanh.pop %v1464
      %v1478 = vtanh.pop %v1467
      %v1479 = vtanh.pop %v1470
      %v1480 = vld [vmem:[%s13] sm:$0xff]
      %v1481 = vld [vmem:[%s13 + $0x8] sm:$0xff]
      %v1482 = vld [vmem:[%s13 + $0x10] sm:$0xff]
      %v1483 = vld [vmem:[%s13 + $0x18] sm:$0xff]
      %v1484 = vld [vmem:[%s13 + $0x20] sm:$0xff]
      %v1485 = vld [vmem:[%s13 + $0x28] sm:$0xff]
      %v1486 = vld [vmem:[%s13 + $0x30] sm:$0xff]
      %v1487 = vld [vmem:[%s13 + $0x38] sm:$0xff]
      %v1488 = vld [vmem:[%s14] sm:$0x1]
      %v1490 = vperm.slane %v1488, 0
      %v1493 = vsel %vm1157, %v1472, 0
      %v1496 = vsel %vm1157, %v1473, 0
      %v1499 = vsel %vm1157, %v1474, 0
      %v1502 = vsel %vm1157, %v1475, 0
      %v1505 = vsel %vm1157, %v1476, 0
      %v1508 = vsel %vm1157, %v1477, 0
      %v1511 = vsel %vm1157, %v1478, 0
      %v1514 = vsel %vm1157, %v1479, 0
      %1516 = vmatpush.msra.mxu0 0.0
      %1517 = vmatpush.msra.mxu0 0.0
      %1518 = vmatpush.msra.mxu0 0.0
      %1519 = vmatpush.msra.mxu0 0.0
      %1520 = vmatpush.msra.mxu0 0.0
      %1521 = vmatpush.msra.mxu0 0.0
      %1522 = vmatpush.msra.mxu0 0.0
      %1523 = vmatpush.msra.mxu0 0.0
      %1524 = vmatpush.msra.mxu0 %v1487
      %1525 = vmatpush.msra.mxu0 %v1486
      %1526 = vmatpush.msra.mxu0 %v1485
      %1527 = vmatpush.msra.mxu0 %v1484
      %1528 = vmatpush.msra.mxu0 %v1483
      %1529 = vmatpush.msra.mxu0 %v1482
      %1530 = vmatpush.msra.mxu0 %v1481
      %1531 = vmatpush.msra.mxu0 %v1480
      %1532 = vmatmul.f32.gmra.mxu0 %v1493
      %v1533 = vpop.f32.mrf.mxu0
      %v1534 = vadd.f32 %v1490, %v1533
      %1535 = vmatmul.f32.gmra.mxu0 %v1496
      %v1536 = vpop.f32.mrf.mxu0
      %v1537 = vadd.f32 %v1490, %v1536
      %1538 = vmatmul.f32.gmra.mxu0 %v1499
      %v1539 = vpop.f32.mrf.mxu0
      %v1540 = vadd.f32 %v1490, %v1539
      %1541 = vmatmul.f32.gmra.mxu0 %v1502
      %v1542 = vpop.f32.mrf.mxu0
      %v1543 = vadd.f32 %v1490, %v1542
      %1544 = vmatmul.f32.gmra.mxu0 %v1505
      %v1545 = vpop.f32.mrf.mxu0
      %v1546 = vadd.f32 %v1490, %v1545
      %1547 = vmatmul.f32.gmra.mxu0 %v1508
      %v1548 = vpop.f32.mrf.mxu0
      %v1549 = vadd.f32 %v1490, %v1548
      %1550 = vmatmul.f32.gmra.mxu0 %v1511
      %v1551 = vpop.f32.mrf.mxu0
      %v1552 = vadd.f32 %v1490, %v1551
      %1553 = vmatmul.f32.gmra.mxu0 %v1514
      %v1554 = vpop.f32.mrf.mxu0
      %v1555 = vadd.f32 %v1490, %v1554
      %1556 = vdwg.mxu0
      %v1557 = vtanh.pop %v1534
      %v1558 = vtanh.pop %v1537
      %v1559 = vtanh.pop %v1540
      %v1560 = vtanh.pop %v1543
      %v1561 = vtanh.pop %v1546
      %v1562 = vtanh.pop %v1549
      %v1563 = vtanh.pop %v1552
      %v1564 = vtanh.pop %v1555
      %v1565 = vld [vmem:[%s15] sm:$0xff]
      %v1566 = vld [vmem:[%s15 + $0x8] sm:$0xff]
      %v1567 = vld [vmem:[%s15 + $0x10] sm:$0xff]
      %v1568 = vld [vmem:[%s15 + $0x18] sm:$0xff]
      %v1569 = vld [vmem:[%s15 + $0x20] sm:$0xff]
      %v1570 = vld [vmem:[%s15 + $0x28] sm:$0xff]
      %v1571 = vld [vmem:[%s15 + $0x30] sm:$0xff]
      %v1572 = vld [vmem:[%s15 + $0x38] sm:$0xff]
      %v1573 = vld [vmem:[%s15 + $0x40] sm:$0xff]
      %v1574 = vld [vmem:[%s15 + $0x48] sm:$0xff]
      %v1575 = vld [vmem:[%s15 + $0x50] sm:$0xff]
      %v1576 = vld [vmem:[%s15 + $0x58] sm:$0xff]
      %v1577 = vld [vmem:[%s15 + $0x60] sm:$0xff]
      %v1578 = vld [vmem:[%s15 + $0x68] sm:$0xff]
      %v1579 = vld [vmem:[%s15 + $0x70] sm:$0xff]
      %v1580 = vld [vmem:[%s15 + $0x78] sm:$0xff]
      %v1581 = vld [vmem:[%s15 + $0x80] sm:$0xff]
      %v1582 = vld [vmem:[%s15 + $0x88] sm:$0xff]
      %v1583 = vld [vmem:[%s15 + $0x90] sm:$0xff]
      %v1584 = vld [vmem:[%s15 + $0x98] sm:$0xff]
      %v1585 = vld [vmem:[%s15 + $0xa0] sm:$0xff]
      %v1586 = vld [vmem:[%s15 + $0xa8] sm:$0xff]
      %v1587 = vld [vmem:[%s15 + $0xb0] sm:$0xff]
      %v1588 = vld [vmem:[%s15 + $0xb8] sm:$0xff]
      %v1589 = vld [vmem:[%s15 + $0xc0] sm:$0xff]
      %v1590 = vld [vmem:[%s15 + $0xc8] sm:$0xff]
      %v1591 = vld [vmem:[%s15 + $0xd0] sm:$0xff]
      %v1592 = vld [vmem:[%s15 + $0xd8] sm:$0xff]
      %v1593 = vld [vmem:[%s15 + $0xe0] sm:$0xff]
      %v1594 = vld [vmem:[%s15 + $0xe8] sm:$0xff]
      %v1595 = vld [vmem:[%s15 + $0xf0] sm:$0xff]
      %v1596 = vld [vmem:[%s15 + $0xf8] sm:$0xff]
      %v1597 = vld [vmem:[%s15 + $0x100] sm:$0xff]
      %v1598 = vld [vmem:[%s15 + $0x108] sm:$0xff]
      %v1599 = vld [vmem:[%s15 + $0x110] sm:$0xff]
      %v1600 = vld [vmem:[%s15 + $0x118] sm:$0xff]
      %v1601 = vld [vmem:[%s15 + $0x120] sm:$0xff]
      %v1602 = vld [vmem:[%s15 + $0x128] sm:$0xff]
      %v1603 = vld [vmem:[%s15 + $0x130] sm:$0xff]
      %v1604 = vld [vmem:[%s15 + $0x138] sm:$0xff]
      %v1605 = vld [vmem:[%s15 + $0x140] sm:$0xff]
      %v1606 = vld [vmem:[%s15 + $0x148] sm:$0xff]
      %v1607 = vld [vmem:[%s15 + $0x150] sm:$0xff]
      %v1608 = vld [vmem:[%s15 + $0x158] sm:$0xff]
      %v1609 = vld [vmem:[%s15 + $0x160] sm:$0xff]
      %v1610 = vld [vmem:[%s15 + $0x168] sm:$0xff]
      %v1611 = vld [vmem:[%s15 + $0x170] sm:$0xff]
      %v1612 = vld [vmem:[%s15 + $0x178] sm:$0xff]
      %v1613 = vld [vmem:[%s15 + $0x180] sm:$0xff]
      %v1614 = vld [vmem:[%s15 + $0x188] sm:$0xff]
      %v1615 = vld [vmem:[%s15 + $0x190] sm:$0xff]
      %v1616 = vld [vmem:[%s15 + $0x198] sm:$0xff]
      %v1617 = vld [vmem:[%s15 + $0x1a0] sm:$0xff]
      %v1618 = vld [vmem:[%s15 + $0x1a8] sm:$0xff]
      %v1619 = vld [vmem:[%s15 + $0x1b0] sm:$0xff]
      %v1620 = vld [vmem:[%s15 + $0x1b8] sm:$0xff]
      %v1621 = vld [vmem:[%s15 + $0x1c0] sm:$0xff]
      %v1622 = vld [vmem:[%s15 + $0x1c8] sm:$0xff]
      %v1623 = vld [vmem:[%s15 + $0x1d0] sm:$0xff]
      %v1624 = vld [vmem:[%s15 + $0x1d8] sm:$0xff]
      %v1625 = vld [vmem:[%s15 + $0x1e0] sm:$0xff]
      %v1626 = vld [vmem:[%s15 + $0x1e8] sm:$0xff]
      %v1627 = vld [vmem:[%s15 + $0x1f0] sm:$0xff]
      %v1628 = vld [vmem:[%s15 + $0x1f8] sm:$0xff]
      %v1629 = vld [vmem:[%s15 + $0x200] sm:$0xff]
      %v1630 = vld [vmem:[%s15 + $0x208] sm:$0xff]
      %v1631 = vld [vmem:[%s15 + $0x210] sm:$0xff]
      %v1632 = vld [vmem:[%s15 + $0x218] sm:$0xff]
      %v1633 = vld [vmem:[%s15 + $0x220] sm:$0xff]
      %v1634 = vld [vmem:[%s15 + $0x228] sm:$0xff]
      %v1635 = vld [vmem:[%s15 + $0x230] sm:$0xff]
      %v1636 = vld [vmem:[%s15 + $0x238] sm:$0xff]
      %v1637 = vld [vmem:[%s15 + $0x240] sm:$0xff]
      %v1638 = vld [vmem:[%s15 + $0x248] sm:$0xff]
      %v1639 = vld [vmem:[%s15 + $0x250] sm:$0xff]
      %v1640 = vld [vmem:[%s15 + $0x258] sm:$0xff]
      %v1641 = vld [vmem:[%s15 + $0x260] sm:$0xff]
      %v1642 = vld [vmem:[%s15 + $0x268] sm:$0xff]
      %v1643 = vld [vmem:[%s15 + $0x270] sm:$0xff]
      %v1644 = vld [vmem:[%s15 + $0x278] sm:$0xff]
      %v1645 = vld [vmem:[%s15 + $0x280] sm:$0xff]
      %v1646 = vld [vmem:[%s15 + $0x288] sm:$0xff]
      %v1647 = vld [vmem:[%s15 + $0x290] sm:$0xff]
      %v1648 = vld [vmem:[%s15 + $0x298] sm:$0xff]
      %v1649 = vld [vmem:[%s15 + $0x2a0] sm:$0xff]
      %v1650 = vld [vmem:[%s15 + $0x2a8] sm:$0xff]
      %v1651 = vld [vmem:[%s15 + $0x2b0] sm:$0xff]
      %v1652 = vld [vmem:[%s15 + $0x2b8] sm:$0xff]
      %v1653 = vld [vmem:[%s15 + $0x2c0] sm:$0xff]
      %v1654 = vld [vmem:[%s15 + $0x2c8] sm:$0xff]
      %v1655 = vld [vmem:[%s15 + $0x2d0] sm:$0xff]
      %v1656 = vld [vmem:[%s15 + $0x2d8] sm:$0xff]
      %v1657 = vld [vmem:[%s15 + $0x2e0] sm:$0xff]
      %v1658 = vld [vmem:[%s15 + $0x2e8] sm:$0xff]
      %v1659 = vld [vmem:[%s15 + $0x2f0] sm:$0xff]
      %v1660 = vld [vmem:[%s15 + $0x2f8] sm:$0xff]
      %v1661 = vld [vmem:[%s15 + $0x300] sm:$0xff]
      %v1662 = vld [vmem:[%s15 + $0x308] sm:$0xff]
      %v1663 = vld [vmem:[%s15 + $0x310] sm:$0xff]
      %v1664 = vld [vmem:[%s15 + $0x318] sm:$0xff]
      %v1665 = vld [vmem:[%s15 + $0x320] sm:$0xff]
      %v1666 = vld [vmem:[%s15 + $0x328] sm:$0xff]
      %v1667 = vld [vmem:[%s15 + $0x330] sm:$0xff]
      %v1668 = vld [vmem:[%s15 + $0x338] sm:$0xff]
      %v1669 = vld [vmem:[%s15 + $0x340] sm:$0xff]
      %v1670 = vld [vmem:[%s15 + $0x348] sm:$0xff]
      %v1671 = vld [vmem:[%s15 + $0x350] sm:$0xff]
      %v1672 = vld [vmem:[%s15 + $0x358] sm:$0xff]
      %v1673 = vld [vmem:[%s15 + $0x360] sm:$0xff]
      %v1674 = vld [vmem:[%s15 + $0x368] sm:$0xff]
      %v1675 = vld [vmem:[%s15 + $0x370] sm:$0xff]
      %v1676 = vld [vmem:[%s15 + $0x378] sm:$0xff]
      %v1677 = vld [vmem:[%s16] sm:$0x7f]
      %v1679 = vperm.slane %v1677, 0
      %v1680 = vperm.slane %v1677, 1
      %v1681 = vperm.slane %v1677, 2
      %v1682 = vperm.slane %v1677, 3
      %v1683 = vperm.slane %v1677, 4
      %v1684 = vperm.slane %v1677, 5
      %v1685 = vperm.slane %v1677, 6
      %1693 = vmatpush.msra.mxu0 %v1670
      %1694 = vmatpush.msra.mxu0 %v1663
      %1695 = vmatpush.msra.mxu0 %v1656
      %1696 = vmatpush.msra.mxu0 %v1649
      %1697 = vmatpush.msra.mxu0 %v1642
      %1698 = vmatpush.msra.mxu0 %v1635
      %1699 = vmatpush.msra.mxu0 %v1628
      %1700 = vmatpush.msra.mxu0 %v1621
      %1701 = vmatpush.msra.mxu0 %v1614
      %1702 = vmatpush.msra.mxu0 %v1607
      %1703 = vmatpush.msra.mxu0 %v1600
      %1704 = vmatpush.msra.mxu0 %v1593
      %1705 = vmatpush.msra.mxu0 %v1586
      %1706 = vmatpush.msra.mxu0 %v1579
      %1707 = vmatpush.msra.mxu0 %v1572
      %1708 = vmatpush.msra.mxu0 %v1565
      %1709 = vmatmul.f32.gmra.mxu0 %v1557
      %v1710 = vpop.f32.mrf.mxu0
      %v1711 = vadd.f32 %v1679, %v1710
      %1712 = vmatmul.f32.gmra.mxu0 %v1558
      %v1713 = vpop.f32.mrf.mxu0
      %v1714 = vadd.f32 %v1679, %v1713
      %1715 = vmatmul.f32.gmra.mxu0 %v1559
      %v1716 = vpop.f32.mrf.mxu0
      %v1717 = vadd.f32 %v1679, %v1716
      %1718 = vmatmul.f32.gmra.mxu0 %v1560
      %v1719 = vpop.f32.mrf.mxu0
      %v1720 = vadd.f32 %v1679, %v1719
      %1721 = vmatmul.f32.gmra.mxu0 %v1561
      %v1722 = vpop.f32.mrf.mxu0
      %v1723 = vadd.f32 %v1679, %v1722
      %1724 = vmatmul.f32.gmra.mxu0 %v1562
      %v1725 = vpop.f32.mrf.mxu0
      %v1726 = vadd.f32 %v1679, %v1725
      %1727 = vmatmul.f32.gmra.mxu0 %v1563
      %v1728 = vpop.f32.mrf.mxu0
      %v1729 = vadd.f32 %v1679, %v1728
      %1730 = vmatmul.f32.gmra.mxu0 %v1564
      %v1731 = vpop.f32.mrf.mxu0
      %v1732 = vadd.f32 %v1679, %v1731
      %1733 = vdwg.mxu0
      %1734 = vmatpush.msra.mxu0 %v1671
      %1735 = vmatpush.msra.mxu0 %v1664
      %1736 = vmatpush.msra.mxu0 %v1657
      %1737 = vmatpush.msra.mxu0 %v1650
      %1738 = vmatpush.msra.mxu0 %v1643
      %1739 = vmatpush.msra.mxu0 %v1636
      %1740 = vmatpush.msra.mxu0 %v1629
      %1741 = vmatpush.msra.mxu0 %v1622
      %1742 = vmatpush.msra.mxu0 %v1615
      %1743 = vmatpush.msra.mxu0 %v1608
      %1744 = vmatpush.msra.mxu0 %v1601
      %1745 = vmatpush.msra.mxu0 %v1594
      %1746 = vmatpush.msra.mxu0 %v1587
      %1747 = vmatpush.msra.mxu0 %v1580
      %1748 = vmatpush.msra.mxu0 %v1573
      %1749 = vmatpush.msra.mxu0 %v1566
      %1750 = vmatmul.f32.gmra.mxu0 %v1557
      %v1751 = vpop.f32.mrf.mxu0
      %v1752 = vadd.f32 %v1680, %v1751
      %1753 = vmatmul.f32.gmra.mxu0 %v1558
      %v1754 = vpop.f32.mrf.mxu0
      %v1755 = vadd.f32 %v1680, %v1754
      %1756 = vmatmul.f32.gmra.mxu0 %v1559
      %v1757 = vpop.f32.mrf.mxu0
      %v1758 = vadd.f32 %v1680, %v1757
      %1759 = vmatmul.f32.gmra.mxu0 %v1560
      %v1760 = vpop.f32.mrf.mxu0
      %v1761 = vadd.f32 %v1680, %v1760
      %1762 = vmatmul.f32.gmra.mxu0 %v1561
      %v1763 = vpop.f32.mrf.mxu0
      %v1764 = vadd.f32 %v1680, %v1763
      %1765 = vmatmul.f32.gmra.mxu0 %v1562
      %v1766 = vpop.f32.mrf.mxu0
      %v1767 = vadd.f32 %v1680, %v1766
      %1768 = vmatmul.f32.gmra.mxu0 %v1563
      %v1769 = vpop.f32.mrf.mxu0
      %v1770 = vadd.f32 %v1680, %v1769
      %1771 = vmatmul.f32.gmra.mxu0 %v1564
      %v1772 = vpop.f32.mrf.mxu0
      %v1773 = vadd.f32 %v1680, %v1772
      %1774 = vdwg.mxu0
      %1775 = vmatpush.msra.mxu0 %v1672
      %1776 = vmatpush.msra.mxu0 %v1665
      %1777 = vmatpush.msra.mxu0 %v1658
      %1778 = vmatpush.msra.mxu0 %v1651
      %1779 = vmatpush.msra.mxu0 %v1644
      %1780 = vmatpush.msra.mxu0 %v1637
      %1781 = vmatpush.msra.mxu0 %v1630
      %1782 = vmatpush.msra.mxu0 %v1623
      %1783 = vmatpush.msra.mxu0 %v1616
      %1784 = vmatpush.msra.mxu0 %v1609
      %1785 = vmatpush.msra.mxu0 %v1602
      %1786 = vmatpush.msra.mxu0 %v1595
      %1787 = vmatpush.msra.mxu0 %v1588
      %1788 = vmatpush.msra.mxu0 %v1581
      %1789 = vmatpush.msra.mxu0 %v1574
      %1790 = vmatpush.msra.mxu0 %v1567
      %1791 = vmatmul.f32.gmra.mxu0 %v1557
      %v1792 = vpop.f32.mrf.mxu0
      %v1793 = vadd.f32 %v1681, %v1792
      %1794 = vmatmul.f32.gmra.mxu0 %v1558
      %v1795 = vpop.f32.mrf.mxu0
      %v1796 = vadd.f32 %v1681, %v1795
      %1797 = vmatmul.f32.gmra.mxu0 %v1559
      %v1798 = vpop.f32.mrf.mxu0
      %v1799 = vadd.f32 %v1681, %v1798
      %1800 = vmatmul.f32.gmra.mxu0 %v1560
      %v1801 = vpop.f32.mrf.mxu0
      %v1802 = vadd.f32 %v1681, %v1801
      %1803 = vmatmul.f32.gmra.mxu0 %v1561
      %v1804 = vpop.f32.mrf.mxu0
      %v1805 = vadd.f32 %v1681, %v1804
      %1806 = vmatmul.f32.gmra.mxu0 %v1562
      %v1807 = vpop.f32.mrf.mxu0
      %v1808 = vadd.f32 %v1681, %v1807
      %1809 = vmatmul.f32.gmra.mxu0 %v1563
      %v1810 = vpop.f32.mrf.mxu0
      %v1811 = vadd.f32 %v1681, %v1810
      %1812 = vmatmul.f32.gmra.mxu0 %v1564
      %v1813 = vpop.f32.mrf.mxu0
      %v1814 = vadd.f32 %v1681, %v1813
      %1815 = vdwg.mxu0
      %1816 = vmatpush.msra.mxu0 %v1673
      %1817 = vmatpush.msra.mxu0 %v1666
      %1818 = vmatpush.msra.mxu0 %v1659
      %1819 = vmatpush.msra.mxu0 %v1652
      %1820 = vmatpush.msra.mxu0 %v1645
      %1821 = vmatpush.msra.mxu0 %v1638
      %1822 = vmatpush.msra.mxu0 %v1631
      %1823 = vmatpush.msra.mxu0 %v1624
      %1824 = vmatpush.msra.mxu0 %v1617
      %1825 = vmatpush.msra.mxu0 %v1610
      %1826 = vmatpush.msra.mxu0 %v1603
      %1827 = vmatpush.msra.mxu0 %v1596
      %1828 = vmatpush.msra.mxu0 %v1589
      %1829 = vmatpush.msra.mxu0 %v1582
      %1830 = vmatpush.msra.mxu0 %v1575
      %1831 = vmatpush.msra.mxu0 %v1568
      %1832 = vmatmul.f32.gmra.mxu0 %v1557
      %v1833 = vpop.f32.mrf.mxu0
      %v1834 = vadd.f32 %v1682, %v1833
      %1835 = vmatmul.f32.gmra.mxu0 %v1558
      %v1836 = vpop.f32.mrf.mxu0
      %v1837 = vadd.f32 %v1682, %v1836
      %1838 = vmatmul.f32.gmra.mxu0 %v1559
      %v1839 = vpop.f32.mrf.mxu0
      %v1840 = vadd.f32 %v1682, %v1839
      %1841 = vmatmul.f32.gmra.mxu0 %v1560
      %v1842 = vpop.f32.mrf.mxu0
      %v1843 = vadd.f32 %v1682, %v1842
      %1844 = vmatmul.f32.gmra.mxu0 %v1561
      %v1845 = vpop.f32.mrf.mxu0
      %v1846 = vadd.f32 %v1682, %v1845
      %1847 = vmatmul.f32.gmra.mxu0 %v1562
      %v1848 = vpop.f32.mrf.mxu0
      %v1849 = vadd.f32 %v1682, %v1848
      %1850 = vmatmul.f32.gmra.mxu0 %v1563
      %v1851 = vpop.f32.mrf.mxu0
      %v1852 = vadd.f32 %v1682, %v1851
      %1853 = vmatmul.f32.gmra.mxu0 %v1564
      %v1854 = vpop.f32.mrf.mxu0
      %v1855 = vadd.f32 %v1682, %v1854
      %1856 = vdwg.mxu0
      %1857 = vmatpush.msra.mxu0 %v1674
      %1858 = vmatpush.msra.mxu0 %v1667
      %1859 = vmatpush.msra.mxu0 %v1660
      %1860 = vmatpush.msra.mxu0 %v1653
      %1861 = vmatpush.msra.mxu0 %v1646
      %1862 = vmatpush.msra.mxu0 %v1639
      %1863 = vmatpush.msra.mxu0 %v1632
      %1864 = vmatpush.msra.mxu0 %v1625
      %1865 = vmatpush.msra.mxu0 %v1618
      %1866 = vmatpush.msra.mxu0 %v1611
      %1867 = vmatpush.msra.mxu0 %v1604
      %1868 = vmatpush.msra.mxu0 %v1597
      %1869 = vmatpush.msra.mxu0 %v1590
      %1870 = vmatpush.msra.mxu0 %v1583
      %1871 = vmatpush.msra.mxu0 %v1576
      %1872 = vmatpush.msra.mxu0 %v1569
      %1873 = vmatmul.f32.gmra.mxu0 %v1557
      %v1874 = vpop.f32.mrf.mxu0
      %v1875 = vadd.f32 %v1683, %v1874
      %1876 = vmatmul.f32.gmra.mxu0 %v1558
      %v1877 = vpop.f32.mrf.mxu0
      %v1878 = vadd.f32 %v1683, %v1877
      %1879 = vmatmul.f32.gmra.mxu0 %v1559
      %v1880 = vpop.f32.mrf.mxu0
      %v1881 = vadd.f32 %v1683, %v1880
      %1882 = vmatmul.f32.gmra.mxu0 %v1560
      %v1883 = vpop.f32.mrf.mxu0
      %v1884 = vadd.f32 %v1683, %v1883
      %1885 = vmatmul.f32.gmra.mxu0 %v1561
      %v1886 = vpop.f32.mrf.mxu0
      %v1887 = vadd.f32 %v1683, %v1886
      %1888 = vmatmul.f32.gmra.mxu0 %v1562
      %v1889 = vpop.f32.mrf.mxu0
      %v1890 = vadd.f32 %v1683, %v1889
      %1891 = vmatmul.f32.gmra.mxu0 %v1563
      %v1892 = vpop.f32.mrf.mxu0
      %v1893 = vadd.f32 %v1683, %v1892
      %1894 = vmatmul.f32.gmra.mxu0 %v1564
      %v1895 = vpop.f32.mrf.mxu0
      %v1896 = vadd.f32 %v1683, %v1895
      %1897 = vdwg.mxu0
      %1898 = vmatpush.msra.mxu0 %v1675
      %1899 = vmatpush.msra.mxu0 %v1668
      %1900 = vmatpush.msra.mxu0 %v1661
      %1901 = vmatpush.msra.mxu0 %v1654
      %1902 = vmatpush.msra.mxu0 %v1647
      %1903 = vmatpush.msra.mxu0 %v1640
      %1904 = vmatpush.msra.mxu0 %v1633
      %1905 = vmatpush.msra.mxu0 %v1626
      %1906 = vmatpush.msra.mxu0 %v1619
      %1907 = vmatpush.msra.mxu0 %v1612
      %1908 = vmatpush.msra.mxu0 %v1605
      %1909 = vmatpush.msra.mxu0 %v1598
      %1910 = vmatpush.msra.mxu0 %v1591
      %1911 = vmatpush.msra.mxu0 %v1584
      %1912 = vmatpush.msra.mxu0 %v1577
      %1913 = vmatpush.msra.mxu0 %v1570
      %1914 = vmatmul.f32.gmra.mxu0 %v1557
      %v1915 = vpop.f32.mrf.mxu0
      %v1916 = vadd.f32 %v1684, %v1915
      %1917 = vmatmul.f32.gmra.mxu0 %v1558
      %v1918 = vpop.f32.mrf.mxu0
      %v1919 = vadd.f32 %v1684, %v1918
      %1920 = vmatmul.f32.gmra.mxu0 %v1559
      %v1921 = vpop.f32.mrf.mxu0
      %v1922 = vadd.f32 %v1684, %v1921
      %1923 = vmatmul.f32.gmra.mxu0 %v1560
      %v1924 = vpop.f32.mrf.mxu0
      %v1925 = vadd.f32 %v1684, %v1924
      %1926 = vmatmul.f32.gmra.mxu0 %v1561
      %v1927 = vpop.f32.mrf.mxu0
      %v1928 = vadd.f32 %v1684, %v1927
      %1929 = vmatmul.f32.gmra.mxu0 %v1562
      %v1930 = vpop.f32.mrf.mxu0
      %v1931 = vadd.f32 %v1684, %v1930
      %1932 = vmatmul.f32.gmra.mxu0 %v1563
      %v1933 = vpop.f32.mrf.mxu0
      %v1934 = vadd.f32 %v1684, %v1933
      %1935 = vmatmul.f32.gmra.mxu0 %v1564
      %v1936 = vpop.f32.mrf.mxu0
      %v1937 = vadd.f32 %v1684, %v1936
      %1938 = vdwg.mxu0
      %1939 = vmatpush.msra.mxu0 %v1676
      %1940 = vmatpush.msra.mxu0 %v1669
      %1941 = vmatpush.msra.mxu0 %v1662
      %1942 = vmatpush.msra.mxu0 %v1655
      %1943 = vmatpush.msra.mxu0 %v1648
      %1944 = vmatpush.msra.mxu0 %v1641
      %1945 = vmatpush.msra.mxu0 %v1634
      %1946 = vmatpush.msra.mxu0 %v1627
      %1947 = vmatpush.msra.mxu0 %v1620
      %1948 = vmatpush.msra.mxu0 %v1613
      %1949 = vmatpush.msra.mxu0 %v1606
      %1950 = vmatpush.msra.mxu0 %v1599
      %1951 = vmatpush.msra.mxu0 %v1592
      %1952 = vmatpush.msra.mxu0 %v1585
      %1953 = vmatpush.msra.mxu0 %v1578
      %1954 = vmatpush.msra.mxu0 %v1571
      %1955 = vmatmul.f32.gmra.mxu0 %v1557
      %v1956 = vpop.f32.mrf.mxu0
      %v1957 = vadd.f32 %v1685, %v1956
      %1958 = vmatmul.f32.gmra.mxu0 %v1558
      %v1959 = vpop.f32.mrf.mxu0
      %v1960 = vadd.f32 %v1685, %v1959
      %1961 = vmatmul.f32.gmra.mxu0 %v1559
      %v1962 = vpop.f32.mrf.mxu0
      %v1963 = vadd.f32 %v1685, %v1962
      %1964 = vmatmul.f32.gmra.mxu0 %v1560
      %v1965 = vpop.f32.mrf.mxu0
      %v1966 = vadd.f32 %v1685, %v1965
      %1967 = vmatmul.f32.gmra.mxu0 %v1561
      %v1968 = vpop.f32.mrf.mxu0
      %v1969 = vadd.f32 %v1685, %v1968
      %1970 = vmatmul.f32.gmra.mxu0 %v1562
      %v1971 = vpop.f32.mrf.mxu0
      %v1972 = vadd.f32 %v1685, %v1971
      %1973 = vmatmul.f32.gmra.mxu0 %v1563
      %v1974 = vpop.f32.mrf.mxu0
      %v1975 = vadd.f32 %v1685, %v1974
      %1976 = vmatmul.f32.gmra.mxu0 %v1564
      %v1977 = vpop.f32.mrf.mxu0
      %v1978 = vadd.f32 %v1685, %v1977
      %1979 = vdwg.mxu0
      %v1980 = vxor.u32 %v1711, 2147483648
      %v1981 = vxor.u32 %v1752, 2147483648
      %v1982 = vxor.u32 %v1793, 2147483648
      %v1983 = vxor.u32 %v1834, 2147483648
      %v1984 = vxor.u32 %v1875, 2147483648
      %v1985 = vxor.u32 %v1916, 2147483648
      %v1986 = vxor.u32 %v1957, 2147483648
      %v1987 = vxor.u32 %v1714, 2147483648
      %v1988 = vxor.u32 %v1755, 2147483648
      %v1989 = vxor.u32 %v1796, 2147483648
      %v1990 = vxor.u32 %v1837, 2147483648
      %v1991 = vxor.u32 %v1878, 2147483648
      %v1992 = vxor.u32 %v1919, 2147483648
      %v1993 = vxor.u32 %v1960, 2147483648
      %v1994 = vxor.u32 %v1717, 2147483648
      %v1995 = vxor.u32 %v1758, 2147483648
      %v1996 = vxor.u32 %v1799, 2147483648
      %v1997 = vxor.u32 %v1840, 2147483648
      %v1998 = vxor.u32 %v1881, 2147483648
      %v1999 = vxor.u32 %v1922, 2147483648
      %v2000 = vxor.u32 %v1963, 2147483648
      %v2001 = vxor.u32 %v1720, 2147483648
      %v2002 = vxor.u32 %v1761, 2147483648
      %v2003 = vxor.u32 %v1802, 2147483648
      %v2004 = vxor.u32 %v1843, 2147483648
      %v2005 = vxor.u32 %v1884, 2147483648
      %v2006 = vxor.u32 %v1925, 2147483648
      %v2007 = vxor.u32 %v1966, 2147483648
      %v2008 = vxor.u32 %v1723, 2147483648
      %v2009 = vxor.u32 %v1764, 2147483648
      %v2010 = vxor.u32 %v1805, 2147483648
      %v2011 = vxor.u32 %v1846, 2147483648
      %v2012 = vxor.u32 %v1887, 2147483648
      %v2013 = vxor.u32 %v1928, 2147483648
      %v2014 = vxor.u32 %v1969, 2147483648
      %v2015 = vxor.u32 %v1726, 2147483648
      %v2016 = vxor.u32 %v1767, 2147483648
      %v2017 = vxor.u32 %v1808, 2147483648
      %v2018 = vxor.u32 %v1849, 2147483648
      %v2019 = vxor.u32 %v1890, 2147483648
      %v2020 = vxor.u32 %v1931, 2147483648
      %v2021 = vxor.u32 %v1972, 2147483648
      %v2022 = vxor.u32 %v1729, 2147483648
      %v2023 = vxor.u32 %v1770, 2147483648
      %v2024 = vxor.u32 %v1811, 2147483648
      %v2025 = vxor.u32 %v1852, 2147483648
      %v2026 = vxor.u32 %v1893, 2147483648
      %v2027 = vxor.u32 %v1934, 2147483648
      %v2028 = vxor.u32 %v1975, 2147483648
      %v2029 = vxor.u32 %v1732, 2147483648
      %v2030 = vxor.u32 %v1773, 2147483648
      %v2031 = vxor.u32 %v1814, 2147483648
      %v2032 = vxor.u32 %v1855, 2147483648
      %v2033 = vxor.u32 %v1896, 2147483648
      %v2034 = vxor.u32 %v1937, 2147483648
      %v2035 = vxor.u32 %v1978, 2147483648
      %v2036 = vmul.f32 %v1980, 1.442695
      %v2037 = vpow.pop %v2036
      %v2038 = vmul.f32 %v1981, 1.442695
      %v2039 = vpow.pop %v2038
      %v2040 = vmul.f32 %v1982, 1.442695
      %v2041 = vpow.pop %v2040
      %v2042 = vmul.f32 %v1983, 1.442695
      %v2043 = vpow.pop %v2042
      %v2044 = vmul.f32 %v1984, 1.442695
      %v2045 = vpow.pop %v2044
      %v2046 = vmul.f32 %v1985, 1.442695
      %v2047 = vpow.pop %v2046
      %v2048 = vmul.f32 %v1986, 1.442695
      %v2049 = vpow.pop %v2048
      %v2050 = vmul.f32 %v1987, 1.442695
      %v2051 = vpow.pop %v2050
      %v2052 = vmul.f32 %v1988, 1.442695
      %v2053 = vpow.pop %v2052
      %v2054 = vmul.f32 %v1989, 1.442695
      %v2055 = vpow.pop %v2054
      %v2056 = vmul.f32 %v1990, 1.442695
      %v2057 = vpow.pop %v2056
      %v2058 = vmul.f32 %v1991, 1.442695
      %v2059 = vpow.pop %v2058
      %v2060 = vmul.f32 %v1992, 1.442695
      %v2061 = vpow.pop %v2060
      %v2062 = vmul.f32 %v1993, 1.442695
      %v2063 = vpow.pop %v2062
      %v2064 = vmul.f32 %v1994, 1.442695
      %v2065 = vpow.pop %v2064
      %v2066 = vmul.f32 %v1995, 1.442695
      %v2067 = vpow.pop %v2066
      %v2068 = vmul.f32 %v1996, 1.442695
      %v2069 = vpow.pop %v2068
      %v2070 = vmul.f32 %v1997, 1.442695
      %v2071 = vpow.pop %v2070
      %v2072 = vmul.f32 %v1998, 1.442695
      %v2073 = vpow.pop %v2072
      %v2074 = vmul.f32 %v1999, 1.442695
      %v2075 = vpow.pop %v2074
      %v2076 = vmul.f32 %v2000, 1.442695
      %v2077 = vpow.pop %v2076
      %v2078 = vmul.f32 %v2001, 1.442695
      %v2079 = vpow.pop %v2078
      %v2080 = vmul.f32 %v2002, 1.442695
      %v2081 = vpow.pop %v2080
      %v2082 = vmul.f32 %v2003, 1.442695
      %v2083 = vpow.pop %v2082
      %v2084 = vmul.f32 %v2004, 1.442695
      %v2085 = vpow.pop %v2084
      %v2086 = vmul.f32 %v2005, 1.442695
      %v2087 = vpow.pop %v2086
      %v2088 = vmul.f32 %v2006, 1.442695
      %v2089 = vpow.pop %v2088
      %v2090 = vmul.f32 %v2007, 1.442695
      %v2091 = vpow.pop %v2090
      %v2092 = vmul.f32 %v2008, 1.442695
      %v2093 = vpow.pop %v2092
      %v2094 = vmul.f32 %v2009, 1.442695
      %v2095 = vpow.pop %v2094
      %v2096 = vmul.f32 %v2010, 1.442695
      %v2097 = vpow.pop %v2096
      %v2098 = vmul.f32 %v2011, 1.442695
      %v2099 = vpow.pop %v2098
      %v2100 = vmul.f32 %v2012, 1.442695
      %v2101 = vpow.pop %v2100
      %v2102 = vmul.f32 %v2013, 1.442695
      %v2103 = vpow.pop %v2102
      %v2104 = vmul.f32 %v2014, 1.442695
      %v2105 = vpow.pop %v2104
      %v2106 = vmul.f32 %v2015, 1.442695
      %v2107 = vpow.pop %v2106
      %v2108 = vmul.f32 %v2016, 1.442695
      %v2109 = vpow.pop %v2108
      %v2110 = vmul.f32 %v2017, 1.442695
      %v2111 = vpow.pop %v2110
      %v2112 = vmul.f32 %v2018, 1.442695
      %v2113 = vpow.pop %v2112
      %v2114 = vmul.f32 %v2019, 1.442695
      %v2115 = vpow.pop %v2114
      %v2116 = vmul.f32 %v2020, 1.442695
      %v2117 = vpow.pop %v2116
      %v2118 = vmul.f32 %v2021, 1.442695
      %v2119 = vpow.pop %v2118
      %v2120 = vmul.f32 %v2022, 1.442695
      %v2121 = vpow.pop %v2120
      %v2122 = vmul.f32 %v2023, 1.442695
      %v2123 = vpow.pop %v2122
      %v2124 = vmul.f32 %v2024, 1.442695
      %v2125 = vpow.pop %v2124
      %v2126 = vmul.f32 %v2025, 1.442695
      %v2127 = vpow.pop %v2126
      %v2128 = vmul.f32 %v2026, 1.442695
      %v2129 = vpow.pop %v2128
      %v2130 = vmul.f32 %v2027, 1.442695
      %v2131 = vpow.pop %v2130
      %v2132 = vmul.f32 %v2028, 1.442695
      %v2133 = vpow.pop %v2132
      %v2134 = vmul.f32 %v2029, 1.442695
      %v2135 = vpow.pop %v2134
      %v2136 = vmul.f32 %v2030, 1.442695
      %v2137 = vpow.pop %v2136
      %v2138 = vmul.f32 %v2031, 1.442695
      %v2139 = vpow.pop %v2138
      %v2140 = vmul.f32 %v2032, 1.442695
      %v2141 = vpow.pop %v2140
      %v2142 = vmul.f32 %v2033, 1.442695
      %v2143 = vpow.pop %v2142
      %v2144 = vmul.f32 %v2034, 1.442695
      %v2145 = vpow.pop %v2144
      %v2146 = vmul.f32 %v2035, 1.442695
      %v2147 = vpow.pop %v2146
      %v2148 = vadd.f32 %v2037, 1.0
      %v2149 = vadd.f32 %v2039, 1.0
      %v2150 = vadd.f32 %v2041, 1.0
      %v2151 = vadd.f32 %v2043, 1.0
      %v2152 = vadd.f32 %v2045, 1.0
      %v2153 = vadd.f32 %v2047, 1.0
      %v2154 = vadd.f32 %v2049, 1.0
      %v2155 = vadd.f32 %v2051, 1.0
      %v2156 = vadd.f32 %v2053, 1.0
      %v2157 = vadd.f32 %v2055, 1.0
      %v2158 = vadd.f32 %v2057, 1.0
      %v2159 = vadd.f32 %v2059, 1.0
      %v2160 = vadd.f32 %v2061, 1.0
      %v2161 = vadd.f32 %v2063, 1.0
      %v2162 = vadd.f32 %v2065, 1.0
      %v2163 = vadd.f32 %v2067, 1.0
      %v2164 = vadd.f32 %v2069, 1.0
      %v2165 = vadd.f32 %v2071, 1.0
      %v2166 = vadd.f32 %v2073, 1.0
      %v2167 = vadd.f32 %v2075, 1.0
      %v2168 = vadd.f32 %v2077, 1.0
      %v2169 = vadd.f32 %v2079, 1.0
      %v2170 = vadd.f32 %v2081, 1.0
      %v2171 = vadd.f32 %v2083, 1.0
      %v2172 = vadd.f32 %v2085, 1.0
      %v2173 = vadd.f32 %v2087, 1.0
      %v2174 = vadd.f32 %v2089, 1.0
      %v2175 = vadd.f32 %v2091, 1.0
      %v2176 = vadd.f32 %v2093, 1.0
      %v2177 = vadd.f32 %v2095, 1.0
      %v2178 = vadd.f32 %v2097, 1.0
      %v2179 = vadd.f32 %v2099, 1.0
      %v2180 = vadd.f32 %v2101, 1.0
      %v2181 = vadd.f32 %v2103, 1.0
      %v2182 = vadd.f32 %v2105, 1.0
      %v2183 = vadd.f32 %v2107, 1.0
      %v2184 = vadd.f32 %v2109, 1.0
      %v2185 = vadd.f32 %v2111, 1.0
      %v2186 = vadd.f32 %v2113, 1.0
      %v2187 = vadd.f32 %v2115, 1.0
      %v2188 = vadd.f32 %v2117, 1.0
      %v2189 = vadd.f32 %v2119, 1.0
      %v2190 = vadd.f32 %v2121, 1.0
      %v2191 = vadd.f32 %v2123, 1.0
      %v2192 = vadd.f32 %v2125, 1.0
      %v2193 = vadd.f32 %v2127, 1.0
      %v2194 = vadd.f32 %v2129, 1.0
      %v2195 = vadd.f32 %v2131, 1.0
      %v2196 = vadd.f32 %v2133, 1.0
      %v2197 = vadd.f32 %v2135, 1.0
      %v2198 = vadd.f32 %v2137, 1.0
      %v2199 = vadd.f32 %v2139, 1.0
      %v2200 = vadd.f32 %v2141, 1.0
      %v2201 = vadd.f32 %v2143, 1.0
      %v2202 = vadd.f32 %v2145, 1.0
      %v2203 = vadd.f32 %v2147, 1.0
      %v2204 = vrcp.pop %v2148
      %v2205 = vmul.f32 %v2148, %v2204
      %v2206 = vsub.f32 1.0, %v2205
      %v2207 = vmul.f32 %v2204, %v2206
      %v2208 = vadd.f32 %v2204, %v2207
      %vm2209 = vweird.f32 %v2148
      %vm2210 = vweird.f32 %v2204
      %vm2211 = vmor %vm2209, %vm2210
      %v2212 = vsel %vm2211, %v2204, %v2208
      %v2213 = vand.u32 2147483647, %v2148
      %vm2214 = vcmp.eq.f32.partialorder %v2213, 8.507059e+37
      %v2215 = vand.u32 %v2148, 2147483648
      %v2216 = vor.u32 1.1754944e-38, %v2215
      %v2217 = vsel %vm2214, %v2216, %v2212
      %v2218 = vmul.f32 1.0, %v2217
      %v2219 = vrcp.pop %v2149
      %v2220 = vmul.f32 %v2149, %v2219
      %v2221 = vsub.f32 1.0, %v2220
      %v2222 = vmul.f32 %v2219, %v2221
      %v2223 = vadd.f32 %v2219, %v2222
      %vm2224 = vweird.f32 %v2149
      %vm2225 = vweird.f32 %v2219
      %vm2226 = vmor %vm2224, %vm2225
      %v2227 = vsel %vm2226, %v2219, %v2223
      %v2228 = vand.u32 2147483647, %v2149
      %vm2229 = vcmp.eq.f32.partialorder %v2228, 8.507059e+37
      %v2230 = vand.u32 %v2149, 2147483648
      %v2231 = vor.u32 1.1754944e-38, %v2230
      %v2232 = vsel %vm2229, %v2231, %v2227
      %v2233 = vmul.f32 1.0, %v2232
      %v2234 = vrcp.pop %v2150
      %v2235 = vmul.f32 %v2150, %v2234
      %v2236 = vsub.f32 1.0, %v2235
      %v2237 = vmul.f32 %v2234, %v2236
      %v2238 = vadd.f32 %v2234, %v2237
      %vm2239 = vweird.f32 %v2150
      %vm2240 = vweird.f32 %v2234
      %vm2241 = vmor %vm2239, %vm2240
      %v2242 = vsel %vm2241, %v2234, %v2238
      %v2243 = vand.u32 2147483647, %v2150
      %vm2244 = vcmp.eq.f32.partialorder %v2243, 8.507059e+37
      %v2245 = vand.u32 %v2150, 2147483648
      %v2246 = vor.u32 1.1754944e-38, %v2245
      %v2247 = vsel %vm2244, %v2246, %v2242
      %v2248 = vmul.f32 1.0, %v2247
      %v2249 = vrcp.pop %v2151
      %v2250 = vmul.f32 %v2151, %v2249
      %v2251 = vsub.f32 1.0, %v2250
      %v2252 = vmul.f32 %v2249, %v2251
      %v2253 = vadd.f32 %v2249, %v2252
      %vm2254 = vweird.f32 %v2151
      %vm2255 = vweird.f32 %v2249
      %vm2256 = vmor %vm2254, %vm2255
      %v2257 = vsel %vm2256, %v2249, %v2253
      %v2258 = vand.u32 2147483647, %v2151
      %vm2259 = vcmp.eq.f32.partialorder %v2258, 8.507059e+37
      %v2260 = vand.u32 %v2151, 2147483648
      %v2261 = vor.u32 1.1754944e-38, %v2260
      %v2262 = vsel %vm2259, %v2261, %v2257
      %v2263 = vmul.f32 1.0, %v2262
      %v2264 = vrcp.pop %v2152
      %v2265 = vmul.f32 %v2152, %v2264
      %v2266 = vsub.f32 1.0, %v2265
      %v2267 = vmul.f32 %v2264, %v2266
      %v2268 = vadd.f32 %v2264, %v2267
      %vm2269 = vweird.f32 %v2152
      %vm2270 = vweird.f32 %v2264
      %vm2271 = vmor %vm2269, %vm2270
      %v2272 = vsel %vm2271, %v2264, %v2268
      %v2273 = vand.u32 2147483647, %v2152
      %vm2274 = vcmp.eq.f32.partialorder %v2273, 8.507059e+37
      %v2275 = vand.u32 %v2152, 2147483648
      %v2276 = vor.u32 1.1754944e-38, %v2275
      %v2277 = vsel %vm2274, %v2276, %v2272
      %v2278 = vmul.f32 1.0, %v2277
      %v2279 = vrcp.pop %v2153
      %v2280 = vmul.f32 %v2153, %v2279
      %v2281 = vsub.f32 1.0, %v2280
      %v2282 = vmul.f32 %v2279, %v2281
      %v2283 = vadd.f32 %v2279, %v2282
      %vm2284 = vweird.f32 %v2153
      %vm2285 = vweird.f32 %v2279
      %vm2286 = vmor %vm2284, %vm2285
      %v2287 = vsel %vm2286, %v2279, %v2283
      %v2288 = vand.u32 2147483647, %v2153
      %vm2289 = vcmp.eq.f32.partialorder %v2288, 8.507059e+37
      %v2290 = vand.u32 %v2153, 2147483648
      %v2291 = vor.u32 1.1754944e-38, %v2290
      %v2292 = vsel %vm2289, %v2291, %v2287
      %v2293 = vmul.f32 1.0, %v2292
      %v2294 = vrcp.pop %v2154
      %v2295 = vmul.f32 %v2154, %v2294
      %v2296 = vsub.f32 1.0, %v2295
      %v2297 = vmul.f32 %v2294, %v2296
      %v2298 = vadd.f32 %v2294, %v2297
      %vm2299 = vweird.f32 %v2154
      %vm2300 = vweird.f32 %v2294
      %vm2301 = vmor %vm2299, %vm2300
      %v2302 = vsel %vm2301, %v2294, %v2298
      %v2303 = vand.u32 2147483647, %v2154
      %vm2304 = vcmp.eq.f32.partialorder %v2303, 8.507059e+37
      %v2305 = vand.u32 %v2154, 2147483648
      %v2306 = vor.u32 1.1754944e-38, %v2305
      %v2307 = vsel %vm2304, %v2306, %v2302
      %v2308 = vmul.f32 1.0, %v2307
      %v2309 = vrcp.pop %v2155
      %v2310 = vmul.f32 %v2155, %v2309
      %v2311 = vsub.f32 1.0, %v2310
      %v2312 = vmul.f32 %v2309, %v2311
      %v2313 = vadd.f32 %v2309, %v2312
      %vm2314 = vweird.f32 %v2155
      %vm2315 = vweird.f32 %v2309
      %vm2316 = vmor %vm2314, %vm2315
      %v2317 = vsel %vm2316, %v2309, %v2313
      %v2318 = vand.u32 2147483647, %v2155
      %vm2319 = vcmp.eq.f32.partialorder %v2318, 8.507059e+37
      %v2320 = vand.u32 %v2155, 2147483648
      %v2321 = vor.u32 1.1754944e-38, %v2320
      %v2322 = vsel %vm2319, %v2321, %v2317
      %v2323 = vmul.f32 1.0, %v2322
      %v2324 = vrcp.pop %v2156
      %v2325 = vmul.f32 %v2156, %v2324
      %v2326 = vsub.f32 1.0, %v2325
      %v2327 = vmul.f32 %v2324, %v2326
      %v2328 = vadd.f32 %v2324, %v2327
      %vm2329 = vweird.f32 %v2156
      %vm2330 = vweird.f32 %v2324
      %vm2331 = vmor %vm2329, %vm2330
      %v2332 = vsel %vm2331, %v2324, %v2328
      %v2333 = vand.u32 2147483647, %v2156
      %vm2334 = vcmp.eq.f32.partialorder %v2333, 8.507059e+37
      %v2335 = vand.u32 %v2156, 2147483648
      %v2336 = vor.u32 1.1754944e-38, %v2335
      %v2337 = vsel %vm2334, %v2336, %v2332
      %v2338 = vmul.f32 1.0, %v2337
      %v2339 = vrcp.pop %v2157
      %v2340 = vmul.f32 %v2157, %v2339
      %v2341 = vsub.f32 1.0, %v2340
      %v2342 = vmul.f32 %v2339, %v2341
      %v2343 = vadd.f32 %v2339, %v2342
      %vm2344 = vweird.f32 %v2157
      %vm2345 = vweird.f32 %v2339
      %vm2346 = vmor %vm2344, %vm2345
      %v2347 = vsel %vm2346, %v2339, %v2343
      %v2348 = vand.u32 2147483647, %v2157
      %vm2349 = vcmp.eq.f32.partialorder %v2348, 8.507059e+37
      %v2350 = vand.u32 %v2157, 2147483648
      %v2351 = vor.u32 1.1754944e-38, %v2350
      %v2352 = vsel %vm2349, %v2351, %v2347
      %v2353 = vmul.f32 1.0, %v2352
      %v2354 = vrcp.pop %v2158
      %v2355 = vmul.f32 %v2158, %v2354
      %v2356 = vsub.f32 1.0, %v2355
      %v2357 = vmul.f32 %v2354, %v2356
      %v2358 = vadd.f32 %v2354, %v2357
      %vm2359 = vweird.f32 %v2158
      %vm2360 = vweird.f32 %v2354
      %vm2361 = vmor %vm2359, %vm2360
      %v2362 = vsel %vm2361, %v2354, %v2358
      %v2363 = vand.u32 2147483647, %v2158
      %vm2364 = vcmp.eq.f32.partialorder %v2363, 8.507059e+37
      %v2365 = vand.u32 %v2158, 2147483648
      %v2366 = vor.u32 1.1754944e-38, %v2365
      %v2367 = vsel %vm2364, %v2366, %v2362
      %v2368 = vmul.f32 1.0, %v2367
      %v2369 = vrcp.pop %v2159
      %v2370 = vmul.f32 %v2159, %v2369
      %v2371 = vsub.f32 1.0, %v2370
      %v2372 = vmul.f32 %v2369, %v2371
      %v2373 = vadd.f32 %v2369, %v2372
      %vm2374 = vweird.f32 %v2159
      %vm2375 = vweird.f32 %v2369
      %vm2376 = vmor %vm2374, %vm2375
      %v2377 = vsel %vm2376, %v2369, %v2373
      %v2378 = vand.u32 2147483647, %v2159
      %vm2379 = vcmp.eq.f32.partialorder %v2378, 8.507059e+37
      %v2380 = vand.u32 %v2159, 2147483648
      %v2381 = vor.u32 1.1754944e-38, %v2380
      %v2382 = vsel %vm2379, %v2381, %v2377
      %v2383 = vmul.f32 1.0, %v2382
      %v2384 = vrcp.pop %v2160
      %v2385 = vmul.f32 %v2160, %v2384
      %v2386 = vsub.f32 1.0, %v2385
      %v2387 = vmul.f32 %v2384, %v2386
      %v2388 = vadd.f32 %v2384, %v2387
      %vm2389 = vweird.f32 %v2160
      %vm2390 = vweird.f32 %v2384
      %vm2391 = vmor %vm2389, %vm2390
      %v2392 = vsel %vm2391, %v2384, %v2388
      %v2393 = vand.u32 2147483647, %v2160
      %vm2394 = vcmp.eq.f32.partialorder %v2393, 8.507059e+37
      %v2395 = vand.u32 %v2160, 2147483648
      %v2396 = vor.u32 1.1754944e-38, %v2395
      %v2397 = vsel %vm2394, %v2396, %v2392
      %v2398 = vmul.f32 1.0, %v2397
      %v2399 = vrcp.pop %v2161
      %v2400 = vmul.f32 %v2161, %v2399
      %v2401 = vsub.f32 1.0, %v2400
      %v2402 = vmul.f32 %v2399, %v2401
      %v2403 = vadd.f32 %v2399, %v2402
      %vm2404 = vweird.f32 %v2161
      %vm2405 = vweird.f32 %v2399
      %vm2406 = vmor %vm2404, %vm2405
      %v2407 = vsel %vm2406, %v2399, %v2403
      %v2408 = vand.u32 2147483647, %v2161
      %vm2409 = vcmp.eq.f32.partialorder %v2408, 8.507059e+37
      %v2410 = vand.u32 %v2161, 2147483648
      %v2411 = vor.u32 1.1754944e-38, %v2410
      %v2412 = vsel %vm2409, %v2411, %v2407
      %v2413 = vmul.f32 1.0, %v2412
      %v2414 = vrcp.pop %v2162
      %v2415 = vmul.f32 %v2162, %v2414
      %v2416 = vsub.f32 1.0, %v2415
      %v2417 = vmul.f32 %v2414, %v2416
      %v2418 = vadd.f32 %v2414, %v2417
      %vm2419 = vweird.f32 %v2162
      %vm2420 = vweird.f32 %v2414
      %vm2421 = vmor %vm2419, %vm2420
      %v2422 = vsel %vm2421, %v2414, %v2418
      %v2423 = vand.u32 2147483647, %v2162
      %vm2424 = vcmp.eq.f32.partialorder %v2423, 8.507059e+37
      %v2425 = vand.u32 %v2162, 2147483648
      %v2426 = vor.u32 1.1754944e-38, %v2425
      %v2427 = vsel %vm2424, %v2426, %v2422
      %v2428 = vmul.f32 1.0, %v2427
      %v2429 = vrcp.pop %v2163
      %v2430 = vmul.f32 %v2163, %v2429
      %v2431 = vsub.f32 1.0, %v2430
      %v2432 = vmul.f32 %v2429, %v2431
      %v2433 = vadd.f32 %v2429, %v2432
      %vm2434 = vweird.f32 %v2163
      %vm2435 = vweird.f32 %v2429
      %vm2436 = vmor %vm2434, %vm2435
      %v2437 = vsel %vm2436, %v2429, %v2433
      %v2438 = vand.u32 2147483647, %v2163
      %vm2439 = vcmp.eq.f32.partialorder %v2438, 8.507059e+37
      %v2440 = vand.u32 %v2163, 2147483648
      %v2441 = vor.u32 1.1754944e-38, %v2440
      %v2442 = vsel %vm2439, %v2441, %v2437
      %v2443 = vmul.f32 1.0, %v2442
      %v2444 = vrcp.pop %v2164
      %v2445 = vmul.f32 %v2164, %v2444
      %v2446 = vsub.f32 1.0, %v2445
      %v2447 = vmul.f32 %v2444, %v2446
      %v2448 = vadd.f32 %v2444, %v2447
      %vm2449 = vweird.f32 %v2164
      %vm2450 = vweird.f32 %v2444
      %vm2451 = vmor %vm2449, %vm2450
      %v2452 = vsel %vm2451, %v2444, %v2448
      %v2453 = vand.u32 2147483647, %v2164
      %vm2454 = vcmp.eq.f32.partialorder %v2453, 8.507059e+37
      %v2455 = vand.u32 %v2164, 2147483648
      %v2456 = vor.u32 1.1754944e-38, %v2455
      %v2457 = vsel %vm2454, %v2456, %v2452
      %v2458 = vmul.f32 1.0, %v2457
      %v2459 = vrcp.pop %v2165
      %v2460 = vmul.f32 %v2165, %v2459
      %v2461 = vsub.f32 1.0, %v2460
      %v2462 = vmul.f32 %v2459, %v2461
      %v2463 = vadd.f32 %v2459, %v2462
      %vm2464 = vweird.f32 %v2165
      %vm2465 = vweird.f32 %v2459
      %vm2466 = vmor %vm2464, %vm2465
      %v2467 = vsel %vm2466, %v2459, %v2463
      %v2468 = vand.u32 2147483647, %v2165
      %vm2469 = vcmp.eq.f32.partialorder %v2468, 8.507059e+37
      %v2470 = vand.u32 %v2165, 2147483648
      %v2471 = vor.u32 1.1754944e-38, %v2470
      %v2472 = vsel %vm2469, %v2471, %v2467
      %v2473 = vmul.f32 1.0, %v2472
      %v2474 = vrcp.pop %v2166
      %v2475 = vmul.f32 %v2166, %v2474
      %v2476 = vsub.f32 1.0, %v2475
      %v2477 = vmul.f32 %v2474, %v2476
      %v2478 = vadd.f32 %v2474, %v2477
      %vm2479 = vweird.f32 %v2166
      %vm2480 = vweird.f32 %v2474
      %vm2481 = vmor %vm2479, %vm2480
      %v2482 = vsel %vm2481, %v2474, %v2478
      %v2483 = vand.u32 2147483647, %v2166
      %vm2484 = vcmp.eq.f32.partialorder %v2483, 8.507059e+37
      %v2485 = vand.u32 %v2166, 2147483648
      %v2486 = vor.u32 1.1754944e-38, %v2485
      %v2487 = vsel %vm2484, %v2486, %v2482
      %v2488 = vmul.f32 1.0, %v2487
      %v2489 = vrcp.pop %v2167
      %v2490 = vmul.f32 %v2167, %v2489
      %v2491 = vsub.f32 1.0, %v2490
      %v2492 = vmul.f32 %v2489, %v2491
      %v2493 = vadd.f32 %v2489, %v2492
      %vm2494 = vweird.f32 %v2167
      %vm2495 = vweird.f32 %v2489
      %vm2496 = vmor %vm2494, %vm2495
      %v2497 = vsel %vm2496, %v2489, %v2493
      %v2498 = vand.u32 2147483647, %v2167
      %vm2499 = vcmp.eq.f32.partialorder %v2498, 8.507059e+37
      %v2500 = vand.u32 %v2167, 2147483648
      %v2501 = vor.u32 1.1754944e-38, %v2500
      %v2502 = vsel %vm2499, %v2501, %v2497
      %v2503 = vmul.f32 1.0, %v2502
      %v2504 = vrcp.pop %v2168
      %v2505 = vmul.f32 %v2168, %v2504
      %v2506 = vsub.f32 1.0, %v2505
      %v2507 = vmul.f32 %v2504, %v2506
      %v2508 = vadd.f32 %v2504, %v2507
      %vm2509 = vweird.f32 %v2168
      %vm2510 = vweird.f32 %v2504
      %vm2511 = vmor %vm2509, %vm2510
      %v2512 = vsel %vm2511, %v2504, %v2508
      %v2513 = vand.u32 2147483647, %v2168
      %vm2514 = vcmp.eq.f32.partialorder %v2513, 8.507059e+37
      %v2515 = vand.u32 %v2168, 2147483648
      %v2516 = vor.u32 1.1754944e-38, %v2515
      %v2517 = vsel %vm2514, %v2516, %v2512
      %v2518 = vmul.f32 1.0, %v2517
      %v2519 = vrcp.pop %v2169
      %v2520 = vmul.f32 %v2169, %v2519
      %v2521 = vsub.f32 1.0, %v2520
      %v2522 = vmul.f32 %v2519, %v2521
      %v2523 = vadd.f32 %v2519, %v2522
      %vm2524 = vweird.f32 %v2169
      %vm2525 = vweird.f32 %v2519
      %vm2526 = vmor %vm2524, %vm2525
      %v2527 = vsel %vm2526, %v2519, %v2523
      %v2528 = vand.u32 2147483647, %v2169
      %vm2529 = vcmp.eq.f32.partialorder %v2528, 8.507059e+37
      %v2530 = vand.u32 %v2169, 2147483648
      %v2531 = vor.u32 1.1754944e-38, %v2530
      %v2532 = vsel %vm2529, %v2531, %v2527
      %v2533 = vmul.f32 1.0, %v2532
      %v2534 = vrcp.pop %v2170
      %v2535 = vmul.f32 %v2170, %v2534
      %v2536 = vsub.f32 1.0, %v2535
      %v2537 = vmul.f32 %v2534, %v2536
      %v2538 = vadd.f32 %v2534, %v2537
      %vm2539 = vweird.f32 %v2170
      %vm2540 = vweird.f32 %v2534
      %vm2541 = vmor %vm2539, %vm2540
      %v2542 = vsel %vm2541, %v2534, %v2538
      %v2543 = vand.u32 2147483647, %v2170
      %vm2544 = vcmp.eq.f32.partialorder %v2543, 8.507059e+37
      %v2545 = vand.u32 %v2170, 2147483648
      %v2546 = vor.u32 1.1754944e-38, %v2545
      %v2547 = vsel %vm2544, %v2546, %v2542
      %v2548 = vmul.f32 1.0, %v2547
      %v2549 = vrcp.pop %v2171
      %v2550 = vmul.f32 %v2171, %v2549
      %v2551 = vsub.f32 1.0, %v2550
      %v2552 = vmul.f32 %v2549, %v2551
      %v2553 = vadd.f32 %v2549, %v2552
      %vm2554 = vweird.f32 %v2171
      %vm2555 = vweird.f32 %v2549
      %vm2556 = vmor %vm2554, %vm2555
      %v2557 = vsel %vm2556, %v2549, %v2553
      %v2558 = vand.u32 2147483647, %v2171
      %vm2559 = vcmp.eq.f32.partialorder %v2558, 8.507059e+37
      %v2560 = vand.u32 %v2171, 2147483648
      %v2561 = vor.u32 1.1754944e-38, %v2560
      %v2562 = vsel %vm2559, %v2561, %v2557
      %v2563 = vmul.f32 1.0, %v2562
      %v2564 = vrcp.pop %v2172
      %v2565 = vmul.f32 %v2172, %v2564
      %v2566 = vsub.f32 1.0, %v2565
      %v2567 = vmul.f32 %v2564, %v2566
      %v2568 = vadd.f32 %v2564, %v2567
      %vm2569 = vweird.f32 %v2172
      %vm2570 = vweird.f32 %v2564
      %vm2571 = vmor %vm2569, %vm2570
      %v2572 = vsel %vm2571, %v2564, %v2568
      %v2573 = vand.u32 2147483647, %v2172
      %vm2574 = vcmp.eq.f32.partialorder %v2573, 8.507059e+37
      %v2575 = vand.u32 %v2172, 2147483648
      %v2576 = vor.u32 1.1754944e-38, %v2575
      %v2577 = vsel %vm2574, %v2576, %v2572
      %v2578 = vmul.f32 1.0, %v2577
      %v2579 = vrcp.pop %v2173
      %v2580 = vmul.f32 %v2173, %v2579
      %v2581 = vsub.f32 1.0, %v2580
      %v2582 = vmul.f32 %v2579, %v2581
      %v2583 = vadd.f32 %v2579, %v2582
      %vm2584 = vweird.f32 %v2173
      %vm2585 = vweird.f32 %v2579
      %vm2586 = vmor %vm2584, %vm2585
      %v2587 = vsel %vm2586, %v2579, %v2583
      %v2588 = vand.u32 2147483647, %v2173
      %vm2589 = vcmp.eq.f32.partialorder %v2588, 8.507059e+37
      %v2590 = vand.u32 %v2173, 2147483648
      %v2591 = vor.u32 1.1754944e-38, %v2590
      %v2592 = vsel %vm2589, %v2591, %v2587
      %v2593 = vmul.f32 1.0, %v2592
      %v2594 = vrcp.pop %v2174
      %v2595 = vmul.f32 %v2174, %v2594
      %v2596 = vsub.f32 1.0, %v2595
      %v2597 = vmul.f32 %v2594, %v2596
      %v2598 = vadd.f32 %v2594, %v2597
      %vm2599 = vweird.f32 %v2174
      %vm2600 = vweird.f32 %v2594
      %vm2601 = vmor %vm2599, %vm2600
      %v2602 = vsel %vm2601, %v2594, %v2598
      %v2603 = vand.u32 2147483647, %v2174
      %vm2604 = vcmp.eq.f32.partialorder %v2603, 8.507059e+37
      %v2605 = vand.u32 %v2174, 2147483648
      %v2606 = vor.u32 1.1754944e-38, %v2605
      %v2607 = vsel %vm2604, %v2606, %v2602
      %v2608 = vmul.f32 1.0, %v2607
      %v2609 = vrcp.pop %v2175
      %v2610 = vmul.f32 %v2175, %v2609
      %v2611 = vsub.f32 1.0, %v2610
      %v2612 = vmul.f32 %v2609, %v2611
      %v2613 = vadd.f32 %v2609, %v2612
      %vm2614 = vweird.f32 %v2175
      %vm2615 = vweird.f32 %v2609
      %vm2616 = vmor %vm2614, %vm2615
      %v2617 = vsel %vm2616, %v2609, %v2613
      %v2618 = vand.u32 2147483647, %v2175
      %vm2619 = vcmp.eq.f32.partialorder %v2618, 8.507059e+37
      %v2620 = vand.u32 %v2175, 2147483648
      %v2621 = vor.u32 1.1754944e-38, %v2620
      %v2622 = vsel %vm2619, %v2621, %v2617
      %v2623 = vmul.f32 1.0, %v2622
      %v2624 = vrcp.pop %v2176
      %v2625 = vmul.f32 %v2176, %v2624
      %v2626 = vsub.f32 1.0, %v2625
      %v2627 = vmul.f32 %v2624, %v2626
      %v2628 = vadd.f32 %v2624, %v2627
      %vm2629 = vweird.f32 %v2176
      %vm2630 = vweird.f32 %v2624
      %vm2631 = vmor %vm2629, %vm2630
      %v2632 = vsel %vm2631, %v2624, %v2628
      %v2633 = vand.u32 2147483647, %v2176
      %vm2634 = vcmp.eq.f32.partialorder %v2633, 8.507059e+37
      %v2635 = vand.u32 %v2176, 2147483648
      %v2636 = vor.u32 1.1754944e-38, %v2635
      %v2637 = vsel %vm2634, %v2636, %v2632
      %v2638 = vmul.f32 1.0, %v2637
      %v2639 = vrcp.pop %v2177
      %v2640 = vmul.f32 %v2177, %v2639
      %v2641 = vsub.f32 1.0, %v2640
      %v2642 = vmul.f32 %v2639, %v2641
      %v2643 = vadd.f32 %v2639, %v2642
      %vm2644 = vweird.f32 %v2177
      %vm2645 = vweird.f32 %v2639
      %vm2646 = vmor %vm2644, %vm2645
      %v2647 = vsel %vm2646, %v2639, %v2643
      %v2648 = vand.u32 2147483647, %v2177
      %vm2649 = vcmp.eq.f32.partialorder %v2648, 8.507059e+37
      %v2650 = vand.u32 %v2177, 2147483648
      %v2651 = vor.u32 1.1754944e-38, %v2650
      %v2652 = vsel %vm2649, %v2651, %v2647
      %v2653 = vmul.f32 1.0, %v2652
      %v2654 = vrcp.pop %v2178
      %v2655 = vmul.f32 %v2178, %v2654
      %v2656 = vsub.f32 1.0, %v2655
      %v2657 = vmul.f32 %v2654, %v2656
      %v2658 = vadd.f32 %v2654, %v2657
      %vm2659 = vweird.f32 %v2178
      %vm2660 = vweird.f32 %v2654
      %vm2661 = vmor %vm2659, %vm2660
      %v2662 = vsel %vm2661, %v2654, %v2658
      %v2663 = vand.u32 2147483647, %v2178
      %vm2664 = vcmp.eq.f32.partialorder %v2663, 8.507059e+37
      %v2665 = vand.u32 %v2178, 2147483648
      %v2666 = vor.u32 1.1754944e-38, %v2665
      %v2667 = vsel %vm2664, %v2666, %v2662
      %v2668 = vmul.f32 1.0, %v2667
      %v2669 = vrcp.pop %v2179
      %v2670 = vmul.f32 %v2179, %v2669
      %v2671 = vsub.f32 1.0, %v2670
      %v2672 = vmul.f32 %v2669, %v2671
      %v2673 = vadd.f32 %v2669, %v2672
      %vm2674 = vweird.f32 %v2179
      %vm2675 = vweird.f32 %v2669
      %vm2676 = vmor %vm2674, %vm2675
      %v2677 = vsel %vm2676, %v2669, %v2673
      %v2678 = vand.u32 2147483647, %v2179
      %vm2679 = vcmp.eq.f32.partialorder %v2678, 8.507059e+37
      %v2680 = vand.u32 %v2179, 2147483648
      %v2681 = vor.u32 1.1754944e-38, %v2680
      %v2682 = vsel %vm2679, %v2681, %v2677
      %v2683 = vmul.f32 1.0, %v2682
      %v2684 = vrcp.pop %v2180
      %v2685 = vmul.f32 %v2180, %v2684
      %v2686 = vsub.f32 1.0, %v2685
      %v2687 = vmul.f32 %v2684, %v2686
      %v2688 = vadd.f32 %v2684, %v2687
      %vm2689 = vweird.f32 %v2180
      %vm2690 = vweird.f32 %v2684
      %vm2691 = vmor %vm2689, %vm2690
      %v2692 = vsel %vm2691, %v2684, %v2688
      %v2693 = vand.u32 2147483647, %v2180
      %vm2694 = vcmp.eq.f32.partialorder %v2693, 8.507059e+37
      %v2695 = vand.u32 %v2180, 2147483648
      %v2696 = vor.u32 1.1754944e-38, %v2695
      %v2697 = vsel %vm2694, %v2696, %v2692
      %v2698 = vmul.f32 1.0, %v2697
      %v2699 = vrcp.pop %v2181
      %v2700 = vmul.f32 %v2181, %v2699
      %v2701 = vsub.f32 1.0, %v2700
      %v2702 = vmul.f32 %v2699, %v2701
      %v2703 = vadd.f32 %v2699, %v2702
      %vm2704 = vweird.f32 %v2181
      %vm2705 = vweird.f32 %v2699
      %vm2706 = vmor %vm2704, %vm2705
      %v2707 = vsel %vm2706, %v2699, %v2703
      %v2708 = vand.u32 2147483647, %v2181
      %vm2709 = vcmp.eq.f32.partialorder %v2708, 8.507059e+37
      %v2710 = vand.u32 %v2181, 2147483648
      %v2711 = vor.u32 1.1754944e-38, %v2710
      %v2712 = vsel %vm2709, %v2711, %v2707
      %v2713 = vmul.f32 1.0, %v2712
      %v2714 = vrcp.pop %v2182
      %v2715 = vmul.f32 %v2182, %v2714
      %v2716 = vsub.f32 1.0, %v2715
      %v2717 = vmul.f32 %v2714, %v2716
      %v2718 = vadd.f32 %v2714, %v2717
      %vm2719 = vweird.f32 %v2182
      %vm2720 = vweird.f32 %v2714
      %vm2721 = vmor %vm2719, %vm2720
      %v2722 = vsel %vm2721, %v2714, %v2718
      %v2723 = vand.u32 2147483647, %v2182
      %vm2724 = vcmp.eq.f32.partialorder %v2723, 8.507059e+37
      %v2725 = vand.u32 %v2182, 2147483648
      %v2726 = vor.u32 1.1754944e-38, %v2725
      %v2727 = vsel %vm2724, %v2726, %v2722
      %v2728 = vmul.f32 1.0, %v2727
      %v2729 = vrcp.pop %v2183
      %v2730 = vmul.f32 %v2183, %v2729
      %v2731 = vsub.f32 1.0, %v2730
      %v2732 = vmul.f32 %v2729, %v2731
      %v2733 = vadd.f32 %v2729, %v2732
      %vm2734 = vweird.f32 %v2183
      %vm2735 = vweird.f32 %v2729
      %vm2736 = vmor %vm2734, %vm2735
      %v2737 = vsel %vm2736, %v2729, %v2733
      %v2738 = vand.u32 2147483647, %v2183
      %vm2739 = vcmp.eq.f32.partialorder %v2738, 8.507059e+37
      %v2740 = vand.u32 %v2183, 2147483648
      %v2741 = vor.u32 1.1754944e-38, %v2740
      %v2742 = vsel %vm2739, %v2741, %v2737
      %v2743 = vmul.f32 1.0, %v2742
      %v2744 = vrcp.pop %v2184
      %v2745 = vmul.f32 %v2184, %v2744
      %v2746 = vsub.f32 1.0, %v2745
      %v2747 = vmul.f32 %v2744, %v2746
      %v2748 = vadd.f32 %v2744, %v2747
      %vm2749 = vweird.f32 %v2184
      %vm2750 = vweird.f32 %v2744
      %vm2751 = vmor %vm2749, %vm2750
      %v2752 = vsel %vm2751, %v2744, %v2748
      %v2753 = vand.u32 2147483647, %v2184
      %vm2754 = vcmp.eq.f32.partialorder %v2753, 8.507059e+37
      %v2755 = vand.u32 %v2184, 2147483648
      %v2756 = vor.u32 1.1754944e-38, %v2755
      %v2757 = vsel %vm2754, %v2756, %v2752
      %v2758 = vmul.f32 1.0, %v2757
      %v2759 = vrcp.pop %v2185
      %v2760 = vmul.f32 %v2185, %v2759
      %v2761 = vsub.f32 1.0, %v2760
      %v2762 = vmul.f32 %v2759, %v2761
      %v2763 = vadd.f32 %v2759, %v2762
      %vm2764 = vweird.f32 %v2185
      %vm2765 = vweird.f32 %v2759
      %vm2766 = vmor %vm2764, %vm2765
      %v2767 = vsel %vm2766, %v2759, %v2763
      %v2768 = vand.u32 2147483647, %v2185
      %vm2769 = vcmp.eq.f32.partialorder %v2768, 8.507059e+37
      %v2770 = vand.u32 %v2185, 2147483648
      %v2771 = vor.u32 1.1754944e-38, %v2770
      %v2772 = vsel %vm2769, %v2771, %v2767
      %v2773 = vmul.f32 1.0, %v2772
      %v2774 = vrcp.pop %v2186
      %v2775 = vmul.f32 %v2186, %v2774
      %v2776 = vsub.f32 1.0, %v2775
      %v2777 = vmul.f32 %v2774, %v2776
      %v2778 = vadd.f32 %v2774, %v2777
      %vm2779 = vweird.f32 %v2186
      %vm2780 = vweird.f32 %v2774
      %vm2781 = vmor %vm2779, %vm2780
      %v2782 = vsel %vm2781, %v2774, %v2778
      %v2783 = vand.u32 2147483647, %v2186
      %vm2784 = vcmp.eq.f32.partialorder %v2783, 8.507059e+37
      %v2785 = vand.u32 %v2186, 2147483648
      %v2786 = vor.u32 1.1754944e-38, %v2785
      %v2787 = vsel %vm2784, %v2786, %v2782
      %v2788 = vmul.f32 1.0, %v2787
      %v2789 = vrcp.pop %v2187
      %v2790 = vmul.f32 %v2187, %v2789
      %v2791 = vsub.f32 1.0, %v2790
      %v2792 = vmul.f32 %v2789, %v2791
      %v2793 = vadd.f32 %v2789, %v2792
      %vm2794 = vweird.f32 %v2187
      %vm2795 = vweird.f32 %v2789
      %vm2796 = vmor %vm2794, %vm2795
      %v2797 = vsel %vm2796, %v2789, %v2793
      %v2798 = vand.u32 2147483647, %v2187
      %vm2799 = vcmp.eq.f32.partialorder %v2798, 8.507059e+37
      %v2800 = vand.u32 %v2187, 2147483648
      %v2801 = vor.u32 1.1754944e-38, %v2800
      %v2802 = vsel %vm2799, %v2801, %v2797
      %v2803 = vmul.f32 1.0, %v2802
      %v2804 = vrcp.pop %v2188
      %v2805 = vmul.f32 %v2188, %v2804
      %v2806 = vsub.f32 1.0, %v2805
      %v2807 = vmul.f32 %v2804, %v2806
      %v2808 = vadd.f32 %v2804, %v2807
      %vm2809 = vweird.f32 %v2188
      %vm2810 = vweird.f32 %v2804
      %vm2811 = vmor %vm2809, %vm2810
      %v2812 = vsel %vm2811, %v2804, %v2808
      %v2813 = vand.u32 2147483647, %v2188
      %vm2814 = vcmp.eq.f32.partialorder %v2813, 8.507059e+37
      %v2815 = vand.u32 %v2188, 2147483648
      %v2816 = vor.u32 1.1754944e-38, %v2815
      %v2817 = vsel %vm2814, %v2816, %v2812
      %v2818 = vmul.f32 1.0, %v2817
      %v2819 = vrcp.pop %v2189
      %v2820 = vmul.f32 %v2189, %v2819
      %v2821 = vsub.f32 1.0, %v2820
      %v2822 = vmul.f32 %v2819, %v2821
      %v2823 = vadd.f32 %v2819, %v2822
      %vm2824 = vweird.f32 %v2189
      %vm2825 = vweird.f32 %v2819
      %vm2826 = vmor %vm2824, %vm2825
      %v2827 = vsel %vm2826, %v2819, %v2823
      %v2828 = vand.u32 2147483647, %v2189
      %vm2829 = vcmp.eq.f32.partialorder %v2828, 8.507059e+37
      %v2830 = vand.u32 %v2189, 2147483648
      %v2831 = vor.u32 1.1754944e-38, %v2830
      %v2832 = vsel %vm2829, %v2831, %v2827
      %v2833 = vmul.f32 1.0, %v2832
      %v2834 = vrcp.pop %v2190
      %v2835 = vmul.f32 %v2190, %v2834
      %v2836 = vsub.f32 1.0, %v2835
      %v2837 = vmul.f32 %v2834, %v2836
      %v2838 = vadd.f32 %v2834, %v2837
      %vm2839 = vweird.f32 %v2190
      %vm2840 = vweird.f32 %v2834
      %vm2841 = vmor %vm2839, %vm2840
      %v2842 = vsel %vm2841, %v2834, %v2838
      %v2843 = vand.u32 2147483647, %v2190
      %vm2844 = vcmp.eq.f32.partialorder %v2843, 8.507059e+37
      %v2845 = vand.u32 %v2190, 2147483648
      %v2846 = vor.u32 1.1754944e-38, %v2845
      %v2847 = vsel %vm2844, %v2846, %v2842
      %v2848 = vmul.f32 1.0, %v2847
      %v2849 = vrcp.pop %v2191
      %v2850 = vmul.f32 %v2191, %v2849
      %v2851 = vsub.f32 1.0, %v2850
      %v2852 = vmul.f32 %v2849, %v2851
      %v2853 = vadd.f32 %v2849, %v2852
      %vm2854 = vweird.f32 %v2191
      %vm2855 = vweird.f32 %v2849
      %vm2856 = vmor %vm2854, %vm2855
      %v2857 = vsel %vm2856, %v2849, %v2853
      %v2858 = vand.u32 2147483647, %v2191
      %vm2859 = vcmp.eq.f32.partialorder %v2858, 8.507059e+37
      %v2860 = vand.u32 %v2191, 2147483648
      %v2861 = vor.u32 1.1754944e-38, %v2860
      %v2862 = vsel %vm2859, %v2861, %v2857
      %v2863 = vmul.f32 1.0, %v2862
      %v2864 = vrcp.pop %v2192
      %v2865 = vmul.f32 %v2192, %v2864
      %v2866 = vsub.f32 1.0, %v2865
      %v2867 = vmul.f32 %v2864, %v2866
      %v2868 = vadd.f32 %v2864, %v2867
      %vm2869 = vweird.f32 %v2192
      %vm2870 = vweird.f32 %v2864
      %vm2871 = vmor %vm2869, %vm2870
      %v2872 = vsel %vm2871, %v2864, %v2868
      %v2873 = vand.u32 2147483647, %v2192
      %vm2874 = vcmp.eq.f32.partialorder %v2873, 8.507059e+37
      %v2875 = vand.u32 %v2192, 2147483648
      %v2876 = vor.u32 1.1754944e-38, %v2875
      %v2877 = vsel %vm2874, %v2876, %v2872
      %v2878 = vmul.f32 1.0, %v2877
      %v2879 = vrcp.pop %v2193
      %v2880 = vmul.f32 %v2193, %v2879
      %v2881 = vsub.f32 1.0, %v2880
      %v2882 = vmul.f32 %v2879, %v2881
      %v2883 = vadd.f32 %v2879, %v2882
      %vm2884 = vweird.f32 %v2193
      %vm2885 = vweird.f32 %v2879
      %vm2886 = vmor %vm2884, %vm2885
      %v2887 = vsel %vm2886, %v2879, %v2883
      %v2888 = vand.u32 2147483647, %v2193
      %vm2889 = vcmp.eq.f32.partialorder %v2888, 8.507059e+37
      %v2890 = vand.u32 %v2193, 2147483648
      %v2891 = vor.u32 1.1754944e-38, %v2890
      %v2892 = vsel %vm2889, %v2891, %v2887
      %v2893 = vmul.f32 1.0, %v2892
      %v2894 = vrcp.pop %v2194
      %v2895 = vmul.f32 %v2194, %v2894
      %v2896 = vsub.f32 1.0, %v2895
      %v2897 = vmul.f32 %v2894, %v2896
      %v2898 = vadd.f32 %v2894, %v2897
      %vm2899 = vweird.f32 %v2194
      %vm2900 = vweird.f32 %v2894
      %vm2901 = vmor %vm2899, %vm2900
      %v2902 = vsel %vm2901, %v2894, %v2898
      %v2903 = vand.u32 2147483647, %v2194
      %vm2904 = vcmp.eq.f32.partialorder %v2903, 8.507059e+37
      %v2905 = vand.u32 %v2194, 2147483648
      %v2906 = vor.u32 1.1754944e-38, %v2905
      %v2907 = vsel %vm2904, %v2906, %v2902
      %v2908 = vmul.f32 1.0, %v2907
      %v2909 = vrcp.pop %v2195
      %v2910 = vmul.f32 %v2195, %v2909
      %v2911 = vsub.f32 1.0, %v2910
      %v2912 = vmul.f32 %v2909, %v2911
      %v2913 = vadd.f32 %v2909, %v2912
      %vm2914 = vweird.f32 %v2195
      %vm2915 = vweird.f32 %v2909
      %vm2916 = vmor %vm2914, %vm2915
      %v2917 = vsel %vm2916, %v2909, %v2913
      %v2918 = vand.u32 2147483647, %v2195
      %vm2919 = vcmp.eq.f32.partialorder %v2918, 8.507059e+37
      %v2920 = vand.u32 %v2195, 2147483648
      %v2921 = vor.u32 1.1754944e-38, %v2920
      %v2922 = vsel %vm2919, %v2921, %v2917
      %v2923 = vmul.f32 1.0, %v2922
      %v2924 = vrcp.pop %v2196
      %v2925 = vmul.f32 %v2196, %v2924
      %v2926 = vsub.f32 1.0, %v2925
      %v2927 = vmul.f32 %v2924, %v2926
      %v2928 = vadd.f32 %v2924, %v2927
      %vm2929 = vweird.f32 %v2196
      %vm2930 = vweird.f32 %v2924
      %vm2931 = vmor %vm2929, %vm2930
      %v2932 = vsel %vm2931, %v2924, %v2928
      %v2933 = vand.u32 2147483647, %v2196
      %vm2934 = vcmp.eq.f32.partialorder %v2933, 8.507059e+37
      %v2935 = vand.u32 %v2196, 2147483648
      %v2936 = vor.u32 1.1754944e-38, %v2935
      %v2937 = vsel %vm2934, %v2936, %v2932
      %v2938 = vmul.f32 1.0, %v2937
      %v2939 = vrcp.pop %v2197
      %v2940 = vmul.f32 %v2197, %v2939
      %v2941 = vsub.f32 1.0, %v2940
      %v2942 = vmul.f32 %v2939, %v2941
      %v2943 = vadd.f32 %v2939, %v2942
      %vm2944 = vweird.f32 %v2197
      %vm2945 = vweird.f32 %v2939
      %vm2946 = vmor %vm2944, %vm2945
      %v2947 = vsel %vm2946, %v2939, %v2943
      %v2948 = vand.u32 2147483647, %v2197
      %vm2949 = vcmp.eq.f32.partialorder %v2948, 8.507059e+37
      %v2950 = vand.u32 %v2197, 2147483648
      %v2951 = vor.u32 1.1754944e-38, %v2950
      %v2952 = vsel %vm2949, %v2951, %v2947
      %v2953 = vmul.f32 1.0, %v2952
      %v2954 = vrcp.pop %v2198
      %v2955 = vmul.f32 %v2198, %v2954
      %v2956 = vsub.f32 1.0, %v2955
      %v2957 = vmul.f32 %v2954, %v2956
      %v2958 = vadd.f32 %v2954, %v2957
      %vm2959 = vweird.f32 %v2198
      %vm2960 = vweird.f32 %v2954
      %vm2961 = vmor %vm2959, %vm2960
      %v2962 = vsel %vm2961, %v2954, %v2958
      %v2963 = vand.u32 2147483647, %v2198
      %vm2964 = vcmp.eq.f32.partialorder %v2963, 8.507059e+37
      %v2965 = vand.u32 %v2198, 2147483648
      %v2966 = vor.u32 1.1754944e-38, %v2965
      %v2967 = vsel %vm2964, %v2966, %v2962
      %v2968 = vmul.f32 1.0, %v2967
      %v2969 = vrcp.pop %v2199
      %v2970 = vmul.f32 %v2199, %v2969
      %v2971 = vsub.f32 1.0, %v2970
      %v2972 = vmul.f32 %v2969, %v2971
      %v2973 = vadd.f32 %v2969, %v2972
      %vm2974 = vweird.f32 %v2199
      %vm2975 = vweird.f32 %v2969
      %vm2976 = vmor %vm2974, %vm2975
      %v2977 = vsel %vm2976, %v2969, %v2973
      %v2978 = vand.u32 2147483647, %v2199
      %vm2979 = vcmp.eq.f32.partialorder %v2978, 8.507059e+37
      %v2980 = vand.u32 %v2199, 2147483648
      %v2981 = vor.u32 1.1754944e-38, %v2980
      %v2982 = vsel %vm2979, %v2981, %v2977
      %v2983 = vmul.f32 1.0, %v2982
      %v2984 = vrcp.pop %v2200
      %v2985 = vmul.f32 %v2200, %v2984
      %v2986 = vsub.f32 1.0, %v2985
      %v2987 = vmul.f32 %v2984, %v2986
      %v2988 = vadd.f32 %v2984, %v2987
      %vm2989 = vweird.f32 %v2200
      %vm2990 = vweird.f32 %v2984
      %vm2991 = vmor %vm2989, %vm2990
      %v2992 = vsel %vm2991, %v2984, %v2988
      %v2993 = vand.u32 2147483647, %v2200
      %vm2994 = vcmp.eq.f32.partialorder %v2993, 8.507059e+37
      %v2995 = vand.u32 %v2200, 2147483648
      %v2996 = vor.u32 1.1754944e-38, %v2995
      %v2997 = vsel %vm2994, %v2996, %v2992
      %v2998 = vmul.f32 1.0, %v2997
      %v2999 = vrcp.pop %v2201
      %v3000 = vmul.f32 %v2201, %v2999
      %v3001 = vsub.f32 1.0, %v3000
      %v3002 = vmul.f32 %v2999, %v3001
      %v3003 = vadd.f32 %v2999, %v3002
      %vm3004 = vweird.f32 %v2201
      %vm3005 = vweird.f32 %v2999
      %vm3006 = vmor %vm3004, %vm3005
      %v3007 = vsel %vm3006, %v2999, %v3003
      %v3008 = vand.u32 2147483647, %v2201
      %vm3009 = vcmp.eq.f32.partialorder %v3008, 8.507059e+37
      %v3010 = vand.u32 %v2201, 2147483648
      %v3011 = vor.u32 1.1754944e-38, %v3010
      %v3012 = vsel %vm3009, %v3011, %v3007
      %v3013 = vmul.f32 1.0, %v3012
      %v3014 = vrcp.pop %v2202
      %v3015 = vmul.f32 %v2202, %v3014
      %v3016 = vsub.f32 1.0, %v3015
      %v3017 = vmul.f32 %v3014, %v3016
      %v3018 = vadd.f32 %v3014, %v3017
      %vm3019 = vweird.f32 %v2202
      %vm3020 = vweird.f32 %v3014
      %vm3021 = vmor %vm3019, %vm3020
      %v3022 = vsel %vm3021, %v3014, %v3018
      %v3023 = vand.u32 2147483647, %v2202
      %vm3024 = vcmp.eq.f32.partialorder %v3023, 8.507059e+37
      %v3025 = vand.u32 %v2202, 2147483648
      %v3026 = vor.u32 1.1754944e-38, %v3025
      %v3027 = vsel %vm3024, %v3026, %v3022
      %v3028 = vmul.f32 1.0, %v3027
      %v3029 = vrcp.pop %v2203
      %v3030 = vmul.f32 %v2203, %v3029
      %v3031 = vsub.f32 1.0, %v3030
      %v3032 = vmul.f32 %v3029, %v3031
      %v3033 = vadd.f32 %v3029, %v3032
      %vm3034 = vweird.f32 %v2203
      %vm3035 = vweird.f32 %v3029
      %vm3036 = vmor %vm3034, %vm3035
      %v3037 = vsel %vm3036, %v3029, %v3033
      %v3038 = vand.u32 2147483647, %v2203
      %vm3039 = vcmp.eq.f32.partialorder %v3038, 8.507059e+37
      %v3040 = vand.u32 %v2203, 2147483648
      %v3041 = vor.u32 1.1754944e-38, %v3040
      %v3042 = vsel %vm3039, %v3041, %v3037
      %v3043 = vmul.f32 1.0, %v3042
      %3044 = vst [vmem:[%s596] sm:$0xff] %v2218
      %3045 = vst [vmem:[%s596 + $0x8] sm:$0xff] %v2233
      %3046 = vst [vmem:[%s596 + $0x10] sm:$0xff] %v2248
      %3047 = vst [vmem:[%s596 + $0x18] sm:$0xff] %v2263
      %3048 = vst [vmem:[%s596 + $0x20] sm:$0xff] %v2278
      %3049 = vst [vmem:[%s596 + $0x28] sm:$0xff] %v2293
      %3050 = vst.msk [vmem:[%s596 + $0x30] sm:$0xff] %vm756, %v2308
      %3051 = vst [vmem:[%s596 + $0x38] sm:$0xff] %v2323
      %3052 = vst [vmem:[%s596 + $0x40] sm:$0xff] %v2338
      %3053 = vst [vmem:[%s596 + $0x48] sm:$0xff] %v2353
      %3054 = vst [vmem:[%s596 + $0x50] sm:$0xff] %v2368
      %3055 = vst [vmem:[%s596 + $0x58] sm:$0xff] %v2383
      %3056 = vst [vmem:[%s596 + $0x60] sm:$0xff] %v2398
      %3057 = vst.msk [vmem:[%s596 + $0x68] sm:$0xff] %vm756, %v2413
      %3058 = vst [vmem:[%s596 + $0x70] sm:$0xff] %v2428
      %3059 = vst [vmem:[%s596 + $0x78] sm:$0xff] %v2443
      %3060 = vst [vmem:[%s596 + $0x80] sm:$0xff] %v2458
      %3061 = vst [vmem:[%s596 + $0x88] sm:$0xff] %v2473
      %3062 = vst [vmem:[%s596 + $0x90] sm:$0xff] %v2488
      %3063 = vst [vmem:[%s596 + $0x98] sm:$0xff] %v2503
      %3064 = vst.msk [vmem:[%s596 + $0xa0] sm:$0xff] %vm756, %v2518
      %3065 = vst [vmem:[%s596 + $0xa8] sm:$0xff] %v2533
      %3066 = vst [vmem:[%s596 + $0xb0] sm:$0xff] %v2548
      %3067 = vst [vmem:[%s596 + $0xb8] sm:$0xff] %v2563
      %3068 = vst [vmem:[%s596 + $0xc0] sm:$0xff] %v2578
      %3069 = vst [vmem:[%s596 + $0xc8] sm:$0xff] %v2593
      %3070 = vst [vmem:[%s596 + $0xd0] sm:$0xff] %v2608
      %3071 = vst.msk [vmem:[%s596 + $0xd8] sm:$0xff] %vm756, %v2623
      %3072 = vst [vmem:[%s596 + $0xe0] sm:$0xff] %v2638
      %3073 = vst [vmem:[%s596 + $0xe8] sm:$0xff] %v2653
      %3074 = vst [vmem:[%s596 + $0xf0] sm:$0xff] %v2668
      %3075 = vst [vmem:[%s596 + $0xf8] sm:$0xff] %v2683
      %3076 = vst [vmem:[%s596 + $0x100] sm:$0xff] %v2698
      %3077 = vst [vmem:[%s596 + $0x108] sm:$0xff] %v2713
      %3078 = vst.msk [vmem:[%s596 + $0x110] sm:$0xff] %vm756, %v2728
      %3079 = vst [vmem:[%s596 + $0x118] sm:$0xff] %v2743
      %3080 = vst [vmem:[%s596 + $0x120] sm:$0xff] %v2758
      %3081 = vst [vmem:[%s596 + $0x128] sm:$0xff] %v2773
      %3082 = vst [vmem:[%s596 + $0x130] sm:$0xff] %v2788
      %3083 = vst [vmem:[%s596 + $0x138] sm:$0xff] %v2803
      %3084 = vst [vmem:[%s596 + $0x140] sm:$0xff] %v2818
      %3085 = vst.msk [vmem:[%s596 + $0x148] sm:$0xff] %vm756, %v2833
      %3086 = vst [vmem:[%s596 + $0x150] sm:$0xff] %v2848
      %3087 = vst [vmem:[%s596 + $0x158] sm:$0xff] %v2863
      %3088 = vst [vmem:[%s596 + $0x160] sm:$0xff] %v2878
      %3089 = vst [vmem:[%s596 + $0x168] sm:$0xff] %v2893
      %3090 = vst [vmem:[%s596 + $0x170] sm:$0xff] %v2908
      %3091 = vst [vmem:[%s596 + $0x178] sm:$0xff] %v2923
      %3092 = vst.msk [vmem:[%s596 + $0x180] sm:$0xff] %vm756, %v2938
      %3093 = vst [vmem:[%s596 + $0x188] sm:$0xff] %v2953
      %3094 = vst [vmem:[%s596 + $0x190] sm:$0xff] %v2968
      %3095 = vst [vmem:[%s596 + $0x198] sm:$0xff] %v2983
      %3096 = vst [vmem:[%s596 + $0x1a0] sm:$0xff] %v2998
      %3097 = vst [vmem:[%s596 + $0x1a8] sm:$0xff] %v3013
      %3098 = vst [vmem:[%s596 + $0x1b0] sm:$0xff] %v3028
      %3099 = vst.msk [vmem:[%s596 + $0x1b8] sm:$0xff] %vm756, %v3043
      %s3100 = smul.u32 8, %s30
      %p3101 = scmp.lt.s32.totalorder %s3100, 63
      %s3102 = scalar_select %p3101, %s3100, 63
      %s3103 = smul.addr %s3102, 8
      %s3104 = scalar_lea.vmem %s17, %s3103
      %s3105 = smul.u32 8, %s30
      %p3106 = scmp.lt.s32.totalorder %s3105, 63
      %s3107 = scalar_select %p3106, %s3105, 63
      %s3108 = smul.addr %s3107, 7
      %s3109 = smul.addr %s3108, 8
      %s3110 = scalar_lea.vmem %s18, %s3109
      // Predicated region
      $region89: #{autoencoder_forward.1} parent=87 // pred_check
        %p3111 = pneg %p410
      $region90: #{autoencoder_forward.1} parent=87 // pred_check_branch
        %3113 = sbr.rel (%p3111) target = $region92
      $region91: #{autoencoder_forward.1} parent=87 // pred_region
        %s3114 = smul.u32 8, %s30
      $region92: #{autoencoder_forward.1} parent=87 // pred_fallthru
        _
      // Predicated region
      $region93: #{autoencoder_forward.1} parent=87 // pred_check
        %p3115 = pneg %p436
      $region94: #{autoencoder_forward.1} parent=87 // pred_check_branch
        %3117 = sbr.rel (%p3115) target = $region96
      $region95: #{autoencoder_forward.1} parent=87 // pred_region
        %s3118 = smul.u32 8, %s30
      $region96: #{autoencoder_forward.1} parent=87 // pred_fallthru
        _
    $region88: #{autoencoder_forward.1} parent=5 // pred_fallthru
      _
    %p3119 = scmp.le.s32.totalorder 2, %s25
    // Predicated region
    $region97: #{autoencoder_forward.1} parent=5 // pred_check
      %p3120 = pneg %p3119
    $region98: #{autoencoder_forward.1} parent=5 // pred_check_branch
      %3122 = sbr.rel (%p3120) target = $region100
    $region99: #{autoencoder_forward.1} parent=5 // pred_region
      %s3123 = ssub.s32 %s25, 2
      // Predicated region
      $region101: #{autoencoder_forward.1} parent=99 // pred_check
        %p3124 = pneg %p416
      $region102: #{autoencoder_forward.1} parent=99 // pred_check_branch
        %3126 = sbr.rel (%p3124) target = $region104
      $region103: #{autoencoder_forward.1} parent=99 // pred_region
        %s3127 = smul.u32 8, %s31
        %p3128 = scmp.lt.s32.totalorder %s3127, 63
        %s3129 = scalar_select %p3128, %s3127, 63
        %s3130 = smul.addr %s3129, 8
        %s3131 = scalar_lea.vmem %s17, %s3130
      $region104: #{autoencoder_forward.1} parent=99 // pred_fallthru
        _
      // Predicated region
      $region105: #{autoencoder_forward.1} parent=99 // pred_check
        %p3132 = pneg %p442
      $region106: #{autoencoder_forward.1} parent=99 // pred_check_branch
        %3134 = sbr.rel (%p3132) target = $region108
      $region107: #{autoencoder_forward.1} parent=99 // pred_region
        %s3135 = smul.u32 8, %s31
        %p3136 = scmp.lt.s32.totalorder %s3135, 63
        %s3137 = scalar_select %p3136, %s3135, 63
        %s3138 = smul.addr %s3137, 7
        %s3139 = smul.addr %s3138, 8
        %s3140 = scalar_lea.vmem %s18, %s3139
      $region108: #{autoencoder_forward.1} parent=99 // pred_fallthru
        _
    $region100: #{autoencoder_forward.1} parent=5 // pred_fallthru
      _
  $region6: #{autoencoder_forward.1} parent=0 // loop_footer
    %s29 = sadd.s32 1, %s25
  $region7: #{autoencoder_forward.1} parent=0 // loop_footer_branch
    %24 = sbr.rel target = $region3
  $region8: #{autoencoder_forward.1} parent=0 // loop_exit
    _

</llo_original>
